<compile_context>
chip_gen: v7x
topology: tpu7x:2x2x1
jax: 0.10.0
libtpu: 0.0.40
codegen_flags: <defaults>
</compile_context>

<pallas_src>
import functools

import jax
import jax.numpy as jnp
from jax.experimental import pallas as pl
from jax.experimental.pallas import tpu as pltpu

EPS = 1e-5
VMEM_LIMIT_BYTES = 48 * 1024 * 1024


def _round_up(a, m):
    return pl.cdiv(a, m) * m


def _pad2(a, rows, cols):
    return jnp.pad(a, ((0, rows - a.shape[0]), (0, cols - a.shape[1])))


# --------------------------------------------------------------------------
# Pass 1: BatchNorm statistics. Each grid step reduces a large (rb, Dp) row
# block to an (8, Dp) partial (sum / sum-of-squares) tile; partials are summed
# in XLA.  Padded (zero) rows/features contribute nothing; the divisor uses
# the real N*T.  Fully "parallel" grid -> both v7x TensorCores can stream x.
# --------------------------------------------------------------------------
def _bn_stats_kernel(x_ref, sum_ref, sq_ref):
    rb, d = x_ref.shape
    xs = x_ref[...].astype(jnp.float32)
    xg = xs.reshape(rb // 8, 8, d)          # regroup sublanes; no data movement
    sum_ref[...] = jnp.sum(xg, axis=0)      # (8, Dp) partial sums (VALU adds)
    sq_ref[...] = jnp.sum(xg * xg, axis=0)


# --------------------------------------------------------------------------
# Pass 2: fused (BN-folded) input projection + GRU recurrence.
# --------------------------------------------------------------------------
def _bn_gru_kernel(x_ref, wih_ref, whh_ref, bx_ref, bhn_ref, out_ref, h_ref, *,
                   residual):
    # x_ref:   (block_n, block_t, Dp)  batch-first input block
    # wih_ref: (Dp, 3Hp)               BN-folded input weights, gates [r|z|n]
    # whh_ref: (Hp, 3Hp)               recurrent weights, gates [r|z|n]
    # bx_ref:  (1, 3Hp)  f32           folded input-side biases
    # bhn_ref: (1, Hp)   f32           b_hn (stays inside r * (.))
    # out_ref: (block_n, block_t, Hp)
    # h_ref:   (block_n, Hp) f32       hidden state carried across T blocks
    nb, tt, d = x_ref.shape
    hp = bhn_ref.shape[-1]
    cdt = wih_ref.dtype  # MXU operand dtype (f32 or bf16)

    # Reset hidden state at the start of each sequence (first T block).
    @pl.when(pl.program_id(1) == 0)
    def _():
        h_ref[...] = jnp.zeros_like(h_ref)

    x_raw = x_ref[...]
    x2d = x_raw.astype(cdt).reshape(nb * tt, d)

    # Whole-chunk input projection: ONE concatenated-gate MXU matmul.
    gx = jnp.dot(x2d, wih_ref[...], preferred_element_type=jnp.float32)
    gx = (gx + bx_ref[...]).reshape(nb, tt, 3 * hp)
    # TODO(synk): staging gx time-major ((tt, nb, 3Hp) scratch) would make the
    # per-step read below fully dense; kept as a value slice for portability.

    whh = whh_ref[...]
    b_hn = jnp.broadcast_to(bhn_ref[...].astype(jnp.float32), (nb, hp))  # hoisted

    # Sequential recurrence over the T-chunk; h and per-step outputs carried in
    # registers, single dense store at the end of the chunk.
    # TODO(synk): for H <= 256 the recurrent Whh could be held in MXU staging
    # registers via pltpu.matmul_push_rhs/acc_lhs/pop instead of jnp.dot/step.
    h = h_ref[...]
    outs = []
    for t in range(tt):  # static unroll (block_t is small & compile-time)
        gx_t = gx[:, t, :]
        gh = jnp.dot(h.astype(cdt), whh, preferred_element_type=jnp.float32)
        r = jax.nn.sigmoid(gx_t[:, :hp] + gh[:, :hp])
        z = jax.nn.sigmoid(gx_t[:, hp:2 * hp] + gh[:, hp:2 * hp])
        n = jnp.tanh(gx_t[:, 2 * hp:] + r * (gh[:, 2 * hp:] + b_hn))
        h = (1.0 - z) * n + z * h
        outs.append(h)
    h_ref[...] = h  # carry to the next T block

    out = jnp.stack(outs, axis=1)            # (block_n, block_t, Hp)
    if residual:                             # fused residual add (Dp == Hp)
        out = out + x_raw.astype(jnp.float32)
    out_ref[...] = out.astype(out_ref.dtype)  # one dense, lane-aligned store


# --------------------------------------------------------------------------
# Wrapper
# --------------------------------------------------------------------------
@functools.partial(
    jax.jit,
    static_argnames=("residual", "compute_dtype", "block_n", "block_t"))
def batch_norm_rnn(x, gamma, beta, wih_t, whh_t, bih, bhh, *,
                   residual=False, compute_dtype=jnp.bfloat16,
                   block_n=128, block_t=8):
    """x: (N, T, D) batch-first, like the PyTorch module. Returns (N, T, H)."""
    N, T, D = x.shape
    H = whh_t.shape[0]
    if residual and D != H:
        raise ValueError("residual path requires input_size == output_size")
    assert block_n % 8 == 0 and block_t % 8 == 0

    # Lane-dense feature dims (no-op for production shapes that are already
    # multiples of 128; padded weights/biases are zero so padded h stays 0).
    D_p = _round_up(D, 128)
    H_p = _round_up(H, 128)

    # Batch/time tiles.  block_n defaults to 128 for full MXU rows but is
    # capped at the padded batch so tiny batches don't over-pad.
    # (On v7x prefer block_n <= N_pad/2 so both TensorCores get n blocks.)
    bn = min(block_n, _round_up(N, 8))
    bt = min(block_t, _round_up(T, 8))
    n_pad = _round_up(N, bn)
    t_pad = _round_up(T, bt)
    n_blocks = n_pad // bn
    t_blocks = t_pad // bt

    x_p = x
    if (n_pad, t_pad, D_p) != (N, T, D):
        x_p = jnp.pad(x, ((0, n_pad - N), (0, t_pad - T), (0, D_p - D)))

    # ---- pass 1: BN statistics (large row tiles, parallel partial outputs) --
    rows = n_pad * t_pad
    rb = bn * bt                      # ~1k rows per block at default tiles
    nrb = rows // rb
    xf = x_p.reshape(rows, D_p)
    psum, psq = pl.pallas_call(
        _bn_stats_kernel,
        out_shape=(jax.ShapeDtypeStruct((8 * nrb, D_p), jnp.float32),
                   jax.ShapeDtypeStruct((8 * nrb, D_p), jnp.float32)),
        grid=(nrb,),
        in_specs=[pl.BlockSpec((rb, D_p), lambda i: (i, 0))],
        out_specs=(pl.BlockSpec((8, D_p), lambda i: (i, 0)),
                   pl.BlockSpec((8, D_p), lambda i: (i, 0))),
        compiler_params=pltpu.CompilerParams(
            dimension_semantics=("parallel",),
            vmem_limit_bytes=VMEM_LIMIT_BYTES),
    )(xf)
    sum_x = jnp.sum(psum, axis=0)[:D]
    sumsq_x = jnp.sum(psq, axis=0)[:D]

    # ---- fold BN into the input projection (tiny (D,3H)-sized prep) ---------
    inv_count = 1.0 / float(N * T)                 # real rows only
    mean = sum_x * inv_count
    # TODO(synk): E[x^2]-E[x]^2 can cancel for large-mean features at very
    # large N*T; a shifted/Welford accumulation would be more robust.
    var = jnp.maximum(sumsq_x * inv_count - mean * mean, 0.0)
    s = gamma.reshape(D) * jax.lax.rsqrt(var + EPS)
    shift = beta.reshape(D) - mean * s

    wih_g = wih_t.reshape(D, 3, H)                 # (D, 3, H)
    whh_g = whh_t.reshape(H, 3, H)                 # (H, 3, H)
    bih_g = bih.reshape(3, H)
    bhh_g = bhh.reshape(3, H)

    wih_eff = wih_g * s[:, None, None]             # BN scale fold
    bx = jnp.einsum("d,dgh->gh", shift, wih_g,
                    precision=jax.lax.Precision.HIGHEST) + bih_g   # BN shift fold
    bx = bx.at[0].add(bhh_g[0]).at[1].add(bhh_g[1])                # fold b_hr, b_hz

    # Gate-concatenated, lane-padded layouts.
    wih_cat = jnp.concatenate(
        [_pad2(wih_eff[:, g, :], D_p, H_p) for g in range(3)],
        axis=1).astype(compute_dtype)              # (Dp, 3Hp)
    whh_cat = jnp.concatenate(
        [_pad2(whh_g[:, g, :], H_p, H_p) for g in range(3)],
        axis=1).astype(compute_dtype)              # (Hp, 3Hp)
    bx_cat = jnp.concatenate(
        [jnp.pad(bx[g], (0, H_p - H)) for g in range(3)]
    ).reshape(1, 3 * H_p).astype(jnp.float32)
    bhn_p = jnp.pad(bhh_g[2], (0, H_p - H)).reshape(1, H_p).astype(jnp.float32)

    # ---- pass 2: fused projection + GRU recurrence --------------------------
    kernel = functools.partial(_bn_gru_kernel, residual=residual)
    out_p = pl.pallas_call(
        kernel,
        out_shape=jax.ShapeDtypeStruct((n_pad, t_pad, H_p), x.dtype),
        grid=(n_blocks, t_blocks),
        in_specs=[
            pl.BlockSpec((bn, bt, D_p), lambda n, t: (n, t, 0)),
            # Constant-index weight blocks.  (pipeline_mode=pl.Buffered(1) can
            # single-buffer these on JAX versions that honor it; left at the
            # default here for portability.)
            pl.BlockSpec((D_p, 3 * H_p), lambda n, t: (0, 0)),
            pl.BlockSpec((H_p, 3 * H_p), lambda n, t: (0, 0)),
            pl.BlockSpec((1, 3 * H_p), lambda n, t: (0, 0)),
            pl.BlockSpec((1, H_p), lambda n, t: (0, 0)),
        ],
        out_specs=pl.BlockSpec((bn, bt, H_p), lambda n, t: (n, t, 0)),
        scratch_shapes=[pltpu.VMEM((bn, H_p), jnp.float32)],
        compiler_params=pltpu.CompilerParams(
            dimension_semantics=("parallel", "arbitrary"),
            vmem_limit_bytes=VMEM_LIMIT_BYTES),
    )(x_p, wih_cat, whh_cat, bx_cat, bhn_p)

    return out_p[:N, :T, :H]


# --------------------------------------------------------------------------
# Pure-JAX reference mirroring the PyTorch forward (f32 throughout).
# --------------------------------------------------------------------------
def _reference(x, gamma, beta, wih_t, whh_t, bih, bhh, residual=False):
    N, T, D = x.shape
    H = whh_t.shape[0]
    xf = x.reshape(N * T, D)
    mean = xf.mean(axis=0)
    var = xf.var(axis=0)  # biased, as used by BN for normalization
    xn = (xf - mean) / jnp.sqrt(var + EPS) * gamma.reshape(D) + beta.reshape(D)
    xn = xn.reshape(N, T, D)

    h = jnp.zeros((N, H), jnp.float32)
    outs = []
    for t in range(T):
        gx = xn[:, t, :] @ wih_t + bih
        gh = h @ whh_t + bhh
        r = jax.nn.sigmoid(gx[:, :H] + gh[:, :H])
        z = jax.nn.sigmoid(gx[:, H:2 * H] + gh[:, H:2 * H])
        n = jnp.tanh(gx[:, 2 * H:] + r * gh[:, 2 * H:])
        h = (1.0 - z) * n + z * h
        outs.append(h)
    out = jnp.stack(outs, axis=1)
    if residual:
        out = out + x
    return out


if __name__ == "__main__":
    # Small shapes consistent with the module: batch N=2, seq T=16 (spans two
    # T blocks so the hidden-state carry across grid steps is exercised),
    # input_size D=32, hidden/output_size H=32.
    N, T, D, H = 2, 16, 32, 32
    key = jax.random.PRNGKey(0)
    kx, kg, kb, k1, k2, k3, k4 = jax.random.split(key, 7)

    x = jax.random.normal(kx, (N, T, D), jnp.float32)

    # BatchNorm1d affine params.
    gamma = 1.0 + 0.1 * jax.random.normal(kg, (1, D), jnp.float32)
    beta = 0.1 * jax.random.normal(kb, (1, D), jnp.float32)

    # GRU params, PyTorch default init U(-1/sqrt(H), 1/sqrt(H)); stored
    # transposed ((D,3H)/(H,3H)) so matmuls are (rows,D)@(D,3H) style.
    bound = 1.0 / (H ** 0.5)
    wih_t = jax.random.uniform(k1, (D, 3 * H), jnp.float32, -bound, bound)
    whh_t = jax.random.uniform(k2, (H, 3 * H), jnp.float32, -bound, bound)
    bih = jax.random.uniform(k3, (1, 3 * H), jnp.float32, -bound, bound)
    bhh = jax.random.uniform(k4, (1, 3 * H), jnp.float32, -bound, bound)

    ref = _reference(x, gamma, beta, wih_t, whh_t, bih, bhh, residual=False)
    ref_res = _reference(x, gamma, beta, wih_t, whh_t, bih, bhh, residual=True)

    # Exact path: f32 MXU operands -> must match PyTorch-style reference tightly.
    out_f32 = jax.block_until_ready(
        batch_norm_rnn(x, gamma, beta, wih_t, whh_t, bih, bhh,
                       residual=False, compute_dtype=jnp.float32))
    assert out_f32.shape == (N, T, H)
    assert jnp.allclose(out_f32, ref, atol=1e-4, rtol=1e-4), "f32 mismatch"

    # Fused residual path.
    out_res = jax.block_until_ready(
        batch_norm_rnn(x, gamma, beta, wih_t, whh_t, bih, bhh,
                       residual=True, compute_dtype=jnp.float32))
    assert jnp.allclose(out_res, ref_res, atol=1e-4, rtol=1e-4), "residual mismatch"

    # Fast path: bf16 MXU operands (f32 accumulation + f32 gate math).
    out_bf16 = jax.block_until_ready(
        batch_norm_rnn(x, gamma, beta, wih_t, whh_t, bih, bhh,
                       residual=False, compute_dtype=jnp.bfloat16))
    assert jnp.allclose(out_bf16, ref, atol=5e-2, rtol=5e-2), "bf16 mismatch"

    # TODO(synk): BatchNorm running_mean/running_var update (training-time side
    # effect) is not materialized; nn.GRU dropout is a no-op for one layer and
    # is not modeled.
    print("KERNEL_OK")
</pallas_src>

<mosaic_0001>
module attributes {stable_mosaic.version = 11 : i64} {
  func.func @_bn_stats_kernel(%arg0: i32, %arg1: memref<64x128xf32, #tpu.memory_space<vmem>>, %arg2: memref<8x128xf32, #tpu.memory_space<vmem>>, %arg3: memref<8x128xf32, #tpu.memory_space<vmem>>) attributes {dimension_semantics = [#tpu.dimension_semantics<parallel>], iteration_bounds = array<i64: 2>, scalar_prefetch = 0 : i64, scratch_operands = 0 : i64, tpu.core_type = #tpu.core_type<tc>, window_params = [{transform_indices = @transform_0, window_bounds = array<i64: 64, 128>}, {transform_indices = @transform_1, window_bounds = array<i64: 8, 128>}, {transform_indices = @transform_2, window_bounds = array<i64: 8, 128>}]} {
    %c0 = arith.constant 0 : index
    %c0_0 = arith.constant 0 : index
    %0 = vector.load %arg1[%c0, %c0_0] : memref<64x128xf32, #tpu.memory_space<vmem>>, vector<64x128xf32>
    %1 = vector.shape_cast %0 : vector<64x128xf32> to vector<8x8x128xf32>
    %cst = arith.constant dense<0.000000e+00> : vector<8x128xf32>
    %2 = vector.multi_reduction <add>, %1, %cst [0] : vector<8x8x128xf32> to vector<8x128xf32>
    %c0_1 = arith.constant 0 : index
    %c0_2 = arith.constant 0 : index
    %3 = vector.load %arg2[%c0_1, %c0_2] : memref<8x128xf32, #tpu.memory_space<vmem>>, vector<8x128xf32>
    tpu.vector_store %arg2[%c0_1, %c0_2], %2 {strides = array<i32>} : memref<8x128xf32, #tpu.memory_space<vmem>>, vector<8x128xf32>,
    %4 = arith.mulf %1, %1 : vector<8x8x128xf32>
    %cst_3 = arith.constant dense<0.000000e+00> : vector<8x128xf32>
    %5 = vector.multi_reduction <add>, %4, %cst_3 [0] : vector<8x8x128xf32> to vector<8x128xf32>
    %c0_4 = arith.constant 0 : index
    %c0_5 = arith.constant 0 : index
    %6 = vector.load %arg3[%c0_4, %c0_5] : memref<8x128xf32, #tpu.memory_space<vmem>>, vector<8x128xf32>
    tpu.vector_store %arg3[%c0_4, %c0_5], %5 {strides = array<i32>} : memref<8x128xf32, #tpu.memory_space<vmem>>, vector<8x128xf32>,
    return
  }
  func.func @transform_0(%arg0: i32) -> (i32, i32) {
    %c0_i32 = arith.constant 0 : i32
    %c0_i32_0 = arith.constant 0 : i32
    return %arg0, %c0_i32 : i32, i32
  }
  func.func @transform_1(%arg0: i32) -> (i32, i32) {
    %c0_i32 = arith.constant 0 : i32
    %c0_i32_0 = arith.constant 0 : i32
    return %arg0, %c0_i32 : i32, i32
  }
  func.func @transform_2(%arg0: i32) -> (i32, i32) {
    %c0_i32 = arith.constant 0 : i32
    %c0_i32_0 = arith.constant 0 : i32
    return %arg0, %c0_i32 : i32, i32
  }
}

module attributes {stable_mosaic.version = 11 : i64} {
  func.func @_bn_gru_kernel(%arg0: i32, %arg1: i32, %arg2: memref<8x8x128xf32, #tpu.memory_space<vmem>>, %arg3: memref<128x384xf32, #tpu.memory_space<vmem>>, %arg4: memref<128x384xf32, #tpu.memory_space<vmem>>, %arg5: memref<1x384xf32, #tpu.memory_space<vmem>>, %arg6: memref<1x128xf32, #tpu.memory_space<vmem>>, %arg7: memref<8x8x128xf32, #tpu.memory_space<vmem>>, %arg8: memref<8x128xf32, #tpu.memory_space<vmem>>) attributes {dimension_semantics = [#tpu.dimension_semantics<parallel>, #tpu.dimension_semantics<arbitrary>], iteration_bounds = array<i64: 1, 2>, scalar_prefetch = 0 : i64, scratch_operands = 1 : i64, tpu.core_type = #tpu.core_type<tc>, window_params = [{transform_indices = @transform_0, window_bounds = array<i64: 8, 8, 128>}, {pipeline_mode = #tpu.pipeline_mode<synchronous>, transform_indices = @transform_1, window_bounds = array<i64: 128, 384>}, {pipeline_mode = #tpu.pipeline_mode<synchronous>, transform_indices = @transform_2, window_bounds = array<i64: 128, 384>}, {pipeline_mode = #tpu.pipeline_mode<synchronous>, transform_indices = @transform_3, window_bounds = array<i64: 1, 384>}, {pipeline_mode = #tpu.pipeline_mode<synchronous>, transform_indices = @transform_4, window_bounds = array<i64: 1, 128>}, {transform_indices = @transform_5, window_bounds = array<i64: 8, 8, 128>}]} {
    %c0_i32 = arith.constant 0 : i32
    %0 = arith.cmpi eq, %arg1, %c0_i32 : i32
    %1 = arith.extui %0 : i1 to i32
    %c0_i32_0 = arith.constant 0 : i32
    %2 = arith.cmpi ne, %1, %c0_i32_0 : i32
    scf.if %2 {
      %cst_50 = arith.constant 0.000000e+00 : f32
      %267 = vector.broadcast %cst_50 : f32 to vector<8x128xf32>
      %c0_51 = arith.constant 0 : index
      %c0_52 = arith.constant 0 : index
      %268 = vector.load %arg8[%c0_51, %c0_52] : memref<8x128xf32, #tpu.memory_space<vmem>>, vector<8x128xf32>
      tpu.vector_store %arg8[%c0_51, %c0_52], %267 {strides = array<i32>} : memref<8x128xf32, #tpu.memory_space<vmem>>, vector<8x128xf32>,
    } else {
    }
    %c0 = arith.constant 0 : index
    %c0_1 = arith.constant 0 : index
    %c0_2 = arith.constant 0 : index
    %3 = vector.load %arg2[%c0, %c0_1, %c0_2] : memref<8x8x128xf32, #tpu.memory_space<vmem>>, vector<8x8x128xf32>
    %4 = vector.shape_cast %3 : vector<8x8x128xf32> to vector<64x128xf32>
    %c0_3 = arith.constant 0 : index
    %c0_4 = arith.constant 0 : index
    %5 = vector.load %arg3[%c0_3, %c0_4] : memref<128x384xf32, #tpu.memory_space<vmem>>, vector<128x384xf32>
    %cst = arith.constant dense<0.000000e+00> : vector<64x384xf32>
    %6 = tpu.matmul %4, %5, %cst {dimension_numbers = #tpu.dot_dimension_numbers<[1], [0], [0], [1], [0, 0, 1, 1], [], []>} : vector<64x128xf32>, vector<128x384xf32>, vector<64x384xf32> -> vector<64x384xf32>
    %c0_5 = arith.constant 0 : index
    %c0_6 = arith.constant 0 : index
    %7 = vector.load %arg5[%c0_5, %c0_6] : memref<1x384xf32, #tpu.memory_space<vmem>>, vector<1x384xf32>
    %8 = vector.broadcast %7 : vector<1x384xf32> to vector<64x384xf32>
    %9 = arith.addf %6, %8 : vector<64x384xf32>
    %10 = vector.shape_cast %9 : vector<64x384xf32> to vector<8x8x384xf32>
    %c0_7 = arith.constant 0 : index
    %c0_8 = arith.constant 0 : index
    %11 = vector.load %arg4[%c0_7, %c0_8] : memref<128x384xf32, #tpu.memory_space<vmem>>, vector<128x384xf32>
    %c0_9 = arith.constant 0 : index
    %c0_10 = arith.constant 0 : index
    %12 = vector.load %arg6[%c0_9, %c0_10] : memref<1x128xf32, #tpu.memory_space<vmem>>, vector<1x128xf32>
    %13 = vector.shape_cast %12 : vector<1x128xf32> to vector<1x128xf32>
    %14 = vector.broadcast %13 : vector<1x128xf32> to vector<8x128xf32>
    %c0_11 = arith.constant 0 : index
    %c0_12 = arith.constant 0 : index
    %15 = vector.load %arg8[%c0_11, %c0_12] : memref<8x128xf32, #tpu.memory_space<vmem>>, vector<8x128xf32>
    %16 = vector.extract_strided_slice %10 {offsets = [0, 0, 0], sizes = [8, 1, 384], strides = [1, 1, 1]} : vector<8x8x384xf32> to vector<8x1x384xf32>
    %17 = vector.shape_cast %16 : vector<8x1x384xf32> to vector<8x384xf32>
    %cst_13 = arith.constant dense<0.000000e+00> : vector<8x384xf32>
    %18 = tpu.matmul %15, %11, %cst_13 {dimension_numbers = #tpu.dot_dimension_numbers<[1], [0], [0], [1], [0, 0, 1, 1], [], []>} : vector<8x128xf32>, vector<128x384xf32>, vector<8x384xf32> -> vector<8x384xf32>
    %19 = vector.extract_strided_slice %17 {offsets = [0, 0], sizes = [8, 128], strides = [1, 1]} : vector<8x384xf32> to vector<8x128xf32>
    %20 = vector.extract_strided_slice %18 {offsets = [0, 0], sizes = [8, 128], strides = [1, 1]} : vector<8x384xf32> to vector<8x128xf32>
    %21 = arith.addf %19, %20 : vector<8x128xf32>
    %22 = arith.negf %21 : vector<8x128xf32>
    %23 = math.exp %22 : vector<8x128xf32>
    %cst_14 = arith.constant 1.000000e+00 : f32
    %24 = vector.broadcast %cst_14 : f32 to vector<8x128xf32>
    %25 = arith.addf %24, %23 : vector<8x128xf32>
    %26 = arith.divf %24, %25 : vector<8x128xf32>
    %27 = vector.extract_strided_slice %17 {offsets = [0, 128], sizes = [8, 128], strides = [1, 1]} : vector<8x384xf32> to vector<8x128xf32>
    %28 = vector.extract_strided_slice %18 {offsets = [0, 128], sizes = [8, 128], strides = [1, 1]} : vector<8x384xf32> to vector<8x128xf32>
    %29 = arith.addf %27, %28 : vector<8x128xf32>
    %30 = arith.negf %29 : vector<8x128xf32>
    %31 = math.exp %30 : vector<8x128xf32>
    %cst_15 = arith.constant 1.000000e+00 : f32
    %32 = vector.broadcast %cst_15 : f32 to vector<8x128xf32>
    %33 = arith.addf %32, %31 : vector<8x128xf32>
    %34 = arith.divf %32, %33 : vector<8x128xf32>
    %35 = vector.extract_strided_slice %17 {offsets = [0, 256], sizes = [8, 128], strides = [1, 1]} : vector<8x384xf32> to vector<8x128xf32>
    %36 = vector.extract_strided_slice %18 {offsets = [0, 256], sizes = [8, 128], strides = [1, 1]} : vector<8x384xf32> to vector<8x128xf32>
    %37 = arith.addf %36, %14 : vector<8x128xf32>
    %38 = arith.mulf %26, %37 : vector<8x128xf32>
    %39 = arith.addf %35, %38 : vector<8x128xf32>
    %40 = math.tanh %39 : vector<8x128xf32>
    %cst_16 = arith.constant 1.000000e+00 : f32
    %41 = vector.broadcast %cst_16 : f32 to vector<8x128xf32>
    %42 = arith.subf %41, %34 : vector<8x128xf32>
    %43 = arith.mulf %42, %40 : vector<8x128xf32>
    %44 = arith.mulf %34, %15 : vector<8x128xf32>
    %45 = arith.addf %43, %44 : vector<8x128xf32>
    %46 = vector.extract_strided_slice %10 {offsets = [0, 1, 0], sizes = [8, 1, 384], strides = [1, 1, 1]} : vector<8x8x384xf32> to vector<8x1x384xf32>
    %47 = vector.shape_cast %46 : vector<8x1x384xf32> to vector<8x384xf32>
    %cst_17 = arith.constant dense<0.000000e+00> : vector<8x384xf32>
    %48 = tpu.matmul %45, %11, %cst_17 {dimension_numbers = #tpu.dot_dimension_numbers<[1], [0], [0], [1], [0, 0, 1, 1], [], []>} : vector<8x128xf32>, vector<128x384xf32>, vector<8x384xf32> -> vector<8x384xf32>
    %49 = vector.extract_strided_slice %47 {offsets = [0, 0], sizes = [8, 128], strides = [1, 1]} : vector<8x384xf32> to vector<8x128xf32>
    %50 = vector.extract_strided_slice %48 {offsets = [0, 0], sizes = [8, 128], strides = [1, 1]} : vector<8x384xf32> to vector<8x128xf32>
    %51 = arith.addf %49, %50 : vector<8x128xf32>
    %52 = arith.negf %51 : vector<8x128xf32>
    %53 = math.exp %52 : vector<8x128xf32>
    %cst_18 = arith.constant 1.000000e+00 : f32
    %54 = vector.broadcast %cst_18 : f32 to vector<8x128xf32>
    %55 = arith.addf %54, %53 : vector<8x128xf32>
    %56 = arith.divf %54, %55 : vector<8x128xf32>
    %57 = vector.extract_strided_slice %47 {offsets = [0, 128], sizes = [8, 128], strides = [1, 1]} : vector<8x384xf32> to vector<8x128xf32>
    %58 = vector.extract_strided_slice %48 {offsets = [0, 128], sizes = [8, 128], strides = [1, 1]} : vector<8x384xf32> to vector<8x128xf32>
    %59 = arith.addf %57, %58 : vector<8x128xf32>
    %60 = arith.negf %59 : vector<8x128xf32>
    %61 = math.exp %60 : vector<8x128xf32>
    %cst_19 = arith.constant 1.000000e+00 : f32
    %62 = vector.broadcast %cst_19 : f32 to vector<8x128xf32>
    %63 = arith.addf %62, %61 : vector<8x128xf32>
    %64 = arith.divf %62, %63 : vector<8x128xf32>
    %65 = vector.extract_strided_slice %47 {offsets = [0, 256], sizes = [8, 128], strides = [1, 1]} : vector<8x384xf32> to vector<8x128xf32>
    %66 = vector.extract_strided_slice %48 {offsets = [0, 256], sizes = [8, 128], strides = [1, 1]} : vector<8x384xf32> to vector<8x128xf32>
    %67 = arith.addf %66, %14 : vector<8x128xf32>
    %68 = arith.mulf %56, %67 : vector<8x128xf32>
    %69 = arith.addf %65, %68 : vector<8x128xf32>
    %70 = math.tanh %69 : vector<8x128xf32>
    %cst_20 = arith.constant 1.000000e+00 : f32
    %71 = vector.broadcast %cst_20 : f32 to vector<8x128xf32>
    %72 = arith.subf %71, %64 : vector<8x128xf32>
    %73 = arith.mulf %72, %70 : vector<8x128xf32>
    %74 = arith.mulf %64, %45 : vector<8x128xf32>
    %75 = arith.addf %73, %74 : vector<8x128xf32>
    %76 = vector.extract_strided_slice %10 {offsets = [0, 2, 0], sizes = [8, 1, 384], strides = [1, 1, 1]} : vector<8x8x384xf32> to vector<8x1x384xf32>
    %77 = vector.shape_cast %76 : vector<8x1x384xf32> to vector<8x384xf32>
    %cst_21 = arith.constant dense<0.000000e+00> : vector<8x384xf32>
    %78 = tpu.matmul %75, %11, %cst_21 {dimension_numbers = #tpu.dot_dimension_numbers<[1], [0], [0], [1], [0, 0, 1, 1], [], []>} : vector<8x128xf32>, vector<128x384xf32>, vector<8x384xf32> -> vector<8x384xf32>
    %79 = vector.extract_strided_slice %77 {offsets = [0, 0], sizes = [8, 128], strides = [1, 1]} : vector<8x384xf32> to vector<8x128xf32>
    %80 = vector.extract_strided_slice %78 {offsets = [0, 0], sizes = [8, 128], strides = [1, 1]} : vector<8x384xf32> to vector<8x128xf32>
    %81 = arith.addf %79, %80 : vector<8x128xf32>
    %82 = arith.negf %81 : vector<8x128xf32>
    %83 = math.exp %82 : vector<8x128xf32>
    %cst_22 = arith.constant 1.000000e+00 : f32
    %84 = vector.broadcast %cst_22 : f32 to vector<8x128xf32>
    %85 = arith.addf %84, %83 : vector<8x128xf32>
    %86 = arith.divf %84, %85 : vector<8x128xf32>
    %87 = vector.extract_strided_slice %77 {offsets = [0, 128], sizes = [8, 128], strides = [1, 1]} : vector<8x384xf32> to vector<8x128xf32>
    %88 = vector.extract_strided_slice %78 {offsets = [0, 128], sizes = [8, 128], strides = [1, 1]} : vector<8x384xf32> to vector<8x128xf32>
    %89 = arith.addf %87, %88 : vector<8x128xf32>
    %90 = arith.negf %89 : vector<8x128xf32>
    %91 = math.exp %90 : vector<8x128xf32>
    %cst_23 = arith.constant 1.000000e+00 : f32
    %92 = vector.broadcast %cst_23 : f32 to vector<8x128xf32>
    %93 = arith.addf %92, %91 : vector<8x128xf32>
    %94 = arith.divf %92, %93 : vector<8x128xf32>
    %95 = vector.extract_strided_slice %77 {offsets = [0, 256], sizes = [8, 128], strides = [1, 1]} : vector<8x384xf32> to vector<8x128xf32>
    %96 = vector.extract_strided_slice %78 {offsets = [0, 256], sizes = [8, 128], strides = [1, 1]} : vector<8x384xf32> to vector<8x128xf32>
    %97 = arith.addf %96, %14 : vector<8x128xf32>
    %98 = arith.mulf %86, %97 : vector<8x128xf32>
    %99 = arith.addf %95, %98 : vector<8x128xf32>
    %100 = math.tanh %99 : vector<8x128xf32>
    %cst_24 = arith.constant 1.000000e+00 : f32
    %101 = vector.broadcast %cst_24 : f32 to vector<8x128xf32>
    %102 = arith.subf %101, %94 : vector<8x128xf32>
    %103 = arith.mulf %102, %100 : vector<8x128xf32>
    %104 = arith.mulf %94, %75 : vector<8x128xf32>
    %105 = arith.addf %103, %104 : vector<8x128xf32>
    %106 = vector.extract_strided_slice %10 {offsets = [0, 3, 0], sizes = [8, 1, 384], strides = [1, 1, 1]} : vector<8x8x384xf32> to vector<8x1x384xf32>
    %107 = vector.shape_cast %106 : vector<8x1x384xf32> to vector<8x384xf32>
    %cst_25 = arith.constant dense<0.000000e+00> : vector<8x384xf32>
    %108 = tpu.matmul %105, %11, %cst_25 {dimension_numbers = #tpu.dot_dimension_numbers<[1], [0], [0], [1], [0, 0, 1, 1], [], []>} : vector<8x128xf32>, vector<128x384xf32>, vector<8x384xf32> -> vector<8x384xf32>
    %109 = vector.extract_strided_slice %107 {offsets = [0, 0], sizes = [8, 128], strides = [1, 1]} : vector<8x384xf32> to vector<8x128xf32>
    %110 = vector.extract_strided_slice %108 {offsets = [0, 0], sizes = [8, 128], strides = [1, 1]} : vector<8x384xf32> to vector<8x128xf32>
    %111 = arith.addf %109, %110 : vector<8x128xf32>
    %112 = arith.negf %111 : vector<8x128xf32>
    %113 = math.exp %112 : vector<8x128xf32>
    %cst_26 = arith.constant 1.000000e+00 : f32
    %114 = vector.broadcast %cst_26 : f32 to vector<8x128xf32>
    %115 = arith.addf %114, %113 : vector<8x128xf32>
    %116 = arith.divf %114, %115 : vector<8x128xf32>
    %117 = vector.extract_strided_slice %107 {offsets = [0, 128], sizes = [8, 128], strides = [1, 1]} : vector<8x384xf32> to vector<8x128xf32>
    %118 = vector.extract_strided_slice %108 {offsets = [0, 128], sizes = [8, 128], strides = [1, 1]} : vector<8x384xf32> to vector<8x128xf32>
    %119 = arith.addf %117, %118 : vector<8x128xf32>
    %120 = arith.negf %119 : vector<8x128xf32>
    %121 = math.exp %120 : vector<8x128xf32>
    %cst_27 = arith.constant 1.000000e+00 : f32
    %122 = vector.broadcast %cst_27 : f32 to vector<8x128xf32>
    %123 = arith.addf %122, %121 : vector<8x128xf32>
    %124 = arith.divf %122, %123 : vector<8x128xf32>
    %125 = vector.extract_strided_slice %107 {offsets = [0, 256], sizes = [8, 128], strides = [1, 1]} : vector<8x384xf32> to vector<8x128xf32>
    %126 = vector.extract_strided_slice %108 {offsets = [0, 256], sizes = [8, 128], strides = [1, 1]} : vector<8x384xf32> to vector<8x128xf32>
    %127 = arith.addf %126, %14 : vector<8x128xf32>
    %128 = arith.mulf %116, %127 : vector<8x128xf32>
    %129 = arith.addf %125, %128 : vector<8x128xf32>
    %130 = math.tanh %129 : vector<8x128xf32>
    %cst_28 = arith.constant 1.000000e+00 : f32
    %131 = vector.broadcast %cst_28 : f32 to vector<8x128xf32>
    %132 = arith.subf %131, %124 : vector<8x128xf32>
    %133 = arith.mulf %132, %130 : vector<8x128xf32>
    %134 = arith.mulf %124, %105 : vector<8x128xf32>
    %135 = arith.addf %133, %134 : vector<8x128xf32>
    %136 = vector.extract_strided_slice %10 {offsets = [0, 4, 0], sizes = [8, 1, 384], strides = [1, 1, 1]} : vector<8x8x384xf32> to vector<8x1x384xf32>
    %137 = vector.shape_cast %136 : vector<8x1x384xf32> to vector<8x384xf32>
    %cst_29 = arith.constant dense<0.000000e+00> : vector<8x384xf32>
    %138 = tpu.matmul %135, %11, %cst_29 {dimension_numbers = #tpu.dot_dimension_numbers<[1], [0], [0], [1], [0, 0, 1, 1], [], []>} : vector<8x128xf32>, vector<128x384xf32>, vector<8x384xf32> -> vector<8x384xf32>
    %139 = vector.extract_strided_slice %137 {offsets = [0, 0], sizes = [8, 128], strides = [1, 1]} : vector<8x384xf32> to vector<8x128xf32>
    %140 = vector.extract_strided_slice %138 {offsets = [0, 0], sizes = [8, 128], strides = [1, 1]} : vector<8x384xf32> to vector<8x128xf32>
    %141 = arith.addf %139, %140 : vector<8x128xf32>
    %142 = arith.negf %141 : vector<8x128xf32>
    %143 = math.exp %142 : vector<8x128xf32>
    %cst_30 = arith.constant 1.000000e+00 : f32
    %144 = vector.broadcast %cst_30 : f32 to vector<8x128xf32>
    %145 = arith.addf %144, %143 : vector<8x128xf32>
    %146 = arith.divf %144, %145 : vector<8x128xf32>
    %147 = vector.extract_strided_slice %137 {offsets = [0, 128], sizes = [8, 128], strides = [1, 1]} : vector<8x384xf32> to vector<8x128xf32>
    %148 = vector.extract_strided_slice %138 {offsets = [0, 128], sizes = [8, 128], strides = [1, 1]} : vector<8x384xf32> to vector<8x128xf32>
    %149 = arith.addf %147, %148 : vector<8x128xf32>
    %150 = arith.negf %149 : vector<8x128xf32>
    %151 = math.exp %150 : vector<8x128xf32>
    %cst_31 = arith.constant 1.000000e+00 : f32
    %152 = vector.broadcast %cst_31 : f32 to vector<8x128xf32>
    %153 = arith.addf %152, %151 : vector<8x128xf32>
    %154 = arith.divf %152, %153 : vector<8x128xf32>
    %155 = vector.extract_strided_slice %137 {offsets = [0, 256], sizes = [8, 128], strides = [1, 1]} : vector<8x384xf32> to vector<8x128xf32>
    %156 = vector.extract_strided_slice %138 {offsets = [0, 256], sizes = [8, 128], strides = [1, 1]} : vector<8x384xf32> to vector<8x128xf32>
    %157 = arith.addf %156, %14 : vector<8x128xf32>
    %158 = arith.mulf %146, %157 : vector<8x128xf32>
    %159 = arith.addf %155, %158 : vector<8x128xf32>
    %160 = math.tanh %159 : vector<8x128xf32>
    %cst_32 = arith.constant 1.000000e+00 : f32
    %161 = vector.broadcast %cst_32 : f32 to vector<8x128xf32>
    %162 = arith.subf %161, %154 : vector<8x128xf32>
    %163 = arith.mulf %162, %160 : vector<8x128xf32>
    %164 = arith.mulf %154, %135 : vector<8x128xf32>
    %165 = arith.addf %163, %164 : vector<8x128xf32>
    %166 = vector.extract_strided_slice %10 {offsets = [0, 5, 0], sizes = [8, 1, 384], strides = [1, 1, 1]} : vector<8x8x384xf32> to vector<8x1x384xf32>
    %167 = vector.shape_cast %166 : vector<8x1x384xf32> to vector<8x384xf32>
    %cst_33 = arith.constant dense<0.000000e+00> : vector<8x384xf32>
    %168 = tpu.matmul %165, %11, %cst_33 {dimension_numbers = #tpu.dot_dimension_numbers<[1], [0], [0], [1], [0, 0, 1, 1], [], []>} : vector<8x128xf32>, vector<128x384xf32>, vector<8x384xf32> -> vector<8x384xf32>
    %169 = vector.extract_strided_slice %167 {offsets = [0, 0], sizes = [8, 128], strides = [1, 1]} : vector<8x384xf32> to vector<8x128xf32>
    %170 = vector.extract_strided_slice %168 {offsets = [0, 0], sizes = [8, 128], strides = [1, 1]} : vector<8x384xf32> to vector<8x128xf32>
    %171 = arith.addf %169, %170 : vector<8x128xf32>
    %172 = arith.negf %171 : vector<8x128xf32>
    %173 = math.exp %172 : vector<8x128xf32>
    %cst_34 = arith.constant 1.000000e+00 : f32
    %174 = vector.broadcast %cst_34 : f32 to vector<8x128xf32>
    %175 = arith.addf %174, %173 : vector<8x128xf32>
    %176 = arith.divf %174, %175 : vector<8x128xf32>
    %177 = vector.extract_strided_slice %167 {offsets = [0, 128], sizes = [8, 128], strides = [1, 1]} : vector<8x384xf32> to vector<8x128xf32>
    %178 = vector.extract_strided_slice %168 {offsets = [0, 128], sizes = [8, 128], strides = [1, 1]} : vector<8x384xf32> to vector<8x128xf32>
    %179 = arith.addf %177, %178 : vector<8x128xf32>
    %180 = arith.negf %179 : vector<8x128xf32>
    %181 = math.exp %180 : vector<8x128xf32>
    %cst_35 = arith.constant 1.000000e+00 : f32
    %182 = vector.broadcast %cst_35 : f32 to vector<8x128xf32>
    %183 = arith.addf %182, %181 : vector<8x128xf32>
    %184 = arith.divf %182, %183 : vector<8x128xf32>
    %185 = vector.extract_strided_slice %167 {offsets = [0, 256], sizes = [8, 128], strides = [1, 1]} : vector<8x384xf32> to vector<8x128xf32>
    %186 = vector.extract_strided_slice %168 {offsets = [0, 256], sizes = [8, 128], strides = [1, 1]} : vector<8x384xf32> to vector<8x128xf32>
    %187 = arith.addf %186, %14 : vector<8x128xf32>
    %188 = arith.mulf %176, %187 : vector<8x128xf32>
    %189 = arith.addf %185, %188 : vector<8x128xf32>
    %190 = math.tanh %189 : vector<8x128xf32>
    %cst_36 = arith.constant 1.000000e+00 : f32
    %191 = vector.broadcast %cst_36 : f32 to vector<8x128xf32>
    %192 = arith.subf %191, %184 : vector<8x128xf32>
    %193 = arith.mulf %192, %190 : vector<8x128xf32>
    %194 = arith.mulf %184, %165 : vector<8x128xf32>
    %195 = arith.addf %193, %194 : vector<8x128xf32>
    %196 = vector.extract_strided_slice %10 {offsets = [0, 6, 0], sizes = [8, 1, 384], strides = [1, 1, 1]} : vector<8x8x384xf32> to vector<8x1x384xf32>
    %197 = vector.shape_cast %196 : vector<8x1x384xf32> to vector<8x384xf32>
    %cst_37 = arith.constant dense<0.000000e+00> : vector<8x384xf32>
    %198 = tpu.matmul %195, %11, %cst_37 {dimension_numbers = #tpu.dot_dimension_numbers<[1], [0], [0], [1], [0, 0, 1, 1], [], []>} : vector<8x128xf32>, vector<128x384xf32>, vector<8x384xf32> -> vector<8x384xf32>
    %199 = vector.extract_strided_slice %197 {offsets = [0, 0], sizes = [8, 128], strides = [1, 1]} : vector<8x384xf32> to vector<8x128xf32>
    %200 = vector.extract_strided_slice %198 {offsets = [0, 0], sizes = [8, 128], strides = [1, 1]} : vector<8x384xf32> to vector<8x128xf32>
    %201 = arith.addf %199, %200 : vector<8x128xf32>
    %202 = arith.negf %201 : vector<8x128xf32>
    %203 = math.exp %202 : vector<8x128xf32>
    %cst_38 = arith.constant 1.000000e+00 : f32
    %204 = vector.broadcast %cst_38 : f32 to vector<8x128xf32>
    %205 = arith.addf %204, %203 : vector<8x128xf32>
    %206 = arith.divf %204, %205 : vector<8x128xf32>
    %207 = vector.extract_strided_slice %197 {offsets = [0, 128], sizes = [8, 128], strides = [1, 1]} : vector<8x384xf32> to vector<8x128xf32>
    %208 = vector.extract_strided_slice %198 {offsets = [0, 128], sizes = [8, 128], strides = [1, 1]} : vector<8x384xf32> to vector<8x128xf32>
    %209 = arith.addf %207, %208 : vector<8x128xf32>
    %210 = arith.negf %209 : vector<8x128xf32>
    %211 = math.exp %210 : vector<8x128xf32>
    %cst_39 = arith.constant 1.000000e+00 : f32
    %212 = vector.broadcast %cst_39 : f32 to vector<8x128xf32>
    %213 = arith.addf %212, %211 : vector<8x128xf32>
    %214 = arith.divf %212, %213 : vector<8x128xf32>
    %215 = vector.extract_strided_slice %197 {offsets = [0, 256], sizes = [8, 128], strides = [1, 1]} : vector<8x384xf32> to vector<8x128xf32>
    %216 = vector.extract_strided_slice %198 {offsets = [0, 256], sizes = [8, 128], strides = [1, 1]} : vector<8x384xf32> to vector<8x128xf32>
    %217 = arith.addf %216, %14 : vector<8x128xf32>
    %218 = arith.mulf %206, %217 : vector<8x128xf32>
    %219 = arith.addf %215, %218 : vector<8x128xf32>
    %220 = math.tanh %219 : vector<8x128xf32>
    %cst_40 = arith.constant 1.000000e+00 : f32
    %221 = vector.broadcast %cst_40 : f32 to vector<8x128xf32>
    %222 = arith.subf %221, %214 : vector<8x128xf32>
    %223 = arith.mulf %222, %220 : vector<8x128xf32>
    %224 = arith.mulf %214, %195 : vector<8x128xf32>
    %225 = arith.addf %223, %224 : vector<8x128xf32>
    %226 = vector.extract_strided_slice %10 {offsets = [0, 7, 0], sizes = [8, 1, 384], strides = [1, 1, 1]} : vector<8x8x384xf32> to vector<8x1x384xf32>
    %227 = vector.shape_cast %226 : vector<8x1x384xf32> to vector<8x384xf32>
    %cst_41 = arith.constant dense<0.000000e+00> : vector<8x384xf32>
    %228 = tpu.matmul %225, %11, %cst_41 {dimension_numbers = #tpu.dot_dimension_numbers<[1], [0], [0], [1], [0, 0, 1, 1], [], []>} : vector<8x128xf32>, vector<128x384xf32>, vector<8x384xf32> -> vector<8x384xf32>
    %229 = vector.extract_strided_slice %227 {offsets = [0, 0], sizes = [8, 128], strides = [1, 1]} : vector<8x384xf32> to vector<8x128xf32>
    %230 = vector.extract_strided_slice %228 {offsets = [0, 0], sizes = [8, 128], strides = [1, 1]} : vector<8x384xf32> to vector<8x128xf32>
    %231 = arith.addf %229, %230 : vector<8x128xf32>
    %232 = arith.negf %231 : vector<8x128xf32>
    %233 = math.exp %232 : vector<8x128xf32>
    %cst_42 = arith.constant 1.000000e+00 : f32
    %234 = vector.broadcast %cst_42 : f32 to vector<8x128xf32>
    %235 = arith.addf %234, %233 : vector<8x128xf32>
    %236 = arith.divf %234, %235 : vector<8x128xf32>
    %237 = vector.extract_strided_slice %227 {offsets = [0, 128], sizes = [8, 128], strides = [1, 1]} : vector<8x384xf32> to vector<8x128xf32>
    %238 = vector.extract_strided_slice %228 {offsets = [0, 128], sizes = [8, 128], strides = [1, 1]} : vector<8x384xf32> to vector<8x128xf32>
    %239 = arith.addf %237, %238 : vector<8x128xf32>
    %240 = arith.negf %239 : vector<8x128xf32>
    %241 = math.exp %240 : vector<8x128xf32>
    %cst_43 = arith.constant 1.000000e+00 : f32
    %242 = vector.broadcast %cst_43 : f32 to vector<8x128xf32>
    %243 = arith.addf %242, %241 : vector<8x128xf32>
    %244 = arith.divf %242, %243 : vector<8x128xf32>
    %245 = vector.extract_strided_slice %227 {offsets = [0, 256], sizes = [8, 128], strides = [1, 1]} : vector<8x384xf32> to vector<8x128xf32>
    %246 = vector.extract_strided_slice %228 {offsets = [0, 256], sizes = [8, 128], strides = [1, 1]} : vector<8x384xf32> to vector<8x128xf32>
    %247 = arith.addf %246, %14 : vector<8x128xf32>
    %248 = arith.mulf %236, %247 : vector<8x128xf32>
    %249 = arith.addf %245, %248 : vector<8x128xf32>
    %250 = math.tanh %249 : vector<8x128xf32>
    %cst_44 = arith.constant 1.000000e+00 : f32
    %251 = vector.broadcast %cst_44 : f32 to vector<8x128xf32>
    %252 = arith.subf %251, %244 : vector<8x128xf32>
    %253 = arith.mulf %252, %250 : vector<8x128xf32>
    %254 = arith.mulf %244, %225 : vector<8x128xf32>
    %255 = arith.addf %253, %254 : vector<8x128xf32>
    %c0_45 = arith.constant 0 : index
    %c0_46 = arith.constant 0 : index
    %256 = vector.load %arg8[%c0_45, %c0_46] : memref<8x128xf32, #tpu.memory_space<vmem>>, vector<8x128xf32>
    tpu.vector_store %arg8[%c0_45, %c0_46], %255 {strides = array<i32>} : memref<8x128xf32, #tpu.memory_space<vmem>>, vector<8x128xf32>,
    %257 = vector.shape_cast %45 : vector<8x128xf32> to vector<8x1x128xf32>
    %258 = vector.shape_cast %75 : vector<8x128xf32> to vector<8x1x128xf32>
    %259 = vector.shape_cast %105 : vector<8x128xf32> to vector<8x1x128xf32>
    %260 = vector.shape_cast %135 : vector<8x128xf32> to vector<8x1x128xf32>
    %261 = vector.shape_cast %165 : vector<8x128xf32> to vector<8x1x128xf32>
    %262 = vector.shape_cast %195 : vector<8x128xf32> to vector<8x1x128xf32>
    %263 = vector.shape_cast %225 : vector<8x128xf32> to vector<8x1x128xf32>
    %264 = vector.shape_cast %255 : vector<8x128xf32> to vector<8x1x128xf32>
    %265 = tpu.concatenate %257, %258, %259, %260, %261, %262, %263, %264 in 1 : vector<8x1x128xf32>, vector<8x1x128xf32>, vector<8x1x128xf32>, vector<8x1x128xf32>, vector<8x1x128xf32>, vector<8x1x128xf32>, vector<8x1x128xf32>, vector<8x1x128xf32> -> vector<8x8x128xf32>
    %c0_47 = arith.constant 0 : index
    %c0_48 = arith.constant 0 : index
    %c0_49 = arith.constant 0 : index
    %266 = vector.load %arg7[%c0_47, %c0_48, %c0_49] : memref<8x8x128xf32, #tpu.memory_space<vmem>>, vector<8x8x128xf32>
    tpu.vector_store %arg7[%c0_47, %c0_48, %c0_49], %265 {strides = array<i32>} : memref<8x8x128xf32, #tpu.memory_space<vmem>>, vector<8x8x128xf32>,
    return
  }
  func.func @transform_0(%arg0: i32, %arg1: i32) -> (i32, i32, i32) {
    %c0_i32 = arith.constant 0 : i32
    %c0_i32_0 = arith.constant 0 : i32
    return %arg0, %arg1, %c0_i32 : i32, i32, i32
  }
  func.func @transform_1(%arg0: i32, %arg1: i32) -> (i32, i32) {
    %c0_i32 = arith.constant 0 : i32
    %c0_i32_0 = arith.constant 0 : i32
    %c0_i32_1 = arith.constant 0 : i32
    return %c0_i32, %c0_i32_0 : i32, i32
  }
  func.func @transform_2(%arg0: i32, %arg1: i32) -> (i32, i32) {
    %c0_i32 = arith.constant 0 : i32
    %c0_i32_0 = arith.constant 0 : i32
    %c0_i32_1 = arith.constant 0 : i32
    return %c0_i32, %c0_i32_0 : i32, i32
  }
  func.func @transform_3(%arg0: i32, %arg1: i32) -> (i32, i32) {
    %c0_i32 = arith.constant 0 : i32
    %c0_i32_0 = arith.constant 0 : i32
    %c0_i32_1 = arith.constant 0 : i32
    return %c0_i32, %c0_i32_0 : i32, i32
  }
  func.func @transform_4(%arg0: i32, %arg1: i32) -> (i32, i32) {
    %c0_i32 = arith.constant 0 : i32
    %c0_i32_0 = arith.constant 0 : i32
    %c0_i32_1 = arith.constant 0 : i32
    return %c0_i32, %c0_i32_0 : i32, i32
  }
  func.func @transform_5(%arg0: i32, %arg1: i32) -> (i32, i32, i32) {
    %c0_i32 = arith.constant 0 : i32
    %c0_i32_0 = arith.constant 0 : i32
    return %arg0, %arg1, %c0_i32 : i32, i32, i32
  }
}

</mosaic_0001>

<llo_original>
// kernel: batch_norm_rnn.2
$region0: #{batch_norm_rnn.2}
  #allocation0 [shape = 'u32[]', space=smem, size = 0x4, offset = 0x4, fixed_abs, tag = 'smem constant byte address 0x4 - core index']
  #allocation1 [shape = 'u32[144,128]{1,0:T(1,128)}', space=vmem, size = 0x12000, scoped, tag = 'internal scratch']
  %s0 = inlined_call_operand.vmem [shape: f32[128,128], index: 0, kind: input, shape index: {}]
  %s1 = inlined_call_operand.vmem [shape: f32[16,128], index: 1, kind: output, shape index: {0}]
  %s2 = inlined_call_operand.vmem [shape: f32[16,128], index: 2, kind: output, shape index: {1}]
  %3 = xla_tuple %s1, %s2
  %s4 = sld [smem:[#allocation0]]
  $region45: #{batch_norm_rnn.2} parent=0
    _
  %s6 = ssub.s32 1, %s4
  %s7 = scalar_select 0, %s6, %s4
  loop: start=0, step=1, limit=4
  $region2: #{batch_norm_rnn.2} parent=0 // loop_pre_header
    _
  $region3: #{batch_norm_rnn.2} parent=0 // loop_header
    %s9 = sphi 0, %s13
    %p10 = scmp.ge.s32.totalorder %s9, 4
    %s19 = sphi 0, %s21
    %s22 = sphi 0, %s19
    %s23 = sphi 0, %s22
    %s39 = sphi 0, %s23
    %s45 = sphi 0, %s47
    %s48 = sphi 0, %s45
    %s49 = sphi 0, %s48
    %s65 = sphi 0, %s49
    %s71 = sphi 0, %s73
    %s74 = sphi 0, %s71
    %s75 = sphi 0, %s74
    %s91 = sphi 0, %s75
  $region4: #{batch_norm_rnn.2} parent=0 // loop_header_branch
    %12 = sbr.rel (%p10) target = $region8
  $region5: #{batch_norm_rnn.2} parent=0 // loop_body
    %s14 = ssub.s32 %s9, 1
    %s15 = ssub.s32 %s9, 2
    %s16 = sadd.s32 %s9, 1
    %s17 = ssub.s32 %s9, %s16
    %p18 = scmp.eq.s32.totalorder %s17, 0
    %s20 = sadd.s32 %s19, 1
    %s21 = scalar_select %p18, %s19, %s20
    %p24 = pneg %p18
    %p25 = scmp.eq.s32.totalorder %s9, 1
    %p26 = por %p24, %p25
    %p27 = scmp.ne.s32.totalorder %s19, %s22
    %p28 = scmp.eq.s32.totalorder %s9, 0
    %p29 = por %p27, %p28
    %p30 = scmp.ne.s32.totalorder %s19, %s22
    %p31 = scmp.eq.s32.totalorder %s14, 1
    %p32 = por %p30, %p31
    %p33 = scmp.ne.s32.totalorder %s22, %s23
    %p34 = scmp.eq.s32.totalorder %s14, 0
    %p35 = por %p33, %p34
    %p36 = scmp.ne.s32.totalorder %s22, %s23
    %p37 = scmp.eq.s32.totalorder %s15, 1
    %p38 = por %p36, %p37
    %p40 = scmp.ne.s32.totalorder %s23, %s39
    %p41 = scmp.eq.s32.totalorder %s15, 0
    %p42 = por %p40, %p41
    %s43 = ssub.s32 %s9, %s16
    %p44 = scmp.eq.s32.totalorder %s43, 0
    %s46 = sadd.s32 %s45, 1
    %s47 = scalar_select %p44, %s45, %s46
    %p50 = pneg %p44
    %p51 = scmp.eq.s32.totalorder %s9, 1
    %p52 = por %p50, %p51
    %p53 = scmp.ne.s32.totalorder %s45, %s48
    %p54 = scmp.eq.s32.totalorder %s9, 0
    %p55 = por %p53, %p54
    %p56 = scmp.ne.s32.totalorder %s45, %s48
    %p57 = scmp.eq.s32.totalorder %s14, 1
    %p58 = por %p56, %p57
    %p59 = scmp.ne.s32.totalorder %s48, %s49
    %p60 = scmp.eq.s32.totalorder %s14, 0
    %p61 = por %p59, %p60
    %p62 = scmp.ne.s32.totalorder %s48, %s49
    %p63 = scmp.eq.s32.totalorder %s15, 1
    %p64 = por %p62, %p63
    %p66 = scmp.ne.s32.totalorder %s49, %s65
    %p67 = scmp.eq.s32.totalorder %s15, 0
    %p68 = por %p66, %p67
    %s69 = ssub.s32 %s9, %s16
    %p70 = scmp.eq.s32.totalorder %s69, 0
    %s72 = sadd.s32 %s71, 1
    %s73 = scalar_select %p70, %s71, %s72
    %p76 = pneg %p70
    %p77 = scmp.eq.s32.totalorder %s9, 1
    %p78 = por %p76, %p77
    %p79 = scmp.ne.s32.totalorder %s71, %s74
    %p80 = scmp.eq.s32.totalorder %s9, 0
    %p81 = por %p79, %p80
    %p82 = scmp.ne.s32.totalorder %s71, %s74
    %p83 = scmp.eq.s32.totalorder %s14, 1
    %p84 = por %p82, %p83
    %p85 = scmp.ne.s32.totalorder %s74, %s75
    %p86 = scmp.eq.s32.totalorder %s14, 0
    %p87 = por %p85, %p86
    %p88 = scmp.ne.s32.totalorder %s74, %s75
    %p89 = scmp.eq.s32.totalorder %s15, 1
    %p90 = por %p88, %p89
    %p92 = scmp.ne.s32.totalorder %s75, %s91
    %p93 = scmp.eq.s32.totalorder %s15, 0
    %p94 = por %p92, %p93
    %p95 = scmp.le.s32.totalorder 1, %s9
    %p96 = scmp.lt.s32.totalorder %s9, 3
    %p97 = pnand %p95, %p96
    %p98 = pneg %p97
    // Predicated region
    $region9: #{batch_norm_rnn.2} parent=5 // pred_check
      _
    $region10: #{batch_norm_rnn.2} parent=5 // pred_check_branch
      %100 = sbr.rel (%p97) target = $region12
    $region11: #{batch_norm_rnn.2} parent=5 // pred_region
      %s101 = ssub.s32 %s9, 1
    $region12: #{batch_norm_rnn.2} parent=5 // pred_fallthru
      _
    %p102 = scmp.lt.s32.totalorder %s9, 2
    // Predicated region
    $region13: #{batch_norm_rnn.2} parent=5 // pred_check
      %p103 = pneg %p102
    $region14: #{batch_norm_rnn.2} parent=5 // pred_check_branch
      %105 = sbr.rel (%p103) target = $region16
    $region15: #{batch_norm_rnn.2} parent=5 // pred_region
      // Predicated region
      $region17: #{batch_norm_rnn.2} parent=15 // pred_check
        %p106 = pneg %p29
      $region18: #{batch_norm_rnn.2} parent=15 // pred_check_branch
        %108 = sbr.rel (%p106) target = $region20
      $region19: #{batch_norm_rnn.2} parent=15 // pred_region
        %s109 = smul.u32 8, %s9
        %p110 = scmp.lt.s32.totalorder %s109, 15
        %s111 = scalar_select %p110, %s109, 15
        %s112 = smul.addr %s111, 8
        %s113 = scalar_lea.vmem %s0, %s112
        %s114 = smul.u32 8, %s9
      $region20: #{batch_norm_rnn.2} parent=15 // pred_fallthru
        _
    $region16: #{batch_norm_rnn.2} parent=5 // pred_fallthru
      _
    %p115 = scmp.le.s32.totalorder 1, %s9
    %p116 = scmp.lt.s32.totalorder %s9, 3
    %p117 = pnand %p115, %p116
    %p118 = pneg %p117
    // Predicated region
    $region21: #{batch_norm_rnn.2} parent=5 // pred_check
      _
    $region22: #{batch_norm_rnn.2} parent=5 // pred_check_branch
      %120 = sbr.rel (%p117) target = $region24
    $region23: #{batch_norm_rnn.2} parent=5 // pred_region
      %s121 = ssub.s32 %s9, 1
      %s122 = smul.u32 8, %s14
      %p123 = scmp.lt.s32.totalorder %s122, 15
      %s124 = scalar_select %p123, %s122, 15
      %s125 = smul.addr %s124, 8
      %s126 = scalar_lea.vmem %s0, %s125
      %p127 = pneg %p35
      %p128 = pneg %p32
      %p129 = pneg %p61
      %p130 = pneg %p58
      %p131 = scmp.lt.s32.totalorder %s14, 1
      %s132 = scalar_select %p131, %s14, 1
      %s133 = smul.addr %s132, 8
      %s134 = scalar_lea.vmem %s1, %s133
      %p135 = pneg %p87
      %p136 = pneg %p84
      %p137 = scmp.lt.s32.totalorder %s14, 1
      %s138 = scalar_select %p137, %s14, 1
      %s139 = smul.addr %s138, 8
      %s140 = scalar_lea.vmem %s2, %s139
      %s141 = smul.u32 8, %s14
      %p142 = scmp.lt.s32.totalorder %s141, 15
      %s143 = scalar_select %p142, %s141, 15
      %s144 = smul.addr %s143, 8
      %s145 = scalar_lea.vmem %s0, %s144
      %s146 = smul.u32 8, %s14
      %p147 = scmp.lt.s32.totalorder %s14, 1
      %s148 = scalar_select %p147, %s14, 1
      %s149 = smul.addr %s148, 8
      %s150 = scalar_lea.vmem %s1, %s149
      %p151 = scmp.lt.s32.totalorder %s14, 1
      %s152 = scalar_select %p151, %s14, 1
      %s153 = smul.addr %s152, 8
      %s154 = scalar_lea.vmem %s2, %s153
      %v155 = vld [vmem:[%s145] sm:$0xff]
      %v156 = vld [vmem:[%s145 + $0x8] sm:$0xff]
      %v157 = vld [vmem:[%s145 + $0x10] sm:$0xff]
      %v158 = vld [vmem:[%s145 + $0x18] sm:$0xff]
      %v159 = vld [vmem:[%s145 + $0x20] sm:$0xff]
      %v160 = vld [vmem:[%s145 + $0x28] sm:$0xff]
      %v161 = vld [vmem:[%s145 + $0x30] sm:$0xff]
      %v162 = vld [vmem:[%s145 + $0x38] sm:$0xff]
      %v163 = vadd.f32 %v155, %v156
      %v164 = vadd.f32 %v163, %v157
      %v165 = vadd.f32 %v164, %v158
      %v166 = vadd.f32 %v165, %v159
      %v167 = vadd.f32 %v166, %v160
      %v168 = vadd.f32 %v167, %v161
      %v169 = vadd.f32 %v168, %v162
      %170 = vst [vmem:[%s150] sm:$0xff] %v169
      %v171 = vmul.f32 %v155, %v155
      %v172 = vmul.f32 %v156, %v156
      %v173 = vmul.f32 %v157, %v157
      %v174 = vmul.f32 %v158, %v158
      %v175 = vmul.f32 %v159, %v159
      %v176 = vmul.f32 %v160, %v160
      %v177 = vmul.f32 %v161, %v161
      %v178 = vmul.f32 %v162, %v162
      %v179 = vadd.f32 %v171, %v172
      %v180 = vadd.f32 %v179, %v173
      %v181 = vadd.f32 %v180, %v174
      %v182 = vadd.f32 %v181, %v175
      %v183 = vadd.f32 %v182, %v176
      %v184 = vadd.f32 %v183, %v177
      %v185 = vadd.f32 %v184, %v178
      %186 = vst [vmem:[%s154] sm:$0xff] %v185
      %p187 = scmp.lt.s32.totalorder %s14, 1
      %s188 = scalar_select %p187, %s14, 1
      %s189 = smul.addr %s188, 8
      %s190 = scalar_lea.vmem %s1, %s189
      %p191 = scmp.lt.s32.totalorder %s14, 1
      %s192 = scalar_select %p191, %s14, 1
      %s193 = smul.addr %s192, 8
      %s194 = scalar_lea.vmem %s2, %s193
      // Predicated region
      $region25: #{batch_norm_rnn.2} parent=23 // pred_check
        %p195 = pneg %p58
      $region26: #{batch_norm_rnn.2} parent=23 // pred_check_branch
        %197 = sbr.rel (%p195) target = $region28
      $region27: #{batch_norm_rnn.2} parent=23 // pred_region
        _
      $region28: #{batch_norm_rnn.2} parent=23 // pred_fallthru
        _
      // Predicated region
      $region29: #{batch_norm_rnn.2} parent=23 // pred_check
        %p198 = pneg %p84
      $region30: #{batch_norm_rnn.2} parent=23 // pred_check_branch
        %200 = sbr.rel (%p198) target = $region32
      $region31: #{batch_norm_rnn.2} parent=23 // pred_region
        _
      $region32: #{batch_norm_rnn.2} parent=23 // pred_fallthru
        _
    $region24: #{batch_norm_rnn.2} parent=5 // pred_fallthru
      _
    %p201 = scmp.le.s32.totalorder 2, %s9
    // Predicated region
    $region33: #{batch_norm_rnn.2} parent=5 // pred_check
      %p202 = pneg %p201
    $region34: #{batch_norm_rnn.2} parent=5 // pred_check_branch
      %204 = sbr.rel (%p202) target = $region36
    $region35: #{batch_norm_rnn.2} parent=5 // pred_region
      %s205 = ssub.s32 %s9, 2
      // Predicated region
      $region37: #{batch_norm_rnn.2} parent=35 // pred_check
        %p206 = pneg %p64
      $region38: #{batch_norm_rnn.2} parent=35 // pred_check_branch
        %208 = sbr.rel (%p206) target = $region40
      $region39: #{batch_norm_rnn.2} parent=35 // pred_region
        %p209 = scmp.lt.s32.totalorder %s15, 1
        %s210 = scalar_select %p209, %s15, 1
        %s211 = smul.addr %s210, 8
        %s212 = scalar_lea.vmem %s1, %s211
      $region40: #{batch_norm_rnn.2} parent=35 // pred_fallthru
        _
      // Predicated region
      $region41: #{batch_norm_rnn.2} parent=35 // pred_check
        %p213 = pneg %p90
      $region42: #{batch_norm_rnn.2} parent=35 // pred_check_branch
        %215 = sbr.rel (%p213) target = $region44
      $region43: #{batch_norm_rnn.2} parent=35 // pred_region
        %p216 = scmp.lt.s32.totalorder %s15, 1
        %s217 = scalar_select %p216, %s15, 1
        %s218 = smul.addr %s217, 8
        %s219 = scalar_lea.vmem %s2, %s218
      $region44: #{batch_norm_rnn.2} parent=35 // pred_fallthru
        _
    $region36: #{batch_norm_rnn.2} parent=5 // pred_fallthru
      _
  $region6: #{batch_norm_rnn.2} parent=0 // loop_footer
    %s13 = sadd.s32 1, %s9
  $region7: #{batch_norm_rnn.2} parent=0 // loop_footer_branch
    %8 = sbr.rel target = $region3
  $region8: #{batch_norm_rnn.2} parent=0 // loop_exit
    _

// kernel: batch_norm_rnn.3
$region0: #{batch_norm_rnn.3}
  #allocation0 [shape = 'u32[]', space=smem, size = 0x4, offset = 0x4, fixed_abs, tag = 'smem constant byte address 0x4 - core index']
  #allocation1 [shape = 'u32[144,128]{1,0:T(1,128)}', space=vmem, size = 0x12000, scoped, tag = 'internal scratch']
  #allocation2 [shape = 'f32[8,128]{1,0:T(8,128)}', space=vmem, size = 0x1000, scoped, tag = 'scratch operand']
  %s0 = inlined_call_operand.vmem [shape: f32[8,16,128], index: 0, kind: input, shape index: {}]
  %s1 = inlined_call_operand.vmem [shape: f32[128,384], index: 1, kind: input, shape index: {}]
  %s2 = inlined_call_operand.vmem [shape: f32[128,384], index: 2, kind: input, shape index: {}]
  %s3 = inlined_call_operand.vmem [shape: f32[1,384], index: 3, kind: input, shape index: {}]
  %s4 = inlined_call_operand.vmem [shape: f32[1,128], index: 4, kind: input, shape index: {}]
  %s5 = inlined_call_operand.vmem [shape: f32[8,16,128], index: 5, kind: output, shape index: {}]
  %s6 = sld [smem:[#allocation0]]
  $region129: #{batch_norm_rnn.3} parent=0
    _
  %s8 = ssub.s32 1, %s6
  %s9 = scalar_select 0, %s8, %s6
  $region1: #{batch_norm_rnn.3} parent=0
    #allocation3 [shape = 'u8[65536]{0}', space=vmem, size = 0x10000, scoped, tag = 'input window, operand 0']
    #allocation4 [shape = 'u8[65536]{0}', space=vmem, size = 0x10000, scoped, tag = 'output window, operand 0']
    loop: start=0, step=1, limit=4
    $region2: #{batch_norm_rnn.3} parent=1 // loop_pre_header
      _
    $region3: #{batch_norm_rnn.3} parent=1 // loop_header
      %s11 = sphi 0, %s15
      %p12 = scmp.ge.s32.totalorder %s11, 4
      %s18 = sphi 0, %s30
      %s19 = sphi 0, %s26
      %s20 = sphi 0, %s18
      %s21 = sphi 0, %s19
      %s22 = sphi 0, %s20
      %s23 = sphi 0, %s21
      %s35 = sphi 0, %s37
      %s38 = sphi 0, %s35
      %s39 = sphi 0, %s38
      %s55 = sphi 0, %s39
      %s59 = sphi 0, %s59
      %s61 = sphi 0, %s59
      %s62 = sphi 0, %s61
      %s76 = sphi 0, %s62
      %s80 = sphi 0, %s80
      %s82 = sphi 0, %s80
      %s83 = sphi 0, %s82
      %s97 = sphi 0, %s83
      %s101 = sphi 0, %s101
      %s103 = sphi 0, %s101
      %s104 = sphi 0, %s103
      %s118 = sphi 0, %s104
      %s122 = sphi 0, %s122
      %s124 = sphi 0, %s122
      %s125 = sphi 0, %s124
      %s139 = sphi 0, %s125
      %s147 = sphi 0, %s149
      %s150 = sphi 0, %s147
      %s151 = sphi 0, %s150
      %s167 = sphi 0, %s151
    $region4: #{batch_norm_rnn.3} parent=1 // loop_header_branch
      %14 = sbr.rel (%p12) target = $region8
    $region5: #{batch_norm_rnn.3} parent=1 // loop_body
      %s16 = ssub.s32 %s11, 1
      %s17 = ssub.s32 %s11, 2
      %s24 = sadd.s32 1, %s19
      %p25 = scmp.ge.s32.totalorder %s24, 2
      %s26 = scalar_select %p25, 0, %s24
      %s27 = sadd.s32 1, %s18
      %s28 = scalar_select %p25, %s27, %s18
      %p29 = scmp.ge.s32.totalorder %s28, 1
      %s30 = scalar_select %p29, 0, %s28
      %s31 = ssub.s32 %s18, %s30
      %s32 = ssub.s32 %s19, %s26
      %s33 = sor.u32 %s31, %s32
      %p34 = scmp.eq.s32.totalorder %s33, 0
      %s36 = sadd.s32 %s35, 1
      %s37 = scalar_select %p34, %s35, %s36
      %p40 = pneg %p34
      %p41 = scmp.eq.s32.totalorder %s11, 1
      %p42 = por %p40, %p41
      %p43 = scmp.ne.s32.totalorder %s35, %s38
      %p44 = scmp.eq.s32.totalorder %s11, 0
      %p45 = por %p43, %p44
      %p46 = scmp.ne.s32.totalorder %s35, %s38
      %p47 = scmp.eq.s32.totalorder %s16, 1
      %p48 = por %p46, %p47
      %p49 = scmp.ne.s32.totalorder %s38, %s39
      %p50 = scmp.eq.s32.totalorder %s16, 0
      %p51 = por %p49, %p50
      %p52 = scmp.ne.s32.totalorder %s38, %s39
      %p53 = scmp.eq.s32.totalorder %s17, 1
      %p54 = por %p52, %p53
      %p56 = scmp.ne.s32.totalorder %s39, %s55
      %p57 = scmp.eq.s32.totalorder %s17, 0
      %p58 = por %p56, %p57
      %s60 = sadd.s32 %s59, 1
      %p63 = scmp.eq.s32.totalorder %s11, 1
      %p64 = scmp.ne.s32.totalorder %s59, %s61
      %p65 = scmp.eq.s32.totalorder %s11, 0
      %p66 = por %p64, %p65
      %p67 = scmp.ne.s32.totalorder %s59, %s61
      %p68 = scmp.eq.s32.totalorder %s16, 1
      %p69 = por %p67, %p68
      %p70 = scmp.ne.s32.totalorder %s61, %s62
      %p71 = scmp.eq.s32.totalorder %s16, 0
      %p72 = por %p70, %p71
      %p73 = scmp.ne.s32.totalorder %s61, %s62
      %p74 = scmp.eq.s32.totalorder %s17, 1
      %p75 = por %p73, %p74
      %p77 = scmp.ne.s32.totalorder %s62, %s76
      %p78 = scmp.eq.s32.totalorder %s17, 0
      %p79 = por %p77, %p78
      %s81 = sadd.s32 %s80, 1
      %p84 = scmp.eq.s32.totalorder %s11, 1
      %p85 = scmp.ne.s32.totalorder %s80, %s82
      %p86 = scmp.eq.s32.totalorder %s11, 0
      %p87 = por %p85, %p86
      %p88 = scmp.ne.s32.totalorder %s80, %s82
      %p89 = scmp.eq.s32.totalorder %s16, 1
      %p90 = por %p88, %p89
      %p91 = scmp.ne.s32.totalorder %s82, %s83
      %p92 = scmp.eq.s32.totalorder %s16, 0
      %p93 = por %p91, %p92
      %p94 = scmp.ne.s32.totalorder %s82, %s83
      %p95 = scmp.eq.s32.totalorder %s17, 1
      %p96 = por %p94, %p95
      %p98 = scmp.ne.s32.totalorder %s83, %s97
      %p99 = scmp.eq.s32.totalorder %s17, 0
      %p100 = por %p98, %p99
      %s102 = sadd.s32 %s101, 1
      %p105 = scmp.eq.s32.totalorder %s11, 1
      %p106 = scmp.ne.s32.totalorder %s101, %s103
      %p107 = scmp.eq.s32.totalorder %s11, 0
      %p108 = por %p106, %p107
      %p109 = scmp.ne.s32.totalorder %s101, %s103
      %p110 = scmp.eq.s32.totalorder %s16, 1
      %p111 = por %p109, %p110
      %p112 = scmp.ne.s32.totalorder %s103, %s104
      %p113 = scmp.eq.s32.totalorder %s16, 0
      %p114 = por %p112, %p113
      %p115 = scmp.ne.s32.totalorder %s103, %s104
      %p116 = scmp.eq.s32.totalorder %s17, 1
      %p117 = por %p115, %p116
      %p119 = scmp.ne.s32.totalorder %s104, %s118
      %p120 = scmp.eq.s32.totalorder %s17, 0
      %p121 = por %p119, %p120
      %s123 = sadd.s32 %s122, 1
      %p126 = scmp.eq.s32.totalorder %s11, 1
      %p127 = scmp.ne.s32.totalorder %s122, %s124
      %p128 = scmp.eq.s32.totalorder %s11, 0
      %p129 = por %p127, %p128
      %p130 = scmp.ne.s32.totalorder %s122, %s124
      %p131 = scmp.eq.s32.totalorder %s16, 1
      %p132 = por %p130, %p131
      %p133 = scmp.ne.s32.totalorder %s124, %s125
      %p134 = scmp.eq.s32.totalorder %s16, 0
      %p135 = por %p133, %p134
      %p136 = scmp.ne.s32.totalorder %s124, %s125
      %p137 = scmp.eq.s32.totalorder %s17, 1
      %p138 = por %p136, %p137
      %p140 = scmp.ne.s32.totalorder %s125, %s139
      %p141 = scmp.eq.s32.totalorder %s17, 0
      %p142 = por %p140, %p141
      %s143 = ssub.s32 %s18, %s30
      %s144 = ssub.s32 %s19, %s26
      %s145 = sor.u32 %s143, %s144
      %p146 = scmp.eq.s32.totalorder %s145, 0
      %s148 = sadd.s32 %s147, 1
      %s149 = scalar_select %p146, %s147, %s148
      %p152 = pneg %p146
      %p153 = scmp.eq.s32.totalorder %s11, 1
      %p154 = por %p152, %p153
      %p155 = scmp.ne.s32.totalorder %s147, %s150
      %p156 = scmp.eq.s32.totalorder %s11, 0
      %p157 = por %p155, %p156
      %p158 = scmp.ne.s32.totalorder %s147, %s150
      %p159 = scmp.eq.s32.totalorder %s16, 1
      %p160 = por %p158, %p159
      %p161 = scmp.ne.s32.totalorder %s150, %s151
      %p162 = scmp.eq.s32.totalorder %s16, 0
      %p163 = por %p161, %p162
      %p164 = scmp.ne.s32.totalorder %s150, %s151
      %p165 = scmp.eq.s32.totalorder %s17, 1
      %p166 = por %p164, %p165
      %p168 = scmp.ne.s32.totalorder %s151, %s167
      %p169 = scmp.eq.s32.totalorder %s17, 0
      %p170 = por %p168, %p169
      %p171 = scmp.le.s32.totalorder 1, %s11
      %p172 = scmp.lt.s32.totalorder %s11, 3
      %p173 = pnand %p171, %p172
      %p174 = pneg %p173
      // Predicated region
      $region9: #{batch_norm_rnn.3} parent=5 // pred_check
        _
      $region10: #{batch_norm_rnn.3} parent=5 // pred_check_branch
        %176 = sbr.rel (%p173) target = $region12
      $region11: #{batch_norm_rnn.3} parent=5 // pred_region
        %s177 = ssub.s32 %s11, 1
        // Predicated region
        $region13: #{batch_norm_rnn.3} parent=11 // pred_check
          %p178 = pneg %p72
        $region14: #{batch_norm_rnn.3} parent=11 // pred_check_branch
          %180 = sbr.rel (%p178) target = $region16
        $region15: #{batch_norm_rnn.3} parent=11 // pred_region
          _
        $region16: #{batch_norm_rnn.3} parent=11 // pred_fallthru
          _
        // Predicated region
        $region17: #{batch_norm_rnn.3} parent=11 // pred_check
          %p181 = pneg %p93
        $region18: #{batch_norm_rnn.3} parent=11 // pred_check_branch
          %183 = sbr.rel (%p181) target = $region20
        $region19: #{batch_norm_rnn.3} parent=11 // pred_region
          _
        $region20: #{batch_norm_rnn.3} parent=11 // pred_fallthru
          _
        // Predicated region
        $region21: #{batch_norm_rnn.3} parent=11 // pred_check
          %p184 = pneg %p114
        $region22: #{batch_norm_rnn.3} parent=11 // pred_check_branch
          %186 = sbr.rel (%p184) target = $region24
        $region23: #{batch_norm_rnn.3} parent=11 // pred_region
          _
        $region24: #{batch_norm_rnn.3} parent=11 // pred_fallthru
          _
        // Predicated region
        $region25: #{batch_norm_rnn.3} parent=11 // pred_check
          %p187 = pneg %p135
        $region26: #{batch_norm_rnn.3} parent=11 // pred_check_branch
          %189 = sbr.rel (%p187) target = $region28
        $region27: #{batch_norm_rnn.3} parent=11 // pred_region
          _
        $region28: #{batch_norm_rnn.3} parent=11 // pred_fallthru
          _
      $region12: #{batch_norm_rnn.3} parent=5 // pred_fallthru
        _
      %p190 = scmp.lt.s32.totalorder %s11, 2
      // Predicated region
      $region29: #{batch_norm_rnn.3} parent=5 // pred_check
        %p191 = pneg %p190
      $region30: #{batch_norm_rnn.3} parent=5 // pred_check_branch
        %193 = sbr.rel (%p191) target = $region32
      $region31: #{batch_norm_rnn.3} parent=5 // pred_region
        // Predicated region
        $region33: #{batch_norm_rnn.3} parent=31 // pred_check
          %p194 = pneg %p45
        $region34: #{batch_norm_rnn.3} parent=31 // pred_check_branch
          %196 = sbr.rel (%p194) target = $region36
        $region35: #{batch_norm_rnn.3} parent=31 // pred_region
          %s197 = sand.u32 %s35, 1
          %s198 = sand.u32 %s35, 1
          %s199 = smul.addr %s198, 64
          %s200 = scalar_lea.vmem [#allocation3], %s199
          %s201 = smul.u32 8, %s18
          %s202 = smul.addr %s201, 2
          %s203 = sadd.s32 %s19, %s202
          %s204 = smul.addr %s203, 8
          %s205 = scalar_lea.vmem %s0, %s204
          // Predicated region
          $region37: #{batch_norm_rnn.3} parent=35 // pred_check
            _
          $region38: #{batch_norm_rnn.3} parent=35 // pred_check_branch
            %207 = sbr.rel (0) target = $region40
          $region39: #{batch_norm_rnn.3} parent=35 // pred_region
            // Predicated region
            $region41: #{batch_norm_rnn.3} parent=39 // pred_check
              _
            $region42: #{batch_norm_rnn.3} parent=39 // pred_check_branch
              %209 = sbr.rel (0) target = $region44
            $region43: #{batch_norm_rnn.3} parent=39 // pred_region
              // Predicated region
              $region56: #{batch_norm_rnn.3} parent=43 // pred_check
                _
              $region57: #{batch_norm_rnn.3} parent=43 // pred_check_branch
                %238 = sbr.rel (0) target = $region59
              $region58: #{batch_norm_rnn.3} parent=43 // pred_region
                loop: start=0, step=1, limit=1
                $region60: #{batch_norm_rnn.3} parent=58 // loop_pre_header
                  _
                $region61: #{batch_norm_rnn.3} parent=58 // loop_header
                  %s240 = sphi 0, %s244
                  %p241 = scmp.ge.s32.totalorder %s240, 1
                  %s245 = sphi %s205, %s205
                  %s246 = sphi %s200, %s200
                $region62: #{batch_norm_rnn.3} parent=58 // loop_header_branch
                  %243 = sbr.rel (%p241) target = $region66
                $region63: #{batch_norm_rnn.3} parent=58 // loop_body
                  %v247 = vld [vmem:[%s245] sm:$0xff]
                  %248 = vst [vmem:[%s246] sm:$0xff] %v247
                  %v249 = vld [vmem:[%s245 + $0x10] sm:$0xff]
                  %250 = vst [vmem:[%s246 + $0x8] sm:$0xff] %v249
                  %v251 = vld [vmem:[%s245 + $0x20] sm:$0xff]
                  %252 = vst [vmem:[%s246 + $0x10] sm:$0xff] %v251
                  %v253 = vld [vmem:[%s245 + $0x30] sm:$0xff]
                  %254 = vst [vmem:[%s246 + $0x18] sm:$0xff] %v253
                  %v255 = vld [vmem:[%s245 + $0x40] sm:$0xff]
                  %256 = vst [vmem:[%s246 + $0x20] sm:$0xff] %v255
                  %v257 = vld [vmem:[%s245 + $0x50] sm:$0xff]
                  %258 = vst [vmem:[%s246 + $0x28] sm:$0xff] %v257
                  %v259 = vld [vmem:[%s245 + $0x60] sm:$0xff]
                  %260 = vst [vmem:[%s246 + $0x30] sm:$0xff] %v259
                  %v261 = vld [vmem:[%s245 + $0x70] sm:$0xff]
                  %262 = vst [vmem:[%s246 + $0x38] sm:$0xff] %v261
                $region64: #{batch_norm_rnn.3} parent=58 // loop_footer
                  %s244 = sadd.s32 1, %s240
                $region65: #{batch_norm_rnn.3} parent=58 // loop_footer_branch
                  %239 = sbr.rel target = $region61
                $region66: #{batch_norm_rnn.3} parent=58 // loop_exit
                  _
              $region59: #{batch_norm_rnn.3} parent=43 // pred_fallthru
                _
              // Predicated region
              $region67: #{batch_norm_rnn.3} parent=43 // pred_check
                _
              $region68: #{batch_norm_rnn.3} parent=43 // pred_check_branch
                %264 = sbr.rel target = $region70
              $region69: #{batch_norm_rnn.3} parent=43 // pred_region
                _
              $region70: #{batch_norm_rnn.3} parent=43 // pred_fallthru
                _
            $region44: #{batch_norm_rnn.3} parent=39 // pred_fallthru
              _
            // Predicated region
            $region45: #{batch_norm_rnn.3} parent=39 // pred_check
              _
            $region46: #{batch_norm_rnn.3} parent=39 // pred_check_branch
              %211 = sbr.rel target = $region48
            $region47: #{batch_norm_rnn.3} parent=39 // pred_region
              loop: start=0, step=1, limit=1
              $region49: #{batch_norm_rnn.3} parent=47 // loop_pre_header
                _
              $region50: #{batch_norm_rnn.3} parent=47 // loop_header
                %s214 = sphi 0, %s218
                %p215 = scmp.ge.s32.totalorder %s214, 1
                %s219 = sphi %s205, %s205
                %s220 = sphi %s200, %s200
              $region51: #{batch_norm_rnn.3} parent=47 // loop_header_branch
                %217 = sbr.rel (%p215) target = $region55
              $region52: #{batch_norm_rnn.3} parent=47 // loop_body
                %v221 = vld [vmem:[%s219] sm:$0xff]
                %222 = vst [vmem:[%s220] sm:$0xff] %v221
                %v223 = vld [vmem:[%s219 + $0x10] sm:$0xff]
                %224 = vst [vmem:[%s220 + $0x8] sm:$0xff] %v223
                %v225 = vld [vmem:[%s219 + $0x20] sm:$0xff]
                %226 = vst [vmem:[%s220 + $0x10] sm:$0xff] %v225
                %v227 = vld [vmem:[%s219 + $0x30] sm:$0xff]
                %228 = vst [vmem:[%s220 + $0x18] sm:$0xff] %v227
                %v229 = vld [vmem:[%s219 + $0x40] sm:$0xff]
                %230 = vst [vmem:[%s220 + $0x20] sm:$0xff] %v229
                %v231 = vld [vmem:[%s219 + $0x50] sm:$0xff]
                %232 = vst [vmem:[%s220 + $0x28] sm:$0xff] %v231
                %v233 = vld [vmem:[%s219 + $0x60] sm:$0xff]
                %234 = vst [vmem:[%s220 + $0x30] sm:$0xff] %v233
                %v235 = vld [vmem:[%s219 + $0x70] sm:$0xff]
                %236 = vst [vmem:[%s220 + $0x38] sm:$0xff] %v235
              $region53: #{batch_norm_rnn.3} parent=47 // loop_footer
                %s218 = sadd.s32 1, %s214
              $region54: #{batch_norm_rnn.3} parent=47 // loop_footer_branch
                %213 = sbr.rel target = $region50
              $region55: #{batch_norm_rnn.3} parent=47 // loop_exit
                _
            $region48: #{batch_norm_rnn.3} parent=39 // pred_fallthru
              _
          $region40: #{batch_norm_rnn.3} parent=35 // pred_fallthru
            _
          %265 = vnop
        $region36: #{batch_norm_rnn.3} parent=31 // pred_fallthru
          _
      $region32: #{batch_norm_rnn.3} parent=5 // pred_fallthru
        _
      %p266 = scmp.le.s32.totalorder 1, %s11
      %p267 = scmp.lt.s32.totalorder %s11, 3
      %p268 = pnand %p266, %p267
      %p269 = pneg %p268
      // Predicated region
      $region71: #{batch_norm_rnn.3} parent=5 // pred_check
        _
      $region72: #{batch_norm_rnn.3} parent=5 // pred_check_branch
        %271 = sbr.rel (%p268) target = $region74
      $region73: #{batch_norm_rnn.3} parent=5 // pred_region
        %s272 = ssub.s32 %s11, 1
        %s273 = sand.u32 %s38, 1
        %s274 = sand.u32 %s38, 1
        %s275 = smul.addr %s274, 64
        %s276 = scalar_lea.vmem [#allocation3], %s275
        // Predicated region
        $region75: #{batch_norm_rnn.3} parent=73 // pred_check
          %p277 = pneg %p51
        $region76: #{batch_norm_rnn.3} parent=73 // pred_check_branch
          %279 = sbr.rel (%p277) target = $region78
        $region77: #{batch_norm_rnn.3} parent=73 // pred_region
          _
        $region78: #{batch_norm_rnn.3} parent=73 // pred_fallthru
          _
        %s280 = sand.u32 %s38, 1
        %s281 = sand.u32 %s38, 1
        %s282 = smul.addr %s281, 64
        %s283 = scalar_lea.vmem [#allocation3], %s282
        %p284 = pneg %p51
        %p285 = pneg %p48
        %p286 = pneg %p72
        %p287 = pneg %p69
        %p288 = pneg %p93
        %p289 = pneg %p90
        %p290 = pneg %p114
        %p291 = pneg %p111
        %p292 = pneg %p135
        %p293 = pneg %p132
        %p294 = pneg %p163
        %p295 = pneg %p160
        %s296 = sand.u32 %s150, 1
        %s297 = sand.u32 %s150, 1
        %s298 = smul.addr %s297, 64
        %s299 = scalar_lea.vmem [#allocation4], %s298
        %s300 = smul.u32 8, %s20
        %s301 = smul.u32 8, %s20
        %p302 = scmp.eq.s32.totalorder %s21, 0
        // Predicated region
        $region79: #{batch_norm_rnn.3} parent=73 // pred_check
          %p303 = pneg %p302
        $region80: #{batch_norm_rnn.3} parent=73 // pred_check_branch
          %305 = sbr.rel (%p303) target = $region82
        $region81: #{batch_norm_rnn.3} parent=73 // pred_region
          %306 = vst [vmem:[#allocation2] sm:$0xff] 0.0
        $region82: #{batch_norm_rnn.3} parent=73 // pred_fallthru
          _
        %v307 = vld [vmem:[%s276] sm:$0xff]
        %v308 = vld [vmem:[%s276 + $0x8] sm:$0xff]
        %v309 = vld [vmem:[%s276 + $0x10] sm:$0xff]
        %v310 = vld [vmem:[%s276 + $0x18] sm:$0xff]
        %v311 = vld [vmem:[%s276 + $0x20] sm:$0xff]
        %v312 = vld [vmem:[%s276 + $0x28] sm:$0xff]
        %v313 = vld [vmem:[%s276 + $0x30] sm:$0xff]
        %v314 = vld [vmem:[%s276 + $0x38] sm:$0xff]
        %v315 = vld [vmem:[%s1] sm:$0xff]
        %v316 = vld [vmem:[%s1 + $0x8] sm:$0xff]
        %v317 = vld [vmem:[%s1 + $0x10] sm:$0xff]
        %v318 = vld [vmem:[%s1 + $0x18] sm:$0xff]
        %v319 = vld [vmem:[%s1 + $0x20] sm:$0xff]
        %v320 = vld [vmem:[%s1 + $0x28] sm:$0xff]
        %v321 = vld [vmem:[%s1 + $0x30] sm:$0xff]
        %v322 = vld [vmem:[%s1 + $0x38] sm:$0xff]
        %v323 = vld [vmem:[%s1 + $0x40] sm:$0xff]
        %v324 = vld [vmem:[%s1 + $0x48] sm:$0xff]
        %v325 = vld [vmem:[%s1 + $0x50] sm:$0xff]
        %v326 = vld [vmem:[%s1 + $0x58] sm:$0xff]
        %v327 = vld [vmem:[%s1 + $0x60] sm:$0xff]
        %v328 = vld [vmem:[%s1 + $0x68] sm:$0xff]
        %v329 = vld [vmem:[%s1 + $0x70] sm:$0xff]
        %v330 = vld [vmem:[%s1 + $0x78] sm:$0xff]
        %v331 = vld [vmem:[%s1 + $0x80] sm:$0xff]
        %v332 = vld [vmem:[%s1 + $0x88] sm:$0xff]
        %v333 = vld [vmem:[%s1 + $0x90] sm:$0xff]
        %v334 = vld [vmem:[%s1 + $0x98] sm:$0xff]
        %v335 = vld [vmem:[%s1 + $0xa0] sm:$0xff]
        %v336 = vld [vmem:[%s1 + $0xa8] sm:$0xff]
        %v337 = vld [vmem:[%s1 + $0xb0] sm:$0xff]
        %v338 = vld [vmem:[%s1 + $0xb8] sm:$0xff]
        %v339 = vld [vmem:[%s1 + $0xc0] sm:$0xff]
        %v340 = vld [vmem:[%s1 + $0xc8] sm:$0xff]
        %v341 = vld [vmem:[%s1 + $0xd0] sm:$0xff]
        %v342 = vld [vmem:[%s1 + $0xd8] sm:$0xff]
        %v343 = vld [vmem:[%s1 + $0xe0] sm:$0xff]
        %v344 = vld [vmem:[%s1 + $0xe8] sm:$0xff]
        %v345 = vld [vmem:[%s1 + $0xf0] sm:$0xff]
        %v346 = vld [vmem:[%s1 + $0xf8] sm:$0xff]
        %v347 = vld [vmem:[%s1 + $0x100] sm:$0xff]
        %v348 = vld [vmem:[%s1 + $0x108] sm:$0xff]
        %v349 = vld [vmem:[%s1 + $0x110] sm:$0xff]
        %v350 = vld [vmem:[%s1 + $0x118] sm:$0xff]
        %v351 = vld [vmem:[%s1 + $0x120] sm:$0xff]
        %v352 = vld [vmem:[%s1 + $0x128] sm:$0xff]
        %v353 = vld [vmem:[%s1 + $0x130] sm:$0xff]
        %v354 = vld [vmem:[%s1 + $0x138] sm:$0xff]
        %v355 = vld [vmem:[%s1 + $0x140] sm:$0xff]
        %v356 = vld [vmem:[%s1 + $0x148] sm:$0xff]
        %v357 = vld [vmem:[%s1 + $0x150] sm:$0xff]
        %v358 = vld [vmem:[%s1 + $0x158] sm:$0xff]
        %v359 = vld [vmem:[%s1 + $0x160] sm:$0xff]
        %v360 = vld [vmem:[%s1 + $0x168] sm:$0xff]
        %v361 = vld [vmem:[%s1 + $0x170] sm:$0xff]
        %v362 = vld [vmem:[%s1 + $0x178] sm:$0xff]
        %v363 = vld [vmem:[%s3] sm:$0x7]
        %v365 = vlaneseq
        %v366 = vshrl.u32 %v365, 7
        %v367 = vsub.s32 0, %v366
        %v368 = vrot.slane %v363, %v367
        %v369 = vlaneseq
        %v370 = vshrl.u32 %v369, 7
        %v371 = vsub.s32 1, %v370
        %v372 = vrot.slane %v363, %v371
        %v373 = vlaneseq
        %v374 = vshrl.u32 %v373, 7
        %v375 = vsub.s32 2, %v374
        %v376 = vrot.slane %v363, %v375
        %380 = vmatprep.subr.mxu0 %v316
        %381 = vmatpush1.msra.mxu0 %v315
        %382 = vmatprep.subr.mxu0 %v319
        %383 = vmatpush1.msra.mxu0 %v318
        %384 = vmatprep.subr.mxu0 %v322
        %385 = vmatpush1.msra.mxu0 %v321
        %386 = vmatprep.subr.mxu0 %v325
        %387 = vmatpush1.msra.mxu0 %v324
        %388 = vmatprep.subr.mxu0 %v328
        %389 = vmatpush1.msra.mxu0 %v327
        %390 = vmatprep.subr.mxu0 %v331
        %391 = vmatpush1.msra.mxu0 %v330
        %392 = vmatprep.subr.mxu0 %v334
        %393 = vmatpush1.msra.mxu0 %v333
        %394 = vmatprep.subr.mxu0 %v337
        %395 = vmatpush1.msra.mxu0 %v336
        %396 = vmatprep.subr.mxu0 %v340
        %397 = vmatpush1.msra.mxu0 %v339
        %398 = vmatprep.subr.mxu0 %v343
        %399 = vmatpush1.msra.mxu0 %v342
        %400 = vmatprep.subr.mxu0 %v346
        %401 = vmatpush1.msra.mxu0 %v345
        %402 = vmatprep.subr.mxu0 %v349
        %403 = vmatpush1.msra.mxu0 %v348
        %404 = vmatprep.subr.mxu0 %v352
        %405 = vmatpush1.msra.mxu0 %v351
        %406 = vmatprep.subr.mxu0 %v355
        %407 = vmatpush1.msra.mxu0 %v354
        %408 = vmatprep.subr.mxu0 %v358
        %409 = vmatpush1.msra.mxu0 %v357
        %410 = vmatprep.subr.mxu0 %v361
        %411 = vmatpush1.msra.mxu0 %v360
        %412 = vmatprep.subr.mxu0 0.0
        %413 = vmatpush1.msra.mxu0 0.0
        %414 = vmatprep.subr.mxu0 0.0
        %415 = vmatpush1.msra.mxu0 0.0
        %416 = vmatprep.subr.mxu0 0.0
        %417 = vmatpush1.msra.mxu0 0.0
        %418 = vmatprep.subr.mxu0 0.0
        %419 = vmatpush1.msra.mxu0 0.0
        %420 = vmatprep.subr.mxu0 0.0
        %421 = vmatpush1.msra.mxu0 0.0
        %422 = vmatprep.subr.mxu0 0.0
        %423 = vmatpush1.msra.mxu0 0.0
        %424 = vmatprep.subr.mxu0 0.0
        %425 = vmatpush1.msra.mxu0 0.0
        %426 = vmatprep.subr.mxu0 0.0
        %427 = vmatpush1.msra.mxu0 0.0
        %428 = vmatprep.subr.mxu0 0.0
        %429 = vmatpush1.msra.mxu0 0.0
        %430 = vmatprep.subr.mxu0 0.0
        %431 = vmatpush1.msra.mxu0 0.0
        %432 = vmatprep.subr.mxu0 0.0
        %433 = vmatpush1.msra.mxu0 0.0
        %434 = vmatprep.subr.mxu0 0.0
        %435 = vmatpush1.msra.mxu0 0.0
        %436 = vmatprep.subr.mxu0 0.0
        %437 = vmatpush1.msra.mxu0 0.0
        %438 = vmatprep.subr.mxu0 0.0
        %439 = vmatpush1.msra.mxu0 0.0
        %440 = vmatprep.subr.mxu0 0.0
        %441 = vmatpush1.msra.mxu0 0.0
        %442 = vmatprep.subr.mxu0 0.0
        %443 = vmatpush1.msra.mxu0 0.0
        %444 = vmatprep.mubr.f32.mxu0 0.0
        %445 = vmatmul.mubr.f32.gmra.mrb[0].mxu0 %v307
        %v446 = vpop.f32.mrb[0].mxu0
        %v447 = vadd.f32 %v368, %v446
        %v448 = vpop.f32.mrb[0].mxu0
        %v449 = vadd.f32 %v372, %v448
        %450 = vmatprep.mubr.f32.mxu0 0.0
        %451 = vmatmul.mubr.f32.gmra.mrb[0].mxu0 %v308
        %v452 = vpop.f32.mrb[0].mxu0
        %v453 = vadd.f32 %v368, %v452
        %v454 = vpop.f32.mrb[0].mxu0
        %v455 = vadd.f32 %v372, %v454
        %456 = vmatprep.mubr.f32.mxu0 0.0
        %457 = vmatmul.mubr.f32.gmra.mrb[0].mxu0 %v309
        %v458 = vpop.f32.mrb[0].mxu0
        %v459 = vadd.f32 %v368, %v458
        %v460 = vpop.f32.mrb[0].mxu0
        %v461 = vadd.f32 %v372, %v460
        %462 = vmatprep.mubr.f32.mxu0 0.0
        %463 = vmatmul.mubr.f32.gmra.mrb[0].mxu0 %v310
        %v464 = vpop.f32.mrb[0].mxu0
        %v465 = vadd.f32 %v368, %v464
        %v466 = vpop.f32.mrb[0].mxu0
        %v467 = vadd.f32 %v372, %v466
        %468 = vmatprep.mubr.f32.mxu0 0.0
        %469 = vmatmul.mubr.f32.gmra.mrb[0].mxu0 %v311
        %v470 = vpop.f32.mrb[0].mxu0
        %v471 = vadd.f32 %v368, %v470
        %v472 = vpop.f32.mrb[0].mxu0
        %v473 = vadd.f32 %v372, %v472
        %474 = vmatprep.mubr.f32.mxu0 0.0
        %475 = vmatmul.mubr.f32.gmra.mrb[0].mxu0 %v312
        %v476 = vpop.f32.mrb[0].mxu0
        %v477 = vadd.f32 %v368, %v476
        %v478 = vpop.f32.mrb[0].mxu0
        %v479 = vadd.f32 %v372, %v478
        %480 = vmatprep.mubr.f32.mxu0 0.0
        %481 = vmatmul.mubr.f32.gmra.mrb[0].mxu0 %v313
        %v482 = vpop.f32.mrb[0].mxu0
        %v483 = vadd.f32 %v368, %v482
        %v484 = vpop.f32.mrb[0].mxu0
        %v485 = vadd.f32 %v372, %v484
        %486 = vmatprep.mubr.f32.mxu0 0.0
        %487 = vmatmul.mubr.f32.gmra.mrb[0].mxu0 %v314
        %v488 = vpop.f32.mrb[0].mxu0
        %v489 = vadd.f32 %v368, %v488
        %v490 = vpop.f32.mrb[0].mxu0
        %v491 = vadd.f32 %v372, %v490
        %492 = vdwg.mxu0
        %493 = vmatprep.subr.mxu0 0.0
        %494 = vmatpush1.msra.mxu0 %v317
        %495 = vmatprep.subr.mxu0 0.0
        %496 = vmatpush1.msra.mxu0 %v320
        %497 = vmatprep.subr.mxu0 0.0
        %498 = vmatpush1.msra.mxu0 %v323
        %499 = vmatprep.subr.mxu0 0.0
        %500 = vmatpush1.msra.mxu0 %v326
        %501 = vmatprep.subr.mxu0 0.0
        %502 = vmatpush1.msra.mxu0 %v329
        %503 = vmatprep.subr.mxu0 0.0
        %504 = vmatpush1.msra.mxu0 %v332
        %505 = vmatprep.subr.mxu0 0.0
        %506 = vmatpush1.msra.mxu0 %v335
        %507 = vmatprep.subr.mxu0 0.0
        %508 = vmatpush1.msra.mxu0 %v338
        %509 = vmatprep.subr.mxu0 0.0
        %510 = vmatpush1.msra.mxu0 %v341
        %511 = vmatprep.subr.mxu0 0.0
        %512 = vmatpush1.msra.mxu0 %v344
        %513 = vmatprep.subr.mxu0 0.0
        %514 = vmatpush1.msra.mxu0 %v347
        %515 = vmatprep.subr.mxu0 0.0
        %516 = vmatpush1.msra.mxu0 %v350
        %517 = vmatprep.subr.mxu0 0.0
        %518 = vmatpush1.msra.mxu0 %v353
        %519 = vmatprep.subr.mxu0 0.0
        %520 = vmatpush1.msra.mxu0 %v356
        %521 = vmatprep.subr.mxu0 0.0
        %522 = vmatpush1.msra.mxu0 %v359
        %523 = vmatprep.subr.mxu0 0.0
        %524 = vmatpush1.msra.mxu0 %v362
        %525 = vmatprep.subr.mxu0 0.0
        %526 = vmatpush1.msra.mxu0 0.0
        %527 = vmatprep.subr.mxu0 0.0
        %528 = vmatpush1.msra.mxu0 0.0
        %529 = vmatprep.subr.mxu0 0.0
        %530 = vmatpush1.msra.mxu0 0.0
        %531 = vmatprep.subr.mxu0 0.0
        %532 = vmatpush1.msra.mxu0 0.0
        %533 = vmatprep.subr.mxu0 0.0
        %534 = vmatpush1.msra.mxu0 0.0
        %535 = vmatprep.subr.mxu0 0.0
        %536 = vmatpush1.msra.mxu0 0.0
        %537 = vmatprep.subr.mxu0 0.0
        %538 = vmatpush1.msra.mxu0 0.0
        %539 = vmatprep.subr.mxu0 0.0
        %540 = vmatpush1.msra.mxu0 0.0
        %541 = vmatprep.subr.mxu0 0.0
        %542 = vmatpush1.msra.mxu0 0.0
        %543 = vmatprep.subr.mxu0 0.0
        %544 = vmatpush1.msra.mxu0 0.0
        %545 = vmatprep.subr.mxu0 0.0
        %546 = vmatpush1.msra.mxu0 0.0
        %547 = vmatprep.subr.mxu0 0.0
        %548 = vmatpush1.msra.mxu0 0.0
        %549 = vmatprep.subr.mxu0 0.0
        %550 = vmatpush1.msra.mxu0 0.0
        %551 = vmatprep.subr.mxu0 0.0
        %552 = vmatpush1.msra.mxu0 0.0
        %553 = vmatprep.subr.mxu0 0.0
        %554 = vmatpush1.msra.mxu0 0.0
        %555 = vmatprep.subr.mxu0 0.0
        %556 = vmatpush1.msra.mxu0 0.0
        %557 = vmatprep.mubr.f32.mxu0 0.0
        %558 = vmatmul.mubr.f32.gmra.mrb[0].mxu0 %v307
        %v559 = vpop.f32.mrb[0].mxu0
        %v560 = vadd.f32 %v376, %v559
        %v561 = vpop.f32.mrb[0].mxu0
        %562 = vmatprep.mubr.f32.mxu0 0.0
        %563 = vmatmul.mubr.f32.gmra.mrb[0].mxu0 %v308
        %v564 = vpop.f32.mrb[0].mxu0
        %v565 = vadd.f32 %v376, %v564
        %v566 = vpop.f32.mrb[0].mxu0
        %567 = vmatprep.mubr.f32.mxu0 0.0
        %568 = vmatmul.mubr.f32.gmra.mrb[0].mxu0 %v309
        %v569 = vpop.f32.mrb[0].mxu0
        %v570 = vadd.f32 %v376, %v569
        %v571 = vpop.f32.mrb[0].mxu0
        %572 = vmatprep.mubr.f32.mxu0 0.0
        %573 = vmatmul.mubr.f32.gmra.mrb[0].mxu0 %v310
        %v574 = vpop.f32.mrb[0].mxu0
        %v575 = vadd.f32 %v376, %v574
        %v576 = vpop.f32.mrb[0].mxu0
        %577 = vmatprep.mubr.f32.mxu0 0.0
        %578 = vmatmul.mubr.f32.gmra.mrb[0].mxu0 %v311
        %v579 = vpop.f32.mrb[0].mxu0
        %v580 = vadd.f32 %v376, %v579
        %v581 = vpop.f32.mrb[0].mxu0
        %582 = vmatprep.mubr.f32.mxu0 0.0
        %583 = vmatmul.mubr.f32.gmra.mrb[0].mxu0 %v312
        %v584 = vpop.f32.mrb[0].mxu0
        %v585 = vadd.f32 %v376, %v584
        %v586 = vpop.f32.mrb[0].mxu0
        %587 = vmatprep.mubr.f32.mxu0 0.0
        %588 = vmatmul.mubr.f32.gmra.mrb[0].mxu0 %v313
        %v589 = vpop.f32.mrb[0].mxu0
        %v590 = vadd.f32 %v376, %v589
        %v591 = vpop.f32.mrb[0].mxu0
        %592 = vmatprep.mubr.f32.mxu0 0.0
        %593 = vmatmul.mubr.f32.gmra.mrb[0].mxu0 %v314
        %v594 = vpop.f32.mrb[0].mxu0
        %v595 = vadd.f32 %v376, %v594
        %v596 = vpop.f32.mrb[0].mxu0
        %597 = vdwg.mxu0
        %v598 = vld [vmem:[%s2] sm:$0xff]
        %v599 = vld [vmem:[%s2 + $0x8] sm:$0xff]
        %v600 = vld [vmem:[%s2 + $0x10] sm:$0xff]
        %v601 = vld [vmem:[%s2 + $0x18] sm:$0xff]
        %v602 = vld [vmem:[%s2 + $0x20] sm:$0xff]
        %v603 = vld [vmem:[%s2 + $0x28] sm:$0xff]
        %v604 = vld [vmem:[%s2 + $0x30] sm:$0xff]
        %v605 = vld [vmem:[%s2 + $0x38] sm:$0xff]
        %v606 = vld [vmem:[%s2 + $0x40] sm:$0xff]
        %v607 = vld [vmem:[%s2 + $0x48] sm:$0xff]
        %v608 = vld [vmem:[%s2 + $0x50] sm:$0xff]
        %v609 = vld [vmem:[%s2 + $0x58] sm:$0xff]
        %v610 = vld [vmem:[%s2 + $0x60] sm:$0xff]
        %v611 = vld [vmem:[%s2 + $0x68] sm:$0xff]
        %v612 = vld [vmem:[%s2 + $0x70] sm:$0xff]
        %v613 = vld [vmem:[%s2 + $0x78] sm:$0xff]
        %v614 = vld [vmem:[%s2 + $0x80] sm:$0xff]
        %v615 = vld [vmem:[%s2 + $0x88] sm:$0xff]
        %v616 = vld [vmem:[%s2 + $0x90] sm:$0xff]
        %v617 = vld [vmem:[%s2 + $0x98] sm:$0xff]
        %v618 = vld [vmem:[%s2 + $0xa0] sm:$0xff]
        %v619 = vld [vmem:[%s2 + $0xa8] sm:$0xff]
        %v620 = vld [vmem:[%s2 + $0xb0] sm:$0xff]
        %v621 = vld [vmem:[%s2 + $0xb8] sm:$0xff]
        %v622 = vld [vmem:[%s2 + $0xc0] sm:$0xff]
        %v623 = vld [vmem:[%s2 + $0xc8] sm:$0xff]
        %v624 = vld [vmem:[%s2 + $0xd0] sm:$0xff]
        %v625 = vld [vmem:[%s2 + $0xd8] sm:$0xff]
        %v626 = vld [vmem:[%s2 + $0xe0] sm:$0xff]
        %v627 = vld [vmem:[%s2 + $0xe8] sm:$0xff]
        %v628 = vld [vmem:[%s2 + $0xf0] sm:$0xff]
        %v629 = vld [vmem:[%s2 + $0xf8] sm:$0xff]
        %v630 = vld [vmem:[%s2 + $0x100] sm:$0xff]
        %v631 = vld [vmem:[%s2 + $0x108] sm:$0xff]
        %v632 = vld [vmem:[%s2 + $0x110] sm:$0xff]
        %v633 = vld [vmem:[%s2 + $0x118] sm:$0xff]
        %v634 = vld [vmem:[%s2 + $0x120] sm:$0xff]
        %v635 = vld [vmem:[%s2 + $0x128] sm:$0xff]
        %v636 = vld [vmem:[%s2 + $0x130] sm:$0xff]
        %v637 = vld [vmem:[%s2 + $0x138] sm:$0xff]
        %v638 = vld [vmem:[%s2 + $0x140] sm:$0xff]
        %v639 = vld [vmem:[%s2 + $0x148] sm:$0xff]
        %v640 = vld [vmem:[%s2 + $0x150] sm:$0xff]
        %v641 = vld [vmem:[%s2 + $0x158] sm:$0xff]
        %v642 = vld [vmem:[%s2 + $0x160] sm:$0xff]
        %v643 = vld [vmem:[%s2 + $0x168] sm:$0xff]
        %v644 = vld [vmem:[%s2 + $0x170] sm:$0xff]
        %v645 = vld [vmem:[%s2 + $0x178] sm:$0xff]
        %v646 = vld [vmem:[%s4] sm:$0x1]
        %v648 = vlaneseq
        %v649 = vshrl.u32 %v648, 7
        %v650 = vsub.s32 0, %v649
        %v651 = vrot.slane %v646, %v650
        %v653 = vld [vmem:[#allocation2] sm:$0xff]
        %654 = vmatprep.subr.mxu0 %v599
        %655 = vmatpush1.msra.mxu0 %v598
        %656 = vmatprep.subr.mxu0 %v602
        %657 = vmatpush1.msra.mxu0 %v601
        %658 = vmatprep.subr.mxu0 %v605
        %659 = vmatpush1.msra.mxu0 %v604
        %660 = vmatprep.subr.mxu0 %v608
        %661 = vmatpush1.msra.mxu0 %v607
        %662 = vmatprep.subr.mxu0 %v611
        %663 = vmatpush1.msra.mxu0 %v610
        %664 = vmatprep.subr.mxu0 %v614
        %665 = vmatpush1.msra.mxu0 %v613
        %666 = vmatprep.subr.mxu0 %v617
        %667 = vmatpush1.msra.mxu0 %v616
        %668 = vmatprep.subr.mxu0 %v620
        %669 = vmatpush1.msra.mxu0 %v619
        %670 = vmatprep.subr.mxu0 %v623
        %671 = vmatpush1.msra.mxu0 %v622
        %672 = vmatprep.subr.mxu0 %v626
        %673 = vmatpush1.msra.mxu0 %v625
        %674 = vmatprep.subr.mxu0 %v629
        %675 = vmatpush1.msra.mxu0 %v628
        %676 = vmatprep.subr.mxu0 %v632
        %677 = vmatpush1.msra.mxu0 %v631
        %678 = vmatprep.subr.mxu0 %v635
        %679 = vmatpush1.msra.mxu0 %v634
        %680 = vmatprep.subr.mxu0 %v638
        %681 = vmatpush1.msra.mxu0 %v637
        %682 = vmatprep.subr.mxu0 %v641
        %683 = vmatpush1.msra.mxu0 %v640
        %684 = vmatprep.subr.mxu0 %v644
        %685 = vmatpush1.msra.mxu0 %v643
        %686 = vmatprep.subr.mxu0 0.0
        %687 = vmatpush1.msra.mxu0 0.0
        %688 = vmatprep.subr.mxu0 0.0
        %689 = vmatpush1.msra.mxu0 0.0
        %690 = vmatprep.subr.mxu0 0.0
        %691 = vmatpush1.msra.mxu0 0.0
        %692 = vmatprep.subr.mxu0 0.0
        %693 = vmatpush1.msra.mxu0 0.0
        %694 = vmatprep.subr.mxu0 0.0
        %695 = vmatpush1.msra.mxu0 0.0
        %696 = vmatprep.subr.mxu0 0.0
        %697 = vmatpush1.msra.mxu0 0.0
        %698 = vmatprep.subr.mxu0 0.0
        %699 = vmatpush1.msra.mxu0 0.0
        %700 = vmatprep.subr.mxu0 0.0
        %701 = vmatpush1.msra.mxu0 0.0
        %702 = vmatprep.subr.mxu0 0.0
        %703 = vmatpush1.msra.mxu0 0.0
        %704 = vmatprep.subr.mxu0 0.0
        %705 = vmatpush1.msra.mxu0 0.0
        %706 = vmatprep.subr.mxu0 0.0
        %707 = vmatpush1.msra.mxu0 0.0
        %708 = vmatprep.subr.mxu0 0.0
        %709 = vmatpush1.msra.mxu0 0.0
        %710 = vmatprep.subr.mxu0 0.0
        %711 = vmatpush1.msra.mxu0 0.0
        %712 = vmatprep.subr.mxu0 0.0
        %713 = vmatpush1.msra.mxu0 0.0
        %714 = vmatprep.subr.mxu0 0.0
        %715 = vmatpush1.msra.mxu0 0.0
        %716 = vmatprep.subr.mxu0 0.0
        %717 = vmatpush1.msra.mxu0 0.0
        %718 = vmatprep.mubr.f32.mxu0 0.0
        %719 = vmatmul.mubr.f32.gmra.mrb[0].mxu0 %v653
        %v720 = vpop.f32.mrb[0].mxu0
        %v721 = vadd.f32 0.0, %v720
        %v722 = vpop.f32.mrb[0].mxu0
        %v723 = vadd.f32 0.0, %v722
        %724 = vdwg.mxu0
        %725 = vmatprep.subr.mxu0 0.0
        %726 = vmatpush1.msra.mxu0 %v600
        %727 = vmatprep.subr.mxu0 0.0
        %728 = vmatpush1.msra.mxu0 %v603
        %729 = vmatprep.subr.mxu0 0.0
        %730 = vmatpush1.msra.mxu0 %v606
        %731 = vmatprep.subr.mxu0 0.0
        %732 = vmatpush1.msra.mxu0 %v609
        %733 = vmatprep.subr.mxu0 0.0
        %734 = vmatpush1.msra.mxu0 %v612
        %735 = vmatprep.subr.mxu0 0.0
        %736 = vmatpush1.msra.mxu0 %v615
        %737 = vmatprep.subr.mxu0 0.0
        %738 = vmatpush1.msra.mxu0 %v618
        %739 = vmatprep.subr.mxu0 0.0
        %740 = vmatpush1.msra.mxu0 %v621
        %741 = vmatprep.subr.mxu0 0.0
        %742 = vmatpush1.msra.mxu0 %v624
        %743 = vmatprep.subr.mxu0 0.0
        %744 = vmatpush1.msra.mxu0 %v627
        %745 = vmatprep.subr.mxu0 0.0
        %746 = vmatpush1.msra.mxu0 %v630
        %747 = vmatprep.subr.mxu0 0.0
        %748 = vmatpush1.msra.mxu0 %v633
        %749 = vmatprep.subr.mxu0 0.0
        %750 = vmatpush1.msra.mxu0 %v636
        %751 = vmatprep.subr.mxu0 0.0
        %752 = vmatpush1.msra.mxu0 %v639
        %753 = vmatprep.subr.mxu0 0.0
        %754 = vmatpush1.msra.mxu0 %v642
        %755 = vmatprep.subr.mxu0 0.0
        %756 = vmatpush1.msra.mxu0 %v645
        %757 = vmatprep.subr.mxu0 0.0
        %758 = vmatpush1.msra.mxu0 0.0
        %759 = vmatprep.subr.mxu0 0.0
        %760 = vmatpush1.msra.mxu0 0.0
        %761 = vmatprep.subr.mxu0 0.0
        %762 = vmatpush1.msra.mxu0 0.0
        %763 = vmatprep.subr.mxu0 0.0
        %764 = vmatpush1.msra.mxu0 0.0
        %765 = vmatprep.subr.mxu0 0.0
        %766 = vmatpush1.msra.mxu0 0.0
        %767 = vmatprep.subr.mxu0 0.0
        %768 = vmatpush1.msra.mxu0 0.0
        %769 = vmatprep.subr.mxu0 0.0
        %770 = vmatpush1.msra.mxu0 0.0
        %771 = vmatprep.subr.mxu0 0.0
        %772 = vmatpush1.msra.mxu0 0.0
        %773 = vmatprep.subr.mxu0 0.0
        %774 = vmatpush1.msra.mxu0 0.0
        %775 = vmatprep.subr.mxu0 0.0
        %776 = vmatpush1.msra.mxu0 0.0
        %777 = vmatprep.subr.mxu0 0.0
        %778 = vmatpush1.msra.mxu0 0.0
        %779 = vmatprep.subr.mxu0 0.0
        %780 = vmatpush1.msra.mxu0 0.0
        %781 = vmatprep.subr.mxu0 0.0
        %782 = vmatpush1.msra.mxu0 0.0
        %783 = vmatprep.subr.mxu0 0.0
        %784 = vmatpush1.msra.mxu0 0.0
        %785 = vmatprep.subr.mxu0 0.0
        %786 = vmatpush1.msra.mxu0 0.0
        %787 = vmatprep.subr.mxu0 0.0
        %788 = vmatpush1.msra.mxu0 0.0
        %789 = vmatprep.mubr.f32.mxu0 0.0
        %790 = vmatmul.mubr.f32.gmra.mrb[0].mxu0 %v653
        %v791 = vpop.f32.mrb[0].mxu0
        %v792 = vadd.f32 0.0, %v791
        %v793 = vpop.f32.mrb[0].mxu0
        %794 = vdwg.mxu0
        %v796 = vrot.slane %v721, 1
        %v797 = vrot.slane %v721, 2
        %v798 = vrot.slane %v721, 3
        %v799 = vrot.slane %v721, 4
        %v800 = vrot.slane %v721, 5
        %v801 = vrot.slane %v721, 6
        %v802 = vrot.slane %v721, 7
        %v811 = vadd.f32 %v447, %v721
        %v812 = vadd.f32 %v453, %v796
        %v813 = vadd.f32 %v459, %v797
        %v814 = vadd.f32 %v465, %v798
        %v815 = vadd.f32 %v471, %v799
        %v816 = vadd.f32 %v477, %v800
        %v817 = vadd.f32 %v483, %v801
        %v818 = vadd.f32 %v489, %v802
        %v819 = vxor.u32 %v811, 2147483648
        %v820 = vxor.u32 %v812, 2147483648
        %v821 = vxor.u32 %v813, 2147483648
        %v822 = vxor.u32 %v814, 2147483648
        %v823 = vxor.u32 %v815, 2147483648
        %v824 = vxor.u32 %v816, 2147483648
        %v825 = vxor.u32 %v817, 2147483648
        %v826 = vxor.u32 %v818, 2147483648
        %v827 = vmul.f32 %v819, 1.442695
        %v828 = vpow.pop %v827
        %v829 = vmul.f32 %v820, 1.442695
        %v830 = vpow.pop %v829
        %v831 = vmul.f32 %v821, 1.442695
        %v832 = vpow.pop %v831
        %v833 = vmul.f32 %v822, 1.442695
        %v834 = vpow.pop %v833
        %v835 = vmul.f32 %v823, 1.442695
        %v836 = vpow.pop %v835
        %v837 = vmul.f32 %v824, 1.442695
        %v838 = vpow.pop %v837
        %v839 = vmul.f32 %v825, 1.442695
        %v840 = vpow.pop %v839
        %v841 = vmul.f32 %v826, 1.442695
        %v842 = vpow.pop %v841
        %v843 = vadd.f32 %v828, 1.0
        %v844 = vadd.f32 %v830, 1.0
        %v845 = vadd.f32 %v832, 1.0
        %v846 = vadd.f32 %v834, 1.0
        %v847 = vadd.f32 %v836, 1.0
        %v848 = vadd.f32 %v838, 1.0
        %v849 = vadd.f32 %v840, 1.0
        %v850 = vadd.f32 %v842, 1.0
        %v851 = vrcp.pop %v843
        %v852 = vmul.f32 1.0, %v851
        %v853 = vrcp.pop %v844
        %v854 = vmul.f32 1.0, %v853
        %v855 = vrcp.pop %v845
        %v856 = vmul.f32 1.0, %v855
        %v857 = vrcp.pop %v846
        %v858 = vmul.f32 1.0, %v857
        %v859 = vrcp.pop %v847
        %v860 = vmul.f32 1.0, %v859
        %v861 = vrcp.pop %v848
        %v862 = vmul.f32 1.0, %v861
        %v863 = vrcp.pop %v849
        %v864 = vmul.f32 1.0, %v863
        %v865 = vrcp.pop %v850
        %v866 = vmul.f32 1.0, %v865
        %v868 = vrot.slane %v723, 1
        %v869 = vrot.slane %v723, 2
        %v870 = vrot.slane %v723, 3
        %v871 = vrot.slane %v723, 4
        %v872 = vrot.slane %v723, 5
        %v873 = vrot.slane %v723, 6
        %v874 = vrot.slane %v723, 7
        %v883 = vadd.f32 %v449, %v723
        %v884 = vadd.f32 %v455, %v868
        %v885 = vadd.f32 %v461, %v869
        %v886 = vadd.f32 %v467, %v870
        %v887 = vadd.f32 %v473, %v871
        %v888 = vadd.f32 %v479, %v872
        %v889 = vadd.f32 %v485, %v873
        %v890 = vadd.f32 %v491, %v874
        %v891 = vxor.u32 %v883, 2147483648
        %v892 = vxor.u32 %v884, 2147483648
        %v893 = vxor.u32 %v885, 2147483648
        %v894 = vxor.u32 %v886, 2147483648
        %v895 = vxor.u32 %v887, 2147483648
        %v896 = vxor.u32 %v888, 2147483648
        %v897 = vxor.u32 %v889, 2147483648
        %v898 = vxor.u32 %v890, 2147483648
        %v899 = vmul.f32 %v891, 1.442695
        %v900 = vpow.pop %v899
        %v901 = vmul.f32 %v892, 1.442695
        %v902 = vpow.pop %v901
        %v903 = vmul.f32 %v893, 1.442695
        %v904 = vpow.pop %v903
        %v905 = vmul.f32 %v894, 1.442695
        %v906 = vpow.pop %v905
        %v907 = vmul.f32 %v895, 1.442695
        %v908 = vpow.pop %v907
        %v909 = vmul.f32 %v896, 1.442695
        %v910 = vpow.pop %v909
        %v911 = vmul.f32 %v897, 1.442695
        %v912 = vpow.pop %v911
        %v913 = vmul.f32 %v898, 1.442695
        %v914 = vpow.pop %v913
        %v915 = vadd.f32 %v900, 1.0
        %v916 = vadd.f32 %v902, 1.0
        %v917 = vadd.f32 %v904, 1.0
        %v918 = vadd.f32 %v906, 1.0
        %v919 = vadd.f32 %v908, 1.0
        %v920 = vadd.f32 %v910, 1.0
        %v921 = vadd.f32 %v912, 1.0
        %v922 = vadd.f32 %v914, 1.0
        %v923 = vrcp.pop %v915
        %v924 = vmul.f32 1.0, %v923
        %v925 = vrcp.pop %v916
        %v926 = vmul.f32 1.0, %v925
        %v927 = vrcp.pop %v917
        %v928 = vmul.f32 1.0, %v927
        %v929 = vrcp.pop %v918
        %v930 = vmul.f32 1.0, %v929
        %v931 = vrcp.pop %v919
        %v932 = vmul.f32 1.0, %v931
        %v933 = vrcp.pop %v920
        %v934 = vmul.f32 1.0, %v933
        %v935 = vrcp.pop %v921
        %v936 = vmul.f32 1.0, %v935
        %v937 = vrcp.pop %v922
        %v938 = vmul.f32 1.0, %v937
        %v939 = vadd.f32 %v792, %v651
        %v941 = vrot.slane %v939, 1
        %v942 = vrot.slane %v939, 2
        %v943 = vrot.slane %v939, 3
        %v944 = vrot.slane %v939, 4
        %v945 = vrot.slane %v939, 5
        %v946 = vrot.slane %v939, 6
        %v947 = vrot.slane %v939, 7
        %v956 = vmul.f32 %v852, %v939
        %v957 = vmul.f32 %v854, %v941
        %v958 = vmul.f32 %v856, %v942
        %v959 = vmul.f32 %v858, %v943
        %v960 = vmul.f32 %v860, %v944
        %v961 = vmul.f32 %v862, %v945
        %v962 = vmul.f32 %v864, %v946
        %v963 = vmul.f32 %v866, %v947
        %v964 = vadd.f32 %v560, %v956
        %v965 = vadd.f32 %v565, %v957
        %v966 = vadd.f32 %v570, %v958
        %v967 = vadd.f32 %v575, %v959
        %v968 = vadd.f32 %v580, %v960
        %v969 = vadd.f32 %v585, %v961
        %v970 = vadd.f32 %v590, %v962
        %v971 = vadd.f32 %v595, %v963
        %v972 = vtanh.pop %v964
        %v973 = vtanh.pop %v965
        %v974 = vtanh.pop %v966
        %v975 = vtanh.pop %v967
        %v976 = vtanh.pop %v968
        %v977 = vtanh.pop %v969
        %v978 = vtanh.pop %v970
        %v979 = vtanh.pop %v971
        %v980 = vsub.f32 1.0, %v924
        %v981 = vsub.f32 1.0, %v926
        %v982 = vsub.f32 1.0, %v928
        %v983 = vsub.f32 1.0, %v930
        %v984 = vsub.f32 1.0, %v932
        %v985 = vsub.f32 1.0, %v934
        %v986 = vsub.f32 1.0, %v936
        %v987 = vsub.f32 1.0, %v938
        %v988 = vmul.f32 %v980, %v972
        %v989 = vmul.f32 %v981, %v973
        %v990 = vmul.f32 %v982, %v974
        %v991 = vmul.f32 %v983, %v975
        %v992 = vmul.f32 %v984, %v976
        %v993 = vmul.f32 %v985, %v977
        %v994 = vmul.f32 %v986, %v978
        %v995 = vmul.f32 %v987, %v979
        %v997 = vrot.slane %v653, 1
        %v998 = vrot.slane %v653, 2
        %v999 = vrot.slane %v653, 3
        %v1000 = vrot.slane %v653, 4
        %v1001 = vrot.slane %v653, 5
        %v1002 = vrot.slane %v653, 6
        %v1003 = vrot.slane %v653, 7
        %v1012 = vmul.f32 %v924, %v653
        %v1013 = vmul.f32 %v926, %v997
        %v1014 = vmul.f32 %v928, %v998
        %v1015 = vmul.f32 %v930, %v999
        %v1016 = vmul.f32 %v932, %v1000
        %v1017 = vmul.f32 %v934, %v1001
        %v1018 = vmul.f32 %v936, %v1002
        %v1019 = vmul.f32 %v938, %v1003
        %v1020 = vadd.f32 %v988, %v1012
        %v1021 = vadd.f32 %v989, %v1013
        %v1022 = vadd.f32 %v990, %v1014
        %v1023 = vadd.f32 %v991, %v1015
        %v1024 = vadd.f32 %v992, %v1016
        %v1025 = vadd.f32 %v993, %v1017
        %v1026 = vadd.f32 %v994, %v1018
        %v1027 = vadd.f32 %v995, %v1019
        %v1036 = vrot.slane %v1021, 7
        %vm1037 = vcmask 1041409
        %v1038 = vsel %vm1037, %v1036, %v1020
        %v1039 = vrot.slane %v1022, 6
        %vm1040 = vcmask 1042434
        %v1041 = vsel %vm1040, %v1039, %v1038
        %v1042 = vrot.slane %v1023, 5
        %vm1043 = vcmask 1043459
        %v1044 = vsel %vm1043, %v1042, %v1041
        %v1045 = vrot.slane %v1024, 4
        %vm1046 = vcmask 1044484
        %v1047 = vsel %vm1046, %v1045, %v1044
        %v1048 = vrot.slane %v1025, 3
        %vm1049 = vcmask 1045509
        %v1050 = vsel %vm1049, %v1048, %v1047
        %v1051 = vrot.slane %v1026, 2
        %vm1052 = vcmask 1046534
        %v1053 = vsel %vm1052, %v1051, %v1050
        %v1054 = vrot.slane %v1027, 1
        %vm1055 = vcmask 1047559
        %v1056 = vsel %vm1055, %v1054, %v1053
        %1058 = vmatprep.subr.mxu0 %v599
        %1059 = vmatpush1.msra.mxu0 %v598
        %1060 = vmatprep.subr.mxu0 %v602
        %1061 = vmatpush1.msra.mxu0 %v601
        %1062 = vmatprep.subr.mxu0 %v605
        %1063 = vmatpush1.msra.mxu0 %v604
        %1064 = vmatprep.subr.mxu0 %v608
        %1065 = vmatpush1.msra.mxu0 %v607
        %1066 = vmatprep.subr.mxu0 %v611
        %1067 = vmatpush1.msra.mxu0 %v610
        %1068 = vmatprep.subr.mxu0 %v614
        %1069 = vmatpush1.msra.mxu0 %v613
        %1070 = vmatprep.subr.mxu0 %v617
        %1071 = vmatpush1.msra.mxu0 %v616
        %1072 = vmatprep.subr.mxu0 %v620
        %1073 = vmatpush1.msra.mxu0 %v619
        %1074 = vmatprep.subr.mxu0 %v623
        %1075 = vmatpush1.msra.mxu0 %v622
        %1076 = vmatprep.subr.mxu0 %v626
        %1077 = vmatpush1.msra.mxu0 %v625
        %1078 = vmatprep.subr.mxu0 %v629
        %1079 = vmatpush1.msra.mxu0 %v628
        %1080 = vmatprep.subr.mxu0 %v632
        %1081 = vmatpush1.msra.mxu0 %v631
        %1082 = vmatprep.subr.mxu0 %v635
        %1083 = vmatpush1.msra.mxu0 %v634
        %1084 = vmatprep.subr.mxu0 %v638
        %1085 = vmatpush1.msra.mxu0 %v637
        %1086 = vmatprep.subr.mxu0 %v641
        %1087 = vmatpush1.msra.mxu0 %v640
        %1088 = vmatprep.subr.mxu0 %v644
        %1089 = vmatpush1.msra.mxu0 %v643
        %1090 = vmatprep.subr.mxu0 0.0
        %1091 = vmatpush1.msra.mxu0 0.0
        %1092 = vmatprep.subr.mxu0 0.0
        %1093 = vmatpush1.msra.mxu0 0.0
        %1094 = vmatprep.subr.mxu0 0.0
        %1095 = vmatpush1.msra.mxu0 0.0
        %1096 = vmatprep.subr.mxu0 0.0
        %1097 = vmatpush1.msra.mxu0 0.0
        %1098 = vmatprep.subr.mxu0 0.0
        %1099 = vmatpush1.msra.mxu0 0.0
        %1100 = vmatprep.subr.mxu0 0.0
        %1101 = vmatpush1.msra.mxu0 0.0
        %1102 = vmatprep.subr.mxu0 0.0
        %1103 = vmatpush1.msra.mxu0 0.0
        %1104 = vmatprep.subr.mxu0 0.0
        %1105 = vmatpush1.msra.mxu0 0.0
        %1106 = vmatprep.subr.mxu0 0.0
        %1107 = vmatpush1.msra.mxu0 0.0
        %1108 = vmatprep.subr.mxu0 0.0
        %1109 = vmatpush1.msra.mxu0 0.0
        %1110 = vmatprep.subr.mxu0 0.0
        %1111 = vmatpush1.msra.mxu0 0.0
        %1112 = vmatprep.subr.mxu0 0.0
        %1113 = vmatpush1.msra.mxu0 0.0
        %1114 = vmatprep.subr.mxu0 0.0
        %1115 = vmatpush1.msra.mxu0 0.0
        %1116 = vmatprep.subr.mxu0 0.0
        %1117 = vmatpush1.msra.mxu0 0.0
        %1118 = vmatprep.subr.mxu0 0.0
        %1119 = vmatpush1.msra.mxu0 0.0
        %1120 = vmatprep.subr.mxu0 0.0
        %1121 = vmatpush1.msra.mxu0 0.0
        %1122 = vmatprep.mubr.f32.mxu0 0.0
        %1123 = vmatmul.mubr.f32.gmra.mrb[0].mxu0 %v1056
        %v1124 = vpop.f32.mrb[0].mxu0
        %v1125 = vadd.f32 0.0, %v1124
        %v1126 = vpop.f32.mrb[0].mxu0
        %v1127 = vadd.f32 0.0, %v1126
        %1128 = vdwg.mxu0
        %1129 = vmatprep.subr.mxu0 0.0
        %1130 = vmatpush1.msra.mxu0 %v600
        %1131 = vmatprep.subr.mxu0 0.0
        %1132 = vmatpush1.msra.mxu0 %v603
        %1133 = vmatprep.subr.mxu0 0.0
        %1134 = vmatpush1.msra.mxu0 %v606
        %1135 = vmatprep.subr.mxu0 0.0
        %1136 = vmatpush1.msra.mxu0 %v609
        %1137 = vmatprep.subr.mxu0 0.0
        %1138 = vmatpush1.msra.mxu0 %v612
        %1139 = vmatprep.subr.mxu0 0.0
        %1140 = vmatpush1.msra.mxu0 %v615
        %1141 = vmatprep.subr.mxu0 0.0
        %1142 = vmatpush1.msra.mxu0 %v618
        %1143 = vmatprep.subr.mxu0 0.0
        %1144 = vmatpush1.msra.mxu0 %v621
        %1145 = vmatprep.subr.mxu0 0.0
        %1146 = vmatpush1.msra.mxu0 %v624
        %1147 = vmatprep.subr.mxu0 0.0
        %1148 = vmatpush1.msra.mxu0 %v627
        %1149 = vmatprep.subr.mxu0 0.0
        %1150 = vmatpush1.msra.mxu0 %v630
        %1151 = vmatprep.subr.mxu0 0.0
        %1152 = vmatpush1.msra.mxu0 %v633
        %1153 = vmatprep.subr.mxu0 0.0
        %1154 = vmatpush1.msra.mxu0 %v636
        %1155 = vmatprep.subr.mxu0 0.0
        %1156 = vmatpush1.msra.mxu0 %v639
        %1157 = vmatprep.subr.mxu0 0.0
        %1158 = vmatpush1.msra.mxu0 %v642
        %1159 = vmatprep.subr.mxu0 0.0
        %1160 = vmatpush1.msra.mxu0 %v645
        %1161 = vmatprep.subr.mxu0 0.0
        %1162 = vmatpush1.msra.mxu0 0.0
        %1163 = vmatprep.subr.mxu0 0.0
        %1164 = vmatpush1.msra.mxu0 0.0
        %1165 = vmatprep.subr.mxu0 0.0
        %1166 = vmatpush1.msra.mxu0 0.0
        %1167 = vmatprep.subr.mxu0 0.0
        %1168 = vmatpush1.msra.mxu0 0.0
        %1169 = vmatprep.subr.mxu0 0.0
        %1170 = vmatpush1.msra.mxu0 0.0
        %1171 = vmatprep.subr.mxu0 0.0
        %1172 = vmatpush1.msra.mxu0 0.0
        %1173 = vmatprep.subr.mxu0 0.0
        %1174 = vmatpush1.msra.mxu0 0.0
        %1175 = vmatprep.subr.mxu0 0.0
        %1176 = vmatpush1.msra.mxu0 0.0
        %1177 = vmatprep.subr.mxu0 0.0
        %1178 = vmatpush1.msra.mxu0 0.0
        %1179 = vmatprep.subr.mxu0 0.0
        %1180 = vmatpush1.msra.mxu0 0.0
        %1181 = vmatprep.subr.mxu0 0.0
        %1182 = vmatpush1.msra.mxu0 0.0
        %1183 = vmatprep.subr.mxu0 0.0
        %1184 = vmatpush1.msra.mxu0 0.0
        %1185 = vmatprep.subr.mxu0 0.0
        %1186 = vmatpush1.msra.mxu0 0.0
        %1187 = vmatprep.subr.mxu0 0.0
        %1188 = vmatpush1.msra.mxu0 0.0
        %1189 = vmatprep.subr.mxu0 0.0
        %1190 = vmatpush1.msra.mxu0 0.0
        %1191 = vmatprep.subr.mxu0 0.0
        %1192 = vmatpush1.msra.mxu0 0.0
        %1193 = vmatprep.mubr.f32.mxu0 0.0
        %1194 = vmatmul.mubr.f32.gmra.mrb[0].mxu0 %v1056
        %v1195 = vpop.f32.mrb[0].mxu0
        %v1196 = vadd.f32 0.0, %v1195
        %v1197 = vpop.f32.mrb[0].mxu0
        %1198 = vdwg.mxu0
        %v1200 = vrot.slane %v1125, 7
        %v1201 = vrot.slane %v1125, 1
        %v1202 = vrot.slane %v1125, 2
        %v1203 = vrot.slane %v1125, 3
        %v1204 = vrot.slane %v1125, 4
        %v1205 = vrot.slane %v1125, 5
        %v1206 = vrot.slane %v1125, 6
        %v1215 = vadd.f32 %v447, %v1200
        %v1216 = vadd.f32 %v453, %v1125
        %v1217 = vadd.f32 %v459, %v1201
        %v1218 = vadd.f32 %v465, %v1202
        %v1219 = vadd.f32 %v471, %v1203
        %v1220 = vadd.f32 %v477, %v1204
        %v1221 = vadd.f32 %v483, %v1205
        %v1222 = vadd.f32 %v489, %v1206
        %v1223 = vxor.u32 %v1215, 2147483648
        %v1224 = vxor.u32 %v1216, 2147483648
        %v1225 = vxor.u32 %v1217, 2147483648
        %v1226 = vxor.u32 %v1218, 2147483648
        %v1227 = vxor.u32 %v1219, 2147483648
        %v1228 = vxor.u32 %v1220, 2147483648
        %v1229 = vxor.u32 %v1221, 2147483648
        %v1230 = vxor.u32 %v1222, 2147483648
        %v1231 = vmul.f32 %v1223, 1.442695
        %v1232 = vpow.pop %v1231
        %v1233 = vmul.f32 %v1224, 1.442695
        %v1234 = vpow.pop %v1233
        %v1235 = vmul.f32 %v1225, 1.442695
        %v1236 = vpow.pop %v1235
        %v1237 = vmul.f32 %v1226, 1.442695
        %v1238 = vpow.pop %v1237
        %v1239 = vmul.f32 %v1227, 1.442695
        %v1240 = vpow.pop %v1239
        %v1241 = vmul.f32 %v1228, 1.442695
        %v1242 = vpow.pop %v1241
        %v1243 = vmul.f32 %v1229, 1.442695
        %v1244 = vpow.pop %v1243
        %v1245 = vmul.f32 %v1230, 1.442695
        %v1246 = vpow.pop %v1245
        %v1247 = vadd.f32 %v1232, 1.0
        %v1248 = vadd.f32 %v1234, 1.0
        %v1249 = vadd.f32 %v1236, 1.0
        %v1250 = vadd.f32 %v1238, 1.0
        %v1251 = vadd.f32 %v1240, 1.0
        %v1252 = vadd.f32 %v1242, 1.0
        %v1253 = vadd.f32 %v1244, 1.0
        %v1254 = vadd.f32 %v1246, 1.0
        %v1255 = vrcp.pop %v1247
        %v1256 = vmul.f32 1.0, %v1255
        %v1257 = vrcp.pop %v1248
        %v1258 = vmul.f32 1.0, %v1257
        %v1259 = vrcp.pop %v1249
        %v1260 = vmul.f32 1.0, %v1259
        %v1261 = vrcp.pop %v1250
        %v1262 = vmul.f32 1.0, %v1261
        %v1263 = vrcp.pop %v1251
        %v1264 = vmul.f32 1.0, %v1263
        %v1265 = vrcp.pop %v1252
        %v1266 = vmul.f32 1.0, %v1265
        %v1267 = vrcp.pop %v1253
        %v1268 = vmul.f32 1.0, %v1267
        %v1269 = vrcp.pop %v1254
        %v1270 = vmul.f32 1.0, %v1269
        %v1272 = vrot.slane %v1127, 7
        %v1273 = vrot.slane %v1127, 1
        %v1274 = vrot.slane %v1127, 2
        %v1275 = vrot.slane %v1127, 3
        %v1276 = vrot.slane %v1127, 4
        %v1277 = vrot.slane %v1127, 5
        %v1278 = vrot.slane %v1127, 6
        %v1287 = vadd.f32 %v449, %v1272
        %v1288 = vadd.f32 %v455, %v1127
        %v1289 = vadd.f32 %v461, %v1273
        %v1290 = vadd.f32 %v467, %v1274
        %v1291 = vadd.f32 %v473, %v1275
        %v1292 = vadd.f32 %v479, %v1276
        %v1293 = vadd.f32 %v485, %v1277
        %v1294 = vadd.f32 %v491, %v1278
        %v1295 = vxor.u32 %v1287, 2147483648
        %v1296 = vxor.u32 %v1288, 2147483648
        %v1297 = vxor.u32 %v1289, 2147483648
        %v1298 = vxor.u32 %v1290, 2147483648
        %v1299 = vxor.u32 %v1291, 2147483648
        %v1300 = vxor.u32 %v1292, 2147483648
        %v1301 = vxor.u32 %v1293, 2147483648
        %v1302 = vxor.u32 %v1294, 2147483648
        %v1303 = vmul.f32 %v1295, 1.442695
        %v1304 = vpow.pop %v1303
        %v1305 = vmul.f32 %v1296, 1.442695
        %v1306 = vpow.pop %v1305
        %v1307 = vmul.f32 %v1297, 1.442695
        %v1308 = vpow.pop %v1307
        %v1309 = vmul.f32 %v1298, 1.442695
        %v1310 = vpow.pop %v1309
        %v1311 = vmul.f32 %v1299, 1.442695
        %v1312 = vpow.pop %v1311
        %v1313 = vmul.f32 %v1300, 1.442695
        %v1314 = vpow.pop %v1313
        %v1315 = vmul.f32 %v1301, 1.442695
        %v1316 = vpow.pop %v1315
        %v1317 = vmul.f32 %v1302, 1.442695
        %v1318 = vpow.pop %v1317
        %v1319 = vadd.f32 %v1304, 1.0
        %v1320 = vadd.f32 %v1306, 1.0
        %v1321 = vadd.f32 %v1308, 1.0
        %v1322 = vadd.f32 %v1310, 1.0
        %v1323 = vadd.f32 %v1312, 1.0
        %v1324 = vadd.f32 %v1314, 1.0
        %v1325 = vadd.f32 %v1316, 1.0
        %v1326 = vadd.f32 %v1318, 1.0
        %v1327 = vrcp.pop %v1319
        %v1328 = vmul.f32 1.0, %v1327
        %v1329 = vrcp.pop %v1320
        %v1330 = vmul.f32 1.0, %v1329
        %v1331 = vrcp.pop %v1321
        %v1332 = vmul.f32 1.0, %v1331
        %v1333 = vrcp.pop %v1322
        %v1334 = vmul.f32 1.0, %v1333
        %v1335 = vrcp.pop %v1323
        %v1336 = vmul.f32 1.0, %v1335
        %v1337 = vrcp.pop %v1324
        %v1338 = vmul.f32 1.0, %v1337
        %v1339 = vrcp.pop %v1325
        %v1340 = vmul.f32 1.0, %v1339
        %v1341 = vrcp.pop %v1326
        %v1342 = vmul.f32 1.0, %v1341
        %v1343 = vadd.f32 %v1196, %v651
        %v1345 = vrot.slane %v1343, 7
        %v1346 = vrot.slane %v1343, 1
        %v1347 = vrot.slane %v1343, 2
        %v1348 = vrot.slane %v1343, 3
        %v1349 = vrot.slane %v1343, 4
        %v1350 = vrot.slane %v1343, 5
        %v1351 = vrot.slane %v1343, 6
        %v1360 = vmul.f32 %v1256, %v1345
        %v1361 = vmul.f32 %v1258, %v1343
        %v1362 = vmul.f32 %v1260, %v1346
        %v1363 = vmul.f32 %v1262, %v1347
        %v1364 = vmul.f32 %v1264, %v1348
        %v1365 = vmul.f32 %v1266, %v1349
        %v1366 = vmul.f32 %v1268, %v1350
        %v1367 = vmul.f32 %v1270, %v1351
        %v1368 = vadd.f32 %v560, %v1360
        %v1369 = vadd.f32 %v565, %v1361
        %v1370 = vadd.f32 %v570, %v1362
        %v1371 = vadd.f32 %v575, %v1363
        %v1372 = vadd.f32 %v580, %v1364
        %v1373 = vadd.f32 %v585, %v1365
        %v1374 = vadd.f32 %v590, %v1366
        %v1375 = vadd.f32 %v595, %v1367
        %v1376 = vtanh.pop %v1368
        %v1377 = vtanh.pop %v1369
        %v1378 = vtanh.pop %v1370
        %v1379 = vtanh.pop %v1371
        %v1380 = vtanh.pop %v1372
        %v1381 = vtanh.pop %v1373
        %v1382 = vtanh.pop %v1374
        %v1383 = vtanh.pop %v1375
        %v1384 = vsub.f32 1.0, %v1328
        %v1385 = vsub.f32 1.0, %v1330
        %v1386 = vsub.f32 1.0, %v1332
        %v1387 = vsub.f32 1.0, %v1334
        %v1388 = vsub.f32 1.0, %v1336
        %v1389 = vsub.f32 1.0, %v1338
        %v1390 = vsub.f32 1.0, %v1340
        %v1391 = vsub.f32 1.0, %v1342
        %v1392 = vmul.f32 %v1384, %v1376
        %v1393 = vmul.f32 %v1385, %v1377
        %v1394 = vmul.f32 %v1386, %v1378
        %v1395 = vmul.f32 %v1387, %v1379
        %v1396 = vmul.f32 %v1388, %v1380
        %v1397 = vmul.f32 %v1389, %v1381
        %v1398 = vmul.f32 %v1390, %v1382
        %v1399 = vmul.f32 %v1391, %v1383
        %v1400 = vrot.slane %v1020, 7
        %v1401 = vrot.slane %v1022, 7
        %v1402 = vrot.slane %v1023, 7
        %v1403 = vrot.slane %v1024, 7
        %v1404 = vrot.slane %v1025, 7
        %v1405 = vrot.slane %v1026, 7
        %v1406 = vrot.slane %v1027, 7
        %v1415 = vmul.f32 %v1328, %v1400
        %v1416 = vmul.f32 %v1330, %v1036
        %v1417 = vmul.f32 %v1332, %v1401
        %v1418 = vmul.f32 %v1334, %v1402
        %v1419 = vmul.f32 %v1336, %v1403
        %v1420 = vmul.f32 %v1338, %v1404
        %v1421 = vmul.f32 %v1340, %v1405
        %v1422 = vmul.f32 %v1342, %v1406
        %v1423 = vadd.f32 %v1392, %v1415
        %v1424 = vadd.f32 %v1393, %v1416
        %v1425 = vadd.f32 %v1394, %v1417
        %v1426 = vadd.f32 %v1395, %v1418
        %v1427 = vadd.f32 %v1396, %v1419
        %v1428 = vadd.f32 %v1397, %v1420
        %v1429 = vadd.f32 %v1398, %v1421
        %v1430 = vadd.f32 %v1399, %v1422
        %v1439 = vrot.slane %v1423, 1
        %v1440 = vsel %vm1037, %v1424, %v1439
        %v1441 = vrot.slane %v1425, 7
        %v1442 = vsel %vm1040, %v1441, %v1440
        %v1443 = vrot.slane %v1426, 6
        %v1444 = vsel %vm1043, %v1443, %v1442
        %v1445 = vrot.slane %v1427, 5
        %v1446 = vsel %vm1046, %v1445, %v1444
        %v1447 = vrot.slane %v1428, 4
        %v1448 = vsel %vm1049, %v1447, %v1446
        %v1449 = vrot.slane %v1429, 3
        %v1450 = vsel %vm1052, %v1449, %v1448
        %v1451 = vrot.slane %v1430, 2
        %v1452 = vsel %vm1055, %v1451, %v1450
        %1454 = vmatprep.subr.mxu0 %v599
        %1455 = vmatpush1.msra.mxu0 %v598
        %1456 = vmatprep.subr.mxu0 %v602
        %1457 = vmatpush1.msra.mxu0 %v601
        %1458 = vmatprep.subr.mxu0 %v605
        %1459 = vmatpush1.msra.mxu0 %v604
        %1460 = vmatprep.subr.mxu0 %v608
        %1461 = vmatpush1.msra.mxu0 %v607
        %1462 = vmatprep.subr.mxu0 %v611
        %1463 = vmatpush1.msra.mxu0 %v610
        %1464 = vmatprep.subr.mxu0 %v614
        %1465 = vmatpush1.msra.mxu0 %v613
        %1466 = vmatprep.subr.mxu0 %v617
        %1467 = vmatpush1.msra.mxu0 %v616
        %1468 = vmatprep.subr.mxu0 %v620
        %1469 = vmatpush1.msra.mxu0 %v619
        %1470 = vmatprep.subr.mxu0 %v623
        %1471 = vmatpush1.msra.mxu0 %v622
        %1472 = vmatprep.subr.mxu0 %v626
        %1473 = vmatpush1.msra.mxu0 %v625
        %1474 = vmatprep.subr.mxu0 %v629
        %1475 = vmatpush1.msra.mxu0 %v628
        %1476 = vmatprep.subr.mxu0 %v632
        %1477 = vmatpush1.msra.mxu0 %v631
        %1478 = vmatprep.subr.mxu0 %v635
        %1479 = vmatpush1.msra.mxu0 %v634
        %1480 = vmatprep.subr.mxu0 %v638
        %1481 = vmatpush1.msra.mxu0 %v637
        %1482 = vmatprep.subr.mxu0 %v641
        %1483 = vmatpush1.msra.mxu0 %v640
        %1484 = vmatprep.subr.mxu0 %v644
        %1485 = vmatpush1.msra.mxu0 %v643
        %1486 = vmatprep.subr.mxu0 0.0
        %1487 = vmatpush1.msra.mxu0 0.0
        %1488 = vmatprep.subr.mxu0 0.0
        %1489 = vmatpush1.msra.mxu0 0.0
        %1490 = vmatprep.subr.mxu0 0.0
        %1491 = vmatpush1.msra.mxu0 0.0
        %1492 = vmatprep.subr.mxu0 0.0
        %1493 = vmatpush1.msra.mxu0 0.0
        %1494 = vmatprep.subr.mxu0 0.0
        %1495 = vmatpush1.msra.mxu0 0.0
        %1496 = vmatprep.subr.mxu0 0.0
        %1497 = vmatpush1.msra.mxu0 0.0
        %1498 = vmatprep.subr.mxu0 0.0
        %1499 = vmatpush1.msra.mxu0 0.0
        %1500 = vmatprep.subr.mxu0 0.0
        %1501 = vmatpush1.msra.mxu0 0.0
        %1502 = vmatprep.subr.mxu0 0.0
        %1503 = vmatpush1.msra.mxu0 0.0
        %1504 = vmatprep.subr.mxu0 0.0
        %1505 = vmatpush1.msra.mxu0 0.0
        %1506 = vmatprep.subr.mxu0 0.0
        %1507 = vmatpush1.msra.mxu0 0.0
        %1508 = vmatprep.subr.mxu0 0.0
        %1509 = vmatpush1.msra.mxu0 0.0
        %1510 = vmatprep.subr.mxu0 0.0
        %1511 = vmatpush1.msra.mxu0 0.0
        %1512 = vmatprep.subr.mxu0 0.0
        %1513 = vmatpush1.msra.mxu0 0.0
        %1514 = vmatprep.subr.mxu0 0.0
        %1515 = vmatpush1.msra.mxu0 0.0
        %1516 = vmatprep.subr.mxu0 0.0
        %1517 = vmatpush1.msra.mxu0 0.0
        %1518 = vmatprep.mubr.f32.mxu0 0.0
        %1519 = vmatmul.mubr.f32.gmra.mrb[0].mxu0 %v1452
        %v1520 = vpop.f32.mrb[0].mxu0
        %v1521 = vadd.f32 0.0, %v1520
        %v1522 = vpop.f32.mrb[0].mxu0
        %v1523 = vadd.f32 0.0, %v1522
        %1524 = vdwg.mxu0
        %1525 = vmatprep.subr.mxu0 0.0
        %1526 = vmatpush1.msra.mxu0 %v600
        %1527 = vmatprep.subr.mxu0 0.0
        %1528 = vmatpush1.msra.mxu0 %v603
        %1529 = vmatprep.subr.mxu0 0.0
        %1530 = vmatpush1.msra.mxu0 %v606
        %1531 = vmatprep.subr.mxu0 0.0
        %1532 = vmatpush1.msra.mxu0 %v609
        %1533 = vmatprep.subr.mxu0 0.0
        %1534 = vmatpush1.msra.mxu0 %v612
        %1535 = vmatprep.subr.mxu0 0.0
        %1536 = vmatpush1.msra.mxu0 %v615
        %1537 = vmatprep.subr.mxu0 0.0
        %1538 = vmatpush1.msra.mxu0 %v618
        %1539 = vmatprep.subr.mxu0 0.0
        %1540 = vmatpush1.msra.mxu0 %v621
        %1541 = vmatprep.subr.mxu0 0.0
        %1542 = vmatpush1.msra.mxu0 %v624
        %1543 = vmatprep.subr.mxu0 0.0
        %1544 = vmatpush1.msra.mxu0 %v627
        %1545 = vmatprep.subr.mxu0 0.0
        %1546 = vmatpush1.msra.mxu0 %v630
        %1547 = vmatprep.subr.mxu0 0.0
        %1548 = vmatpush1.msra.mxu0 %v633
        %1549 = vmatprep.subr.mxu0 0.0
        %1550 = vmatpush1.msra.mxu0 %v636
        %1551 = vmatprep.subr.mxu0 0.0
        %1552 = vmatpush1.msra.mxu0 %v639
        %1553 = vmatprep.subr.mxu0 0.0
        %1554 = vmatpush1.msra.mxu0 %v642
        %1555 = vmatprep.subr.mxu0 0.0
        %1556 = vmatpush1.msra.mxu0 %v645
        %1557 = vmatprep.subr.mxu0 0.0
        %1558 = vmatpush1.msra.mxu0 0.0
        %1559 = vmatprep.subr.mxu0 0.0
        %1560 = vmatpush1.msra.mxu0 0.0
        %1561 = vmatprep.subr.mxu0 0.0
        %1562 = vmatpush1.msra.mxu0 0.0
        %1563 = vmatprep.subr.mxu0 0.0
        %1564 = vmatpush1.msra.mxu0 0.0
        %1565 = vmatprep.subr.mxu0 0.0
        %1566 = vmatpush1.msra.mxu0 0.0
        %1567 = vmatprep.subr.mxu0 0.0
        %1568 = vmatpush1.msra.mxu0 0.0
        %1569 = vmatprep.subr.mxu0 0.0
        %1570 = vmatpush1.msra.mxu0 0.0
        %1571 = vmatprep.subr.mxu0 0.0
        %1572 = vmatpush1.msra.mxu0 0.0
        %1573 = vmatprep.subr.mxu0 0.0
        %1574 = vmatpush1.msra.mxu0 0.0
        %1575 = vmatprep.subr.mxu0 0.0
        %1576 = vmatpush1.msra.mxu0 0.0
        %1577 = vmatprep.subr.mxu0 0.0
        %1578 = vmatpush1.msra.mxu0 0.0
        %1579 = vmatprep.subr.mxu0 0.0
        %1580 = vmatpush1.msra.mxu0 0.0
        %1581 = vmatprep.subr.mxu0 0.0
        %1582 = vmatpush1.msra.mxu0 0.0
        %1583 = vmatprep.subr.mxu0 0.0
        %1584 = vmatpush1.msra.mxu0 0.0
        %1585 = vmatprep.subr.mxu0 0.0
        %1586 = vmatpush1.msra.mxu0 0.0
        %1587 = vmatprep.subr.mxu0 0.0
        %1588 = vmatpush1.msra.mxu0 0.0
        %1589 = vmatprep.mubr.f32.mxu0 0.0
        %1590 = vmatmul.mubr.f32.gmra.mrb[0].mxu0 %v1452
        %v1591 = vpop.f32.mrb[0].mxu0
        %v1592 = vadd.f32 0.0, %v1591
        %v1593 = vpop.f32.mrb[0].mxu0
        %1594 = vdwg.mxu0
        %v1596 = vrot.slane %v1521, 6
        %v1597 = vrot.slane %v1521, 7
        %v1598 = vrot.slane %v1521, 1
        %v1599 = vrot.slane %v1521, 2
        %v1600 = vrot.slane %v1521, 3
        %v1601 = vrot.slane %v1521, 4
        %v1602 = vrot.slane %v1521, 5
        %v1611 = vadd.f32 %v447, %v1596
        %v1612 = vadd.f32 %v453, %v1597
        %v1613 = vadd.f32 %v459, %v1521
        %v1614 = vadd.f32 %v465, %v1598
        %v1615 = vadd.f32 %v471, %v1599
        %v1616 = vadd.f32 %v477, %v1600
        %v1617 = vadd.f32 %v483, %v1601
        %v1618 = vadd.f32 %v489, %v1602
        %v1619 = vxor.u32 %v1611, 2147483648
        %v1620 = vxor.u32 %v1612, 2147483648
        %v1621 = vxor.u32 %v1613, 2147483648
        %v1622 = vxor.u32 %v1614, 2147483648
        %v1623 = vxor.u32 %v1615, 2147483648
        %v1624 = vxor.u32 %v1616, 2147483648
        %v1625 = vxor.u32 %v1617, 2147483648
        %v1626 = vxor.u32 %v1618, 2147483648
        %v1627 = vmul.f32 %v1619, 1.442695
        %v1628 = vpow.pop %v1627
        %v1629 = vmul.f32 %v1620, 1.442695
        %v1630 = vpow.pop %v1629
        %v1631 = vmul.f32 %v1621, 1.442695
        %v1632 = vpow.pop %v1631
        %v1633 = vmul.f32 %v1622, 1.442695
        %v1634 = vpow.pop %v1633
        %v1635 = vmul.f32 %v1623, 1.442695
        %v1636 = vpow.pop %v1635
        %v1637 = vmul.f32 %v1624, 1.442695
        %v1638 = vpow.pop %v1637
        %v1639 = vmul.f32 %v1625, 1.442695
        %v1640 = vpow.pop %v1639
        %v1641 = vmul.f32 %v1626, 1.442695
        %v1642 = vpow.pop %v1641
        %v1643 = vadd.f32 %v1628, 1.0
        %v1644 = vadd.f32 %v1630, 1.0
        %v1645 = vadd.f32 %v1632, 1.0
        %v1646 = vadd.f32 %v1634, 1.0
        %v1647 = vadd.f32 %v1636, 1.0
        %v1648 = vadd.f32 %v1638, 1.0
        %v1649 = vadd.f32 %v1640, 1.0
        %v1650 = vadd.f32 %v1642, 1.0
        %v1651 = vrcp.pop %v1643
        %v1652 = vmul.f32 1.0, %v1651
        %v1653 = vrcp.pop %v1644
        %v1654 = vmul.f32 1.0, %v1653
        %v1655 = vrcp.pop %v1645
        %v1656 = vmul.f32 1.0, %v1655
        %v1657 = vrcp.pop %v1646
        %v1658 = vmul.f32 1.0, %v1657
        %v1659 = vrcp.pop %v1647
        %v1660 = vmul.f32 1.0, %v1659
        %v1661 = vrcp.pop %v1648
        %v1662 = vmul.f32 1.0, %v1661
        %v1663 = vrcp.pop %v1649
        %v1664 = vmul.f32 1.0, %v1663
        %v1665 = vrcp.pop %v1650
        %v1666 = vmul.f32 1.0, %v1665
        %v1668 = vrot.slane %v1523, 6
        %v1669 = vrot.slane %v1523, 7
        %v1670 = vrot.slane %v1523, 1
        %v1671 = vrot.slane %v1523, 2
        %v1672 = vrot.slane %v1523, 3
        %v1673 = vrot.slane %v1523, 4
        %v1674 = vrot.slane %v1523, 5
        %v1683 = vadd.f32 %v449, %v1668
        %v1684 = vadd.f32 %v455, %v1669
        %v1685 = vadd.f32 %v461, %v1523
        %v1686 = vadd.f32 %v467, %v1670
        %v1687 = vadd.f32 %v473, %v1671
        %v1688 = vadd.f32 %v479, %v1672
        %v1689 = vadd.f32 %v485, %v1673
        %v1690 = vadd.f32 %v491, %v1674
        %v1691 = vxor.u32 %v1683, 2147483648
        %v1692 = vxor.u32 %v1684, 2147483648
        %v1693 = vxor.u32 %v1685, 2147483648
        %v1694 = vxor.u32 %v1686, 2147483648
        %v1695 = vxor.u32 %v1687, 2147483648
        %v1696 = vxor.u32 %v1688, 2147483648
        %v1697 = vxor.u32 %v1689, 2147483648
        %v1698 = vxor.u32 %v1690, 2147483648
        %v1699 = vmul.f32 %v1691, 1.442695
        %v1700 = vpow.pop %v1699
        %v1701 = vmul.f32 %v1692, 1.442695
        %v1702 = vpow.pop %v1701
        %v1703 = vmul.f32 %v1693, 1.442695
        %v1704 = vpow.pop %v1703
        %v1705 = vmul.f32 %v1694, 1.442695
        %v1706 = vpow.pop %v1705
        %v1707 = vmul.f32 %v1695, 1.442695
        %v1708 = vpow.pop %v1707
        %v1709 = vmul.f32 %v1696, 1.442695
        %v1710 = vpow.pop %v1709
        %v1711 = vmul.f32 %v1697, 1.442695
        %v1712 = vpow.pop %v1711
        %v1713 = vmul.f32 %v1698, 1.442695
        %v1714 = vpow.pop %v1713
        %v1715 = vadd.f32 %v1700, 1.0
        %v1716 = vadd.f32 %v1702, 1.0
        %v1717 = vadd.f32 %v1704, 1.0
        %v1718 = vadd.f32 %v1706, 1.0
        %v1719 = vadd.f32 %v1708, 1.0
        %v1720 = vadd.f32 %v1710, 1.0
        %v1721 = vadd.f32 %v1712, 1.0
        %v1722 = vadd.f32 %v1714, 1.0
        %v1723 = vrcp.pop %v1715
        %v1724 = vmul.f32 1.0, %v1723
        %v1725 = vrcp.pop %v1716
        %v1726 = vmul.f32 1.0, %v1725
        %v1727 = vrcp.pop %v1717
        %v1728 = vmul.f32 1.0, %v1727
        %v1729 = vrcp.pop %v1718
        %v1730 = vmul.f32 1.0, %v1729
        %v1731 = vrcp.pop %v1719
        %v1732 = vmul.f32 1.0, %v1731
        %v1733 = vrcp.pop %v1720
        %v1734 = vmul.f32 1.0, %v1733
        %v1735 = vrcp.pop %v1721
        %v1736 = vmul.f32 1.0, %v1735
        %v1737 = vrcp.pop %v1722
        %v1738 = vmul.f32 1.0, %v1737
        %v1739 = vadd.f32 %v1592, %v651
        %v1741 = vrot.slane %v1739, 6
        %v1742 = vrot.slane %v1739, 7
        %v1743 = vrot.slane %v1739, 1
        %v1744 = vrot.slane %v1739, 2
        %v1745 = vrot.slane %v1739, 3
        %v1746 = vrot.slane %v1739, 4
        %v1747 = vrot.slane %v1739, 5
        %v1756 = vmul.f32 %v1652, %v1741
        %v1757 = vmul.f32 %v1654, %v1742
        %v1758 = vmul.f32 %v1656, %v1739
        %v1759 = vmul.f32 %v1658, %v1743
        %v1760 = vmul.f32 %v1660, %v1744
        %v1761 = vmul.f32 %v1662, %v1745
        %v1762 = vmul.f32 %v1664, %v1746
        %v1763 = vmul.f32 %v1666, %v1747
        %v1764 = vadd.f32 %v560, %v1756
        %v1765 = vadd.f32 %v565, %v1757
        %v1766 = vadd.f32 %v570, %v1758
        %v1767 = vadd.f32 %v575, %v1759
        %v1768 = vadd.f32 %v580, %v1760
        %v1769 = vadd.f32 %v585, %v1761
        %v1770 = vadd.f32 %v590, %v1762
        %v1771 = vadd.f32 %v595, %v1763
        %v1772 = vtanh.pop %v1764
        %v1773 = vtanh.pop %v1765
        %v1774 = vtanh.pop %v1766
        %v1775 = vtanh.pop %v1767
        %v1776 = vtanh.pop %v1768
        %v1777 = vtanh.pop %v1769
        %v1778 = vtanh.pop %v1770
        %v1779 = vtanh.pop %v1771
        %v1780 = vsub.f32 1.0, %v1724
        %v1781 = vsub.f32 1.0, %v1726
        %v1782 = vsub.f32 1.0, %v1728
        %v1783 = vsub.f32 1.0, %v1730
        %v1784 = vsub.f32 1.0, %v1732
        %v1785 = vsub.f32 1.0, %v1734
        %v1786 = vsub.f32 1.0, %v1736
        %v1787 = vsub.f32 1.0, %v1738
        %v1788 = vmul.f32 %v1780, %v1772
        %v1789 = vmul.f32 %v1781, %v1773
        %v1790 = vmul.f32 %v1782, %v1774
        %v1791 = vmul.f32 %v1783, %v1775
        %v1792 = vmul.f32 %v1784, %v1776
        %v1793 = vmul.f32 %v1785, %v1777
        %v1794 = vmul.f32 %v1786, %v1778
        %v1795 = vmul.f32 %v1787, %v1779
        %v1796 = vrot.slane %v1423, 7
        %v1797 = vrot.slane %v1424, 7
        %v1798 = vrot.slane %v1426, 7
        %v1799 = vrot.slane %v1427, 7
        %v1800 = vrot.slane %v1428, 7
        %v1801 = vrot.slane %v1429, 7
        %v1802 = vrot.slane %v1430, 7
        %v1811 = vmul.f32 %v1724, %v1796
        %v1812 = vmul.f32 %v1726, %v1797
        %v1813 = vmul.f32 %v1728, %v1441
        %v1814 = vmul.f32 %v1730, %v1798
        %v1815 = vmul.f32 %v1732, %v1799
        %v1816 = vmul.f32 %v1734, %v1800
        %v1817 = vmul.f32 %v1736, %v1801
        %v1818 = vmul.f32 %v1738, %v1802
        %v1819 = vadd.f32 %v1788, %v1811
        %v1820 = vadd.f32 %v1789, %v1812
        %v1821 = vadd.f32 %v1790, %v1813
        %v1822 = vadd.f32 %v1791, %v1814
        %v1823 = vadd.f32 %v1792, %v1815
        %v1824 = vadd.f32 %v1793, %v1816
        %v1825 = vadd.f32 %v1794, %v1817
        %v1826 = vadd.f32 %v1795, %v1818
        %v1835 = vrot.slane %v1819, 2
        %v1836 = vrot.slane %v1820, 1
        %v1837 = vsel %vm1037, %v1836, %v1835
        %v1838 = vsel %vm1040, %v1821, %v1837
        %v1839 = vrot.slane %v1822, 7
        %v1840 = vsel %vm1043, %v1839, %v1838
        %v1841 = vrot.slane %v1823, 6
        %v1842 = vsel %vm1046, %v1841, %v1840
        %v1843 = vrot.slane %v1824, 5
        %v1844 = vsel %vm1049, %v1843, %v1842
        %v1845 = vrot.slane %v1825, 4
        %v1846 = vsel %vm1052, %v1845, %v1844
        %v1847 = vrot.slane %v1826, 3
        %v1848 = vsel %vm1055, %v1847, %v1846
        %1850 = vmatprep.subr.mxu0 %v599
        %1851 = vmatpush1.msra.mxu0 %v598
        %1852 = vmatprep.subr.mxu0 %v602
        %1853 = vmatpush1.msra.mxu0 %v601
        %1854 = vmatprep.subr.mxu0 %v605
        %1855 = vmatpush1.msra.mxu0 %v604
        %1856 = vmatprep.subr.mxu0 %v608
        %1857 = vmatpush1.msra.mxu0 %v607
        %1858 = vmatprep.subr.mxu0 %v611
        %1859 = vmatpush1.msra.mxu0 %v610
        %1860 = vmatprep.subr.mxu0 %v614
        %1861 = vmatpush1.msra.mxu0 %v613
        %1862 = vmatprep.subr.mxu0 %v617
        %1863 = vmatpush1.msra.mxu0 %v616
        %1864 = vmatprep.subr.mxu0 %v620
        %1865 = vmatpush1.msra.mxu0 %v619
        %1866 = vmatprep.subr.mxu0 %v623
        %1867 = vmatpush1.msra.mxu0 %v622
        %1868 = vmatprep.subr.mxu0 %v626
        %1869 = vmatpush1.msra.mxu0 %v625
        %1870 = vmatprep.subr.mxu0 %v629
        %1871 = vmatpush1.msra.mxu0 %v628
        %1872 = vmatprep.subr.mxu0 %v632
        %1873 = vmatpush1.msra.mxu0 %v631
        %1874 = vmatprep.subr.mxu0 %v635
        %1875 = vmatpush1.msra.mxu0 %v634
        %1876 = vmatprep.subr.mxu0 %v638
        %1877 = vmatpush1.msra.mxu0 %v637
        %1878 = vmatprep.subr.mxu0 %v641
        %1879 = vmatpush1.msra.mxu0 %v640
        %1880 = vmatprep.subr.mxu0 %v644
        %1881 = vmatpush1.msra.mxu0 %v643
        %1882 = vmatprep.subr.mxu0 0.0
        %1883 = vmatpush1.msra.mxu0 0.0
        %1884 = vmatprep.subr.mxu0 0.0
        %1885 = vmatpush1.msra.mxu0 0.0
        %1886 = vmatprep.subr.mxu0 0.0
        %1887 = vmatpush1.msra.mxu0 0.0
        %1888 = vmatprep.subr.mxu0 0.0
        %1889 = vmatpush1.msra.mxu0 0.0
        %1890 = vmatprep.subr.mxu0 0.0
        %1891 = vmatpush1.msra.mxu0 0.0
        %1892 = vmatprep.subr.mxu0 0.0
        %1893 = vmatpush1.msra.mxu0 0.0
        %1894 = vmatprep.subr.mxu0 0.0
        %1895 = vmatpush1.msra.mxu0 0.0
        %1896 = vmatprep.subr.mxu0 0.0
        %1897 = vmatpush1.msra.mxu0 0.0
        %1898 = vmatprep.subr.mxu0 0.0
        %1899 = vmatpush1.msra.mxu0 0.0
        %1900 = vmatprep.subr.mxu0 0.0
        %1901 = vmatpush1.msra.mxu0 0.0
        %1902 = vmatprep.subr.mxu0 0.0
        %1903 = vmatpush1.msra.mxu0 0.0
        %1904 = vmatprep.subr.mxu0 0.0
        %1905 = vmatpush1.msra.mxu0 0.0
        %1906 = vmatprep.subr.mxu0 0.0
        %1907 = vmatpush1.msra.mxu0 0.0
        %1908 = vmatprep.subr.mxu0 0.0
        %1909 = vmatpush1.msra.mxu0 0.0
        %1910 = vmatprep.subr.mxu0 0.0
        %1911 = vmatpush1.msra.mxu0 0.0
        %1912 = vmatprep.subr.mxu0 0.0
        %1913 = vmatpush1.msra.mxu0 0.0
        %1914 = vmatprep.mubr.f32.mxu0 0.0
        %1915 = vmatmul.mubr.f32.gmra.mrb[0].mxu0 %v1848
        %v1916 = vpop.f32.mrb[0].mxu0
        %v1917 = vadd.f32 0.0, %v1916
        %v1918 = vpop.f32.mrb[0].mxu0
        %v1919 = vadd.f32 0.0, %v1918
        %1920 = vdwg.mxu0
        %1921 = vmatprep.subr.mxu0 0.0
        %1922 = vmatpush1.msra.mxu0 %v600
        %1923 = vmatprep.subr.mxu0 0.0
        %1924 = vmatpush1.msra.mxu0 %v603
        %1925 = vmatprep.subr.mxu0 0.0
        %1926 = vmatpush1.msra.mxu0 %v606
        %1927 = vmatprep.subr.mxu0 0.0
        %1928 = vmatpush1.msra.mxu0 %v609
        %1929 = vmatprep.subr.mxu0 0.0
        %1930 = vmatpush1.msra.mxu0 %v612
        %1931 = vmatprep.subr.mxu0 0.0
        %1932 = vmatpush1.msra.mxu0 %v615
        %1933 = vmatprep.subr.mxu0 0.0
        %1934 = vmatpush1.msra.mxu0 %v618
        %1935 = vmatprep.subr.mxu0 0.0
        %1936 = vmatpush1.msra.mxu0 %v621
        %1937 = vmatprep.subr.mxu0 0.0
        %1938 = vmatpush1.msra.mxu0 %v624
        %1939 = vmatprep.subr.mxu0 0.0
        %1940 = vmatpush1.msra.mxu0 %v627
        %1941 = vmatprep.subr.mxu0 0.0
        %1942 = vmatpush1.msra.mxu0 %v630
        %1943 = vmatprep.subr.mxu0 0.0
        %1944 = vmatpush1.msra.mxu0 %v633
        %1945 = vmatprep.subr.mxu0 0.0
        %1946 = vmatpush1.msra.mxu0 %v636
        %1947 = vmatprep.subr.mxu0 0.0
        %1948 = vmatpush1.msra.mxu0 %v639
        %1949 = vmatprep.subr.mxu0 0.0
        %1950 = vmatpush1.msra.mxu0 %v642
        %1951 = vmatprep.subr.mxu0 0.0
        %1952 = vmatpush1.msra.mxu0 %v645
        %1953 = vmatprep.subr.mxu0 0.0
        %1954 = vmatpush1.msra.mxu0 0.0
        %1955 = vmatprep.subr.mxu0 0.0
        %1956 = vmatpush1.msra.mxu0 0.0
        %1957 = vmatprep.subr.mxu0 0.0
        %1958 = vmatpush1.msra.mxu0 0.0
        %1959 = vmatprep.subr.mxu0 0.0
        %1960 = vmatpush1.msra.mxu0 0.0
        %1961 = vmatprep.subr.mxu0 0.0
        %1962 = vmatpush1.msra.mxu0 0.0
        %1963 = vmatprep.subr.mxu0 0.0
        %1964 = vmatpush1.msra.mxu0 0.0
        %1965 = vmatprep.subr.mxu0 0.0
        %1966 = vmatpush1.msra.mxu0 0.0
        %1967 = vmatprep.subr.mxu0 0.0
        %1968 = vmatpush1.msra.mxu0 0.0
        %1969 = vmatprep.subr.mxu0 0.0
        %1970 = vmatpush1.msra.mxu0 0.0
        %1971 = vmatprep.subr.mxu0 0.0
        %1972 = vmatpush1.msra.mxu0 0.0
        %1973 = vmatprep.subr.mxu0 0.0
        %1974 = vmatpush1.msra.mxu0 0.0
        %1975 = vmatprep.subr.mxu0 0.0
        %1976 = vmatpush1.msra.mxu0 0.0
        %1977 = vmatprep.subr.mxu0 0.0
        %1978 = vmatpush1.msra.mxu0 0.0
        %1979 = vmatprep.subr.mxu0 0.0
        %1980 = vmatpush1.msra.mxu0 0.0
        %1981 = vmatprep.subr.mxu0 0.0
        %1982 = vmatpush1.msra.mxu0 0.0
        %1983 = vmatprep.subr.mxu0 0.0
        %1984 = vmatpush1.msra.mxu0 0.0
        %1985 = vmatprep.mubr.f32.mxu0 0.0
        %1986 = vmatmul.mubr.f32.gmra.mrb[0].mxu0 %v1848
        %v1987 = vpop.f32.mrb[0].mxu0
        %v1988 = vadd.f32 0.0, %v1987
        %v1989 = vpop.f32.mrb[0].mxu0
        %1990 = vdwg.mxu0
        %v1992 = vrot.slane %v1917, 5
        %v1993 = vrot.slane %v1917, 6
        %v1994 = vrot.slane %v1917, 7
        %v1995 = vrot.slane %v1917, 1
        %v1996 = vrot.slane %v1917, 2
        %v1997 = vrot.slane %v1917, 3
        %v1998 = vrot.slane %v1917, 4
        %v2007 = vadd.f32 %v447, %v1992
        %v2008 = vadd.f32 %v453, %v1993
        %v2009 = vadd.f32 %v459, %v1994
        %v2010 = vadd.f32 %v465, %v1917
        %v2011 = vadd.f32 %v471, %v1995
        %v2012 = vadd.f32 %v477, %v1996
        %v2013 = vadd.f32 %v483, %v1997
        %v2014 = vadd.f32 %v489, %v1998
        %v2015 = vxor.u32 %v2007, 2147483648
        %v2016 = vxor.u32 %v2008, 2147483648
        %v2017 = vxor.u32 %v2009, 2147483648
        %v2018 = vxor.u32 %v2010, 2147483648
        %v2019 = vxor.u32 %v2011, 2147483648
        %v2020 = vxor.u32 %v2012, 2147483648
        %v2021 = vxor.u32 %v2013, 2147483648
        %v2022 = vxor.u32 %v2014, 2147483648
        %v2023 = vmul.f32 %v2015, 1.442695
        %v2024 = vpow.pop %v2023
        %v2025 = vmul.f32 %v2016, 1.442695
        %v2026 = vpow.pop %v2025
        %v2027 = vmul.f32 %v2017, 1.442695
        %v2028 = vpow.pop %v2027
        %v2029 = vmul.f32 %v2018, 1.442695
        %v2030 = vpow.pop %v2029
        %v2031 = vmul.f32 %v2019, 1.442695
        %v2032 = vpow.pop %v2031
        %v2033 = vmul.f32 %v2020, 1.442695
        %v2034 = vpow.pop %v2033
        %v2035 = vmul.f32 %v2021, 1.442695
        %v2036 = vpow.pop %v2035
        %v2037 = vmul.f32 %v2022, 1.442695
        %v2038 = vpow.pop %v2037
        %v2039 = vadd.f32 %v2024, 1.0
        %v2040 = vadd.f32 %v2026, 1.0
        %v2041 = vadd.f32 %v2028, 1.0
        %v2042 = vadd.f32 %v2030, 1.0
        %v2043 = vadd.f32 %v2032, 1.0
        %v2044 = vadd.f32 %v2034, 1.0
        %v2045 = vadd.f32 %v2036, 1.0
        %v2046 = vadd.f32 %v2038, 1.0
        %v2047 = vrcp.pop %v2039
        %v2048 = vmul.f32 1.0, %v2047
        %v2049 = vrcp.pop %v2040
        %v2050 = vmul.f32 1.0, %v2049
        %v2051 = vrcp.pop %v2041
        %v2052 = vmul.f32 1.0, %v2051
        %v2053 = vrcp.pop %v2042
        %v2054 = vmul.f32 1.0, %v2053
        %v2055 = vrcp.pop %v2043
        %v2056 = vmul.f32 1.0, %v2055
        %v2057 = vrcp.pop %v2044
        %v2058 = vmul.f32 1.0, %v2057
        %v2059 = vrcp.pop %v2045
        %v2060 = vmul.f32 1.0, %v2059
        %v2061 = vrcp.pop %v2046
        %v2062 = vmul.f32 1.0, %v2061
        %v2064 = vrot.slane %v1919, 5
        %v2065 = vrot.slane %v1919, 6
        %v2066 = vrot.slane %v1919, 7
        %v2067 = vrot.slane %v1919, 1
        %v2068 = vrot.slane %v1919, 2
        %v2069 = vrot.slane %v1919, 3
        %v2070 = vrot.slane %v1919, 4
        %v2079 = vadd.f32 %v449, %v2064
        %v2080 = vadd.f32 %v455, %v2065
        %v2081 = vadd.f32 %v461, %v2066
        %v2082 = vadd.f32 %v467, %v1919
        %v2083 = vadd.f32 %v473, %v2067
        %v2084 = vadd.f32 %v479, %v2068
        %v2085 = vadd.f32 %v485, %v2069
        %v2086 = vadd.f32 %v491, %v2070
        %v2087 = vxor.u32 %v2079, 2147483648
        %v2088 = vxor.u32 %v2080, 2147483648
        %v2089 = vxor.u32 %v2081, 2147483648
        %v2090 = vxor.u32 %v2082, 2147483648
        %v2091 = vxor.u32 %v2083, 2147483648
        %v2092 = vxor.u32 %v2084, 2147483648
        %v2093 = vxor.u32 %v2085, 2147483648
        %v2094 = vxor.u32 %v2086, 2147483648
        %v2095 = vmul.f32 %v2087, 1.442695
        %v2096 = vpow.pop %v2095
        %v2097 = vmul.f32 %v2088, 1.442695
        %v2098 = vpow.pop %v2097
        %v2099 = vmul.f32 %v2089, 1.442695
        %v2100 = vpow.pop %v2099
        %v2101 = vmul.f32 %v2090, 1.442695
        %v2102 = vpow.pop %v2101
        %v2103 = vmul.f32 %v2091, 1.442695
        %v2104 = vpow.pop %v2103
        %v2105 = vmul.f32 %v2092, 1.442695
        %v2106 = vpow.pop %v2105
        %v2107 = vmul.f32 %v2093, 1.442695
        %v2108 = vpow.pop %v2107
        %v2109 = vmul.f32 %v2094, 1.442695
        %v2110 = vpow.pop %v2109
        %v2111 = vadd.f32 %v2096, 1.0
        %v2112 = vadd.f32 %v2098, 1.0
        %v2113 = vadd.f32 %v2100, 1.0
        %v2114 = vadd.f32 %v2102, 1.0
        %v2115 = vadd.f32 %v2104, 1.0
        %v2116 = vadd.f32 %v2106, 1.0
        %v2117 = vadd.f32 %v2108, 1.0
        %v2118 = vadd.f32 %v2110, 1.0
        %v2119 = vrcp.pop %v2111
        %v2120 = vmul.f32 1.0, %v2119
        %v2121 = vrcp.pop %v2112
        %v2122 = vmul.f32 1.0, %v2121
        %v2123 = vrcp.pop %v2113
        %v2124 = vmul.f32 1.0, %v2123
        %v2125 = vrcp.pop %v2114
        %v2126 = vmul.f32 1.0, %v2125
        %v2127 = vrcp.pop %v2115
        %v2128 = vmul.f32 1.0, %v2127
        %v2129 = vrcp.pop %v2116
        %v2130 = vmul.f32 1.0, %v2129
        %v2131 = vrcp.pop %v2117
        %v2132 = vmul.f32 1.0, %v2131
        %v2133 = vrcp.pop %v2118
        %v2134 = vmul.f32 1.0, %v2133
        %v2135 = vadd.f32 %v1988, %v651
        %v2137 = vrot.slane %v2135, 5
        %v2138 = vrot.slane %v2135, 6
        %v2139 = vrot.slane %v2135, 7
        %v2140 = vrot.slane %v2135, 1
        %v2141 = vrot.slane %v2135, 2
        %v2142 = vrot.slane %v2135, 3
        %v2143 = vrot.slane %v2135, 4
        %v2152 = vmul.f32 %v2048, %v2137
        %v2153 = vmul.f32 %v2050, %v2138
        %v2154 = vmul.f32 %v2052, %v2139
        %v2155 = vmul.f32 %v2054, %v2135
        %v2156 = vmul.f32 %v2056, %v2140
        %v2157 = vmul.f32 %v2058, %v2141
        %v2158 = vmul.f32 %v2060, %v2142
        %v2159 = vmul.f32 %v2062, %v2143
        %v2160 = vadd.f32 %v560, %v2152
        %v2161 = vadd.f32 %v565, %v2153
        %v2162 = vadd.f32 %v570, %v2154
        %v2163 = vadd.f32 %v575, %v2155
        %v2164 = vadd.f32 %v580, %v2156
        %v2165 = vadd.f32 %v585, %v2157
        %v2166 = vadd.f32 %v590, %v2158
        %v2167 = vadd.f32 %v595, %v2159
        %v2168 = vtanh.pop %v2160
        %v2169 = vtanh.pop %v2161
        %v2170 = vtanh.pop %v2162
        %v2171 = vtanh.pop %v2163
        %v2172 = vtanh.pop %v2164
        %v2173 = vtanh.pop %v2165
        %v2174 = vtanh.pop %v2166
        %v2175 = vtanh.pop %v2167
        %v2176 = vsub.f32 1.0, %v2120
        %v2177 = vsub.f32 1.0, %v2122
        %v2178 = vsub.f32 1.0, %v2124
        %v2179 = vsub.f32 1.0, %v2126
        %v2180 = vsub.f32 1.0, %v2128
        %v2181 = vsub.f32 1.0, %v2130
        %v2182 = vsub.f32 1.0, %v2132
        %v2183 = vsub.f32 1.0, %v2134
        %v2184 = vmul.f32 %v2176, %v2168
        %v2185 = vmul.f32 %v2177, %v2169
        %v2186 = vmul.f32 %v2178, %v2170
        %v2187 = vmul.f32 %v2179, %v2171
        %v2188 = vmul.f32 %v2180, %v2172
        %v2189 = vmul.f32 %v2181, %v2173
        %v2190 = vmul.f32 %v2182, %v2174
        %v2191 = vmul.f32 %v2183, %v2175
        %v2192 = vrot.slane %v1819, 7
        %v2193 = vrot.slane %v1820, 7
        %v2194 = vrot.slane %v1821, 7
        %v2195 = vrot.slane %v1823, 7
        %v2196 = vrot.slane %v1824, 7
        %v2197 = vrot.slane %v1825, 7
        %v2198 = vrot.slane %v1826, 7
        %v2207 = vmul.f32 %v2120, %v2192
        %v2208 = vmul.f32 %v2122, %v2193
        %v2209 = vmul.f32 %v2124, %v2194
        %v2210 = vmul.f32 %v2126, %v1839
        %v2211 = vmul.f32 %v2128, %v2195
        %v2212 = vmul.f32 %v2130, %v2196
        %v2213 = vmul.f32 %v2132, %v2197
        %v2214 = vmul.f32 %v2134, %v2198
        %v2215 = vadd.f32 %v2184, %v2207
        %v2216 = vadd.f32 %v2185, %v2208
        %v2217 = vadd.f32 %v2186, %v2209
        %v2218 = vadd.f32 %v2187, %v2210
        %v2219 = vadd.f32 %v2188, %v2211
        %v2220 = vadd.f32 %v2189, %v2212
        %v2221 = vadd.f32 %v2190, %v2213
        %v2222 = vadd.f32 %v2191, %v2214
        %v2231 = vrot.slane %v2215, 3
        %v2232 = vrot.slane %v2216, 2
        %v2233 = vsel %vm1037, %v2232, %v2231
        %v2234 = vrot.slane %v2217, 1
        %v2235 = vsel %vm1040, %v2234, %v2233
        %v2236 = vsel %vm1043, %v2218, %v2235
        %v2237 = vrot.slane %v2219, 7
        %v2238 = vsel %vm1046, %v2237, %v2236
        %v2239 = vrot.slane %v2220, 6
        %v2240 = vsel %vm1049, %v2239, %v2238
        %v2241 = vrot.slane %v2221, 5
        %v2242 = vsel %vm1052, %v2241, %v2240
        %v2243 = vrot.slane %v2222, 4
        %v2244 = vsel %vm1055, %v2243, %v2242
        %2246 = vmatprep.subr.mxu0 %v599
        %2247 = vmatpush1.msra.mxu0 %v598
        %2248 = vmatprep.subr.mxu0 %v602
        %2249 = vmatpush1.msra.mxu0 %v601
        %2250 = vmatprep.subr.mxu0 %v605
        %2251 = vmatpush1.msra.mxu0 %v604
        %2252 = vmatprep.subr.mxu0 %v608
        %2253 = vmatpush1.msra.mxu0 %v607
        %2254 = vmatprep.subr.mxu0 %v611
        %2255 = vmatpush1.msra.mxu0 %v610
        %2256 = vmatprep.subr.mxu0 %v614
        %2257 = vmatpush1.msra.mxu0 %v613
        %2258 = vmatprep.subr.mxu0 %v617
        %2259 = vmatpush1.msra.mxu0 %v616
        %2260 = vmatprep.subr.mxu0 %v620
        %2261 = vmatpush1.msra.mxu0 %v619
        %2262 = vmatprep.subr.mxu0 %v623
        %2263 = vmatpush1.msra.mxu0 %v622
        %2264 = vmatprep.subr.mxu0 %v626
        %2265 = vmatpush1.msra.mxu0 %v625
        %2266 = vmatprep.subr.mxu0 %v629
        %2267 = vmatpush1.msra.mxu0 %v628
        %2268 = vmatprep.subr.mxu0 %v632
        %2269 = vmatpush1.msra.mxu0 %v631
        %2270 = vmatprep.subr.mxu0 %v635
        %2271 = vmatpush1.msra.mxu0 %v634
        %2272 = vmatprep.subr.mxu0 %v638
        %2273 = vmatpush1.msra.mxu0 %v637
        %2274 = vmatprep.subr.mxu0 %v641
        %2275 = vmatpush1.msra.mxu0 %v640
        %2276 = vmatprep.subr.mxu0 %v644
        %2277 = vmatpush1.msra.mxu0 %v643
        %2278 = vmatprep.subr.mxu0 0.0
        %2279 = vmatpush1.msra.mxu0 0.0
        %2280 = vmatprep.subr.mxu0 0.0
        %2281 = vmatpush1.msra.mxu0 0.0
        %2282 = vmatprep.subr.mxu0 0.0
        %2283 = vmatpush1.msra.mxu0 0.0
        %2284 = vmatprep.subr.mxu0 0.0
        %2285 = vmatpush1.msra.mxu0 0.0
        %2286 = vmatprep.subr.mxu0 0.0
        %2287 = vmatpush1.msra.mxu0 0.0
        %2288 = vmatprep.subr.mxu0 0.0
        %2289 = vmatpush1.msra.mxu0 0.0
        %2290 = vmatprep.subr.mxu0 0.0
        %2291 = vmatpush1.msra.mxu0 0.0
        %2292 = vmatprep.subr.mxu0 0.0
        %2293 = vmatpush1.msra.mxu0 0.0
        %2294 = vmatprep.subr.mxu0 0.0
        %2295 = vmatpush1.msra.mxu0 0.0
        %2296 = vmatprep.subr.mxu0 0.0
        %2297 = vmatpush1.msra.mxu0 0.0
        %2298 = vmatprep.subr.mxu0 0.0
        %2299 = vmatpush1.msra.mxu0 0.0
        %2300 = vmatprep.subr.mxu0 0.0
        %2301 = vmatpush1.msra.mxu0 0.0
        %2302 = vmatprep.subr.mxu0 0.0
        %2303 = vmatpush1.msra.mxu0 0.0
        %2304 = vmatprep.subr.mxu0 0.0
        %2305 = vmatpush1.msra.mxu0 0.0
        %2306 = vmatprep.subr.mxu0 0.0
        %2307 = vmatpush1.msra.mxu0 0.0
        %2308 = vmatprep.subr.mxu0 0.0
        %2309 = vmatpush1.msra.mxu0 0.0
        %2310 = vmatprep.mubr.f32.mxu0 0.0
        %2311 = vmatmul.mubr.f32.gmra.mrb[0].mxu0 %v2244
        %v2312 = vpop.f32.mrb[0].mxu0
        %v2313 = vadd.f32 0.0, %v2312
        %v2314 = vpop.f32.mrb[0].mxu0
        %v2315 = vadd.f32 0.0, %v2314
        %2316 = vdwg.mxu0
        %2317 = vmatprep.subr.mxu0 0.0
        %2318 = vmatpush1.msra.mxu0 %v600
        %2319 = vmatprep.subr.mxu0 0.0
        %2320 = vmatpush1.msra.mxu0 %v603
        %2321 = vmatprep.subr.mxu0 0.0
        %2322 = vmatpush1.msra.mxu0 %v606
        %2323 = vmatprep.subr.mxu0 0.0
        %2324 = vmatpush1.msra.mxu0 %v609
        %2325 = vmatprep.subr.mxu0 0.0
        %2326 = vmatpush1.msra.mxu0 %v612
        %2327 = vmatprep.subr.mxu0 0.0
        %2328 = vmatpush1.msra.mxu0 %v615
        %2329 = vmatprep.subr.mxu0 0.0
        %2330 = vmatpush1.msra.mxu0 %v618
        %2331 = vmatprep.subr.mxu0 0.0
        %2332 = vmatpush1.msra.mxu0 %v621
        %2333 = vmatprep.subr.mxu0 0.0
        %2334 = vmatpush1.msra.mxu0 %v624
        %2335 = vmatprep.subr.mxu0 0.0
        %2336 = vmatpush1.msra.mxu0 %v627
        %2337 = vmatprep.subr.mxu0 0.0
        %2338 = vmatpush1.msra.mxu0 %v630
        %2339 = vmatprep.subr.mxu0 0.0
        %2340 = vmatpush1.msra.mxu0 %v633
        %2341 = vmatprep.subr.mxu0 0.0
        %2342 = vmatpush1.msra.mxu0 %v636
        %2343 = vmatprep.subr.mxu0 0.0
        %2344 = vmatpush1.msra.mxu0 %v639
        %2345 = vmatprep.subr.mxu0 0.0
        %2346 = vmatpush1.msra.mxu0 %v642
        %2347 = vmatprep.subr.mxu0 0.0
        %2348 = vmatpush1.msra.mxu0 %v645
        %2349 = vmatprep.subr.mxu0 0.0
        %2350 = vmatpush1.msra.mxu0 0.0
        %2351 = vmatprep.subr.mxu0 0.0
        %2352 = vmatpush1.msra.mxu0 0.0
        %2353 = vmatprep.subr.mxu0 0.0
        %2354 = vmatpush1.msra.mxu0 0.0
        %2355 = vmatprep.subr.mxu0 0.0
        %2356 = vmatpush1.msra.mxu0 0.0
        %2357 = vmatprep.subr.mxu0 0.0
        %2358 = vmatpush1.msra.mxu0 0.0
        %2359 = vmatprep.subr.mxu0 0.0
        %2360 = vmatpush1.msra.mxu0 0.0
        %2361 = vmatprep.subr.mxu0 0.0
        %2362 = vmatpush1.msra.mxu0 0.0
        %2363 = vmatprep.subr.mxu0 0.0
        %2364 = vmatpush1.msra.mxu0 0.0
        %2365 = vmatprep.subr.mxu0 0.0
        %2366 = vmatpush1.msra.mxu0 0.0
        %2367 = vmatprep.subr.mxu0 0.0
        %2368 = vmatpush1.msra.mxu0 0.0
        %2369 = vmatprep.subr.mxu0 0.0
        %2370 = vmatpush1.msra.mxu0 0.0
        %2371 = vmatprep.subr.mxu0 0.0
        %2372 = vmatpush1.msra.mxu0 0.0
        %2373 = vmatprep.subr.mxu0 0.0
        %2374 = vmatpush1.msra.mxu0 0.0
        %2375 = vmatprep.subr.mxu0 0.0
        %2376 = vmatpush1.msra.mxu0 0.0
        %2377 = vmatprep.subr.mxu0 0.0
        %2378 = vmatpush1.msra.mxu0 0.0
        %2379 = vmatprep.subr.mxu0 0.0
        %2380 = vmatpush1.msra.mxu0 0.0
        %2381 = vmatprep.mubr.f32.mxu0 0.0
        %2382 = vmatmul.mubr.f32.gmra.mrb[0].mxu0 %v2244
        %v2383 = vpop.f32.mrb[0].mxu0
        %v2384 = vadd.f32 0.0, %v2383
        %v2385 = vpop.f32.mrb[0].mxu0
        %2386 = vdwg.mxu0
        %v2388 = vrot.slane %v2313, 4
        %v2389 = vrot.slane %v2313, 5
        %v2390 = vrot.slane %v2313, 6
        %v2391 = vrot.slane %v2313, 7
        %v2392 = vrot.slane %v2313, 1
        %v2393 = vrot.slane %v2313, 2
        %v2394 = vrot.slane %v2313, 3
        %v2403 = vadd.f32 %v447, %v2388
        %v2404 = vadd.f32 %v453, %v2389
        %v2405 = vadd.f32 %v459, %v2390
        %v2406 = vadd.f32 %v465, %v2391
        %v2407 = vadd.f32 %v471, %v2313
        %v2408 = vadd.f32 %v477, %v2392
        %v2409 = vadd.f32 %v483, %v2393
        %v2410 = vadd.f32 %v489, %v2394
        %v2411 = vxor.u32 %v2403, 2147483648
        %v2412 = vxor.u32 %v2404, 2147483648
        %v2413 = vxor.u32 %v2405, 2147483648
        %v2414 = vxor.u32 %v2406, 2147483648
        %v2415 = vxor.u32 %v2407, 2147483648
        %v2416 = vxor.u32 %v2408, 2147483648
        %v2417 = vxor.u32 %v2409, 2147483648
        %v2418 = vxor.u32 %v2410, 2147483648
        %v2419 = vmul.f32 %v2411, 1.442695
        %v2420 = vpow.pop %v2419
        %v2421 = vmul.f32 %v2412, 1.442695
        %v2422 = vpow.pop %v2421
        %v2423 = vmul.f32 %v2413, 1.442695
        %v2424 = vpow.pop %v2423
        %v2425 = vmul.f32 %v2414, 1.442695
        %v2426 = vpow.pop %v2425
        %v2427 = vmul.f32 %v2415, 1.442695
        %v2428 = vpow.pop %v2427
        %v2429 = vmul.f32 %v2416, 1.442695
        %v2430 = vpow.pop %v2429
        %v2431 = vmul.f32 %v2417, 1.442695
        %v2432 = vpow.pop %v2431
        %v2433 = vmul.f32 %v2418, 1.442695
        %v2434 = vpow.pop %v2433
        %v2435 = vadd.f32 %v2420, 1.0
        %v2436 = vadd.f32 %v2422, 1.0
        %v2437 = vadd.f32 %v2424, 1.0
        %v2438 = vadd.f32 %v2426, 1.0
        %v2439 = vadd.f32 %v2428, 1.0
        %v2440 = vadd.f32 %v2430, 1.0
        %v2441 = vadd.f32 %v2432, 1.0
        %v2442 = vadd.f32 %v2434, 1.0
        %v2443 = vrcp.pop %v2435
        %v2444 = vmul.f32 1.0, %v2443
        %v2445 = vrcp.pop %v2436
        %v2446 = vmul.f32 1.0, %v2445
        %v2447 = vrcp.pop %v2437
        %v2448 = vmul.f32 1.0, %v2447
        %v2449 = vrcp.pop %v2438
        %v2450 = vmul.f32 1.0, %v2449
        %v2451 = vrcp.pop %v2439
        %v2452 = vmul.f32 1.0, %v2451
        %v2453 = vrcp.pop %v2440
        %v2454 = vmul.f32 1.0, %v2453
        %v2455 = vrcp.pop %v2441
        %v2456 = vmul.f32 1.0, %v2455
        %v2457 = vrcp.pop %v2442
        %v2458 = vmul.f32 1.0, %v2457
        %v2460 = vrot.slane %v2315, 4
        %v2461 = vrot.slane %v2315, 5
        %v2462 = vrot.slane %v2315, 6
        %v2463 = vrot.slane %v2315, 7
        %v2464 = vrot.slane %v2315, 1
        %v2465 = vrot.slane %v2315, 2
        %v2466 = vrot.slane %v2315, 3
        %v2475 = vadd.f32 %v449, %v2460
        %v2476 = vadd.f32 %v455, %v2461
        %v2477 = vadd.f32 %v461, %v2462
        %v2478 = vadd.f32 %v467, %v2463
        %v2479 = vadd.f32 %v473, %v2315
        %v2480 = vadd.f32 %v479, %v2464
        %v2481 = vadd.f32 %v485, %v2465
        %v2482 = vadd.f32 %v491, %v2466
        %v2483 = vxor.u32 %v2475, 2147483648
        %v2484 = vxor.u32 %v2476, 2147483648
        %v2485 = vxor.u32 %v2477, 2147483648
        %v2486 = vxor.u32 %v2478, 2147483648
        %v2487 = vxor.u32 %v2479, 2147483648
        %v2488 = vxor.u32 %v2480, 2147483648
        %v2489 = vxor.u32 %v2481, 2147483648
        %v2490 = vxor.u32 %v2482, 2147483648
        %v2491 = vmul.f32 %v2483, 1.442695
        %v2492 = vpow.pop %v2491
        %v2493 = vmul.f32 %v2484, 1.442695
        %v2494 = vpow.pop %v2493
        %v2495 = vmul.f32 %v2485, 1.442695
        %v2496 = vpow.pop %v2495
        %v2497 = vmul.f32 %v2486, 1.442695
        %v2498 = vpow.pop %v2497
        %v2499 = vmul.f32 %v2487, 1.442695
        %v2500 = vpow.pop %v2499
        %v2501 = vmul.f32 %v2488, 1.442695
        %v2502 = vpow.pop %v2501
        %v2503 = vmul.f32 %v2489, 1.442695
        %v2504 = vpow.pop %v2503
        %v2505 = vmul.f32 %v2490, 1.442695
        %v2506 = vpow.pop %v2505
        %v2507 = vadd.f32 %v2492, 1.0
        %v2508 = vadd.f32 %v2494, 1.0
        %v2509 = vadd.f32 %v2496, 1.0
        %v2510 = vadd.f32 %v2498, 1.0
        %v2511 = vadd.f32 %v2500, 1.0
        %v2512 = vadd.f32 %v2502, 1.0
        %v2513 = vadd.f32 %v2504, 1.0
        %v2514 = vadd.f32 %v2506, 1.0
        %v2515 = vrcp.pop %v2507
        %v2516 = vmul.f32 1.0, %v2515
        %v2517 = vrcp.pop %v2508
        %v2518 = vmul.f32 1.0, %v2517
        %v2519 = vrcp.pop %v2509
        %v2520 = vmul.f32 1.0, %v2519
        %v2521 = vrcp.pop %v2510
        %v2522 = vmul.f32 1.0, %v2521
        %v2523 = vrcp.pop %v2511
        %v2524 = vmul.f32 1.0, %v2523
        %v2525 = vrcp.pop %v2512
        %v2526 = vmul.f32 1.0, %v2525
        %v2527 = vrcp.pop %v2513
        %v2528 = vmul.f32 1.0, %v2527
        %v2529 = vrcp.pop %v2514
        %v2530 = vmul.f32 1.0, %v2529
        %v2531 = vadd.f32 %v2384, %v651
        %v2533 = vrot.slane %v2531, 4
        %v2534 = vrot.slane %v2531, 5
        %v2535 = vrot.slane %v2531, 6
        %v2536 = vrot.slane %v2531, 7
        %v2537 = vrot.slane %v2531, 1
        %v2538 = vrot.slane %v2531, 2
        %v2539 = vrot.slane %v2531, 3
        %v2548 = vmul.f32 %v2444, %v2533
        %v2549 = vmul.f32 %v2446, %v2534
        %v2550 = vmul.f32 %v2448, %v2535
        %v2551 = vmul.f32 %v2450, %v2536
        %v2552 = vmul.f32 %v2452, %v2531
        %v2553 = vmul.f32 %v2454, %v2537
        %v2554 = vmul.f32 %v2456, %v2538
        %v2555 = vmul.f32 %v2458, %v2539
        %v2556 = vadd.f32 %v560, %v2548
        %v2557 = vadd.f32 %v565, %v2549
        %v2558 = vadd.f32 %v570, %v2550
        %v2559 = vadd.f32 %v575, %v2551
        %v2560 = vadd.f32 %v580, %v2552
        %v2561 = vadd.f32 %v585, %v2553
        %v2562 = vadd.f32 %v590, %v2554
        %v2563 = vadd.f32 %v595, %v2555
        %v2564 = vtanh.pop %v2556
        %v2565 = vtanh.pop %v2557
        %v2566 = vtanh.pop %v2558
        %v2567 = vtanh.pop %v2559
        %v2568 = vtanh.pop %v2560
        %v2569 = vtanh.pop %v2561
        %v2570 = vtanh.pop %v2562
        %v2571 = vtanh.pop %v2563
        %v2572 = vsub.f32 1.0, %v2516
        %v2573 = vsub.f32 1.0, %v2518
        %v2574 = vsub.f32 1.0, %v2520
        %v2575 = vsub.f32 1.0, %v2522
        %v2576 = vsub.f32 1.0, %v2524
        %v2577 = vsub.f32 1.0, %v2526
        %v2578 = vsub.f32 1.0, %v2528
        %v2579 = vsub.f32 1.0, %v2530
        %v2580 = vmul.f32 %v2572, %v2564
        %v2581 = vmul.f32 %v2573, %v2565
        %v2582 = vmul.f32 %v2574, %v2566
        %v2583 = vmul.f32 %v2575, %v2567
        %v2584 = vmul.f32 %v2576, %v2568
        %v2585 = vmul.f32 %v2577, %v2569
        %v2586 = vmul.f32 %v2578, %v2570
        %v2587 = vmul.f32 %v2579, %v2571
        %v2588 = vrot.slane %v2215, 7
        %v2589 = vrot.slane %v2216, 7
        %v2590 = vrot.slane %v2217, 7
        %v2591 = vrot.slane %v2218, 7
        %v2592 = vrot.slane %v2220, 7
        %v2593 = vrot.slane %v2221, 7
        %v2594 = vrot.slane %v2222, 7
        %v2603 = vmul.f32 %v2516, %v2588
        %v2604 = vmul.f32 %v2518, %v2589
        %v2605 = vmul.f32 %v2520, %v2590
        %v2606 = vmul.f32 %v2522, %v2591
        %v2607 = vmul.f32 %v2524, %v2237
        %v2608 = vmul.f32 %v2526, %v2592
        %v2609 = vmul.f32 %v2528, %v2593
        %v2610 = vmul.f32 %v2530, %v2594
        %v2611 = vadd.f32 %v2580, %v2603
        %v2612 = vadd.f32 %v2581, %v2604
        %v2613 = vadd.f32 %v2582, %v2605
        %v2614 = vadd.f32 %v2583, %v2606
        %v2615 = vadd.f32 %v2584, %v2607
        %v2616 = vadd.f32 %v2585, %v2608
        %v2617 = vadd.f32 %v2586, %v2609
        %v2618 = vadd.f32 %v2587, %v2610
        %v2627 = vrot.slane %v2611, 4
        %v2628 = vrot.slane %v2612, 3
        %v2629 = vsel %vm1037, %v2628, %v2627
        %v2630 = vrot.slane %v2613, 2
        %v2631 = vsel %vm1040, %v2630, %v2629
        %v2632 = vrot.slane %v2614, 1
        %v2633 = vsel %vm1043, %v2632, %v2631
        %v2634 = vsel %vm1046, %v2615, %v2633
        %v2635 = vrot.slane %v2616, 7
        %v2636 = vsel %vm1049, %v2635, %v2634
        %v2637 = vrot.slane %v2617, 6
        %v2638 = vsel %vm1052, %v2637, %v2636
        %v2639 = vrot.slane %v2618, 5
        %v2640 = vsel %vm1055, %v2639, %v2638
        %2642 = vmatprep.subr.mxu0 %v599
        %2643 = vmatpush1.msra.mxu0 %v598
        %2644 = vmatprep.subr.mxu0 %v602
        %2645 = vmatpush1.msra.mxu0 %v601
        %2646 = vmatprep.subr.mxu0 %v605
        %2647 = vmatpush1.msra.mxu0 %v604
        %2648 = vmatprep.subr.mxu0 %v608
        %2649 = vmatpush1.msra.mxu0 %v607
        %2650 = vmatprep.subr.mxu0 %v611
        %2651 = vmatpush1.msra.mxu0 %v610
        %2652 = vmatprep.subr.mxu0 %v614
        %2653 = vmatpush1.msra.mxu0 %v613
        %2654 = vmatprep.subr.mxu0 %v617
        %2655 = vmatpush1.msra.mxu0 %v616
        %2656 = vmatprep.subr.mxu0 %v620
        %2657 = vmatpush1.msra.mxu0 %v619
        %2658 = vmatprep.subr.mxu0 %v623
        %2659 = vmatpush1.msra.mxu0 %v622
        %2660 = vmatprep.subr.mxu0 %v626
        %2661 = vmatpush1.msra.mxu0 %v625
        %2662 = vmatprep.subr.mxu0 %v629
        %2663 = vmatpush1.msra.mxu0 %v628
        %2664 = vmatprep.subr.mxu0 %v632
        %2665 = vmatpush1.msra.mxu0 %v631
        %2666 = vmatprep.subr.mxu0 %v635
        %2667 = vmatpush1.msra.mxu0 %v634
        %2668 = vmatprep.subr.mxu0 %v638
        %2669 = vmatpush1.msra.mxu0 %v637
        %2670 = vmatprep.subr.mxu0 %v641
        %2671 = vmatpush1.msra.mxu0 %v640
        %2672 = vmatprep.subr.mxu0 %v644
        %2673 = vmatpush1.msra.mxu0 %v643
        %2674 = vmatprep.subr.mxu0 0.0
        %2675 = vmatpush1.msra.mxu0 0.0
        %2676 = vmatprep.subr.mxu0 0.0
        %2677 = vmatpush1.msra.mxu0 0.0
        %2678 = vmatprep.subr.mxu0 0.0
        %2679 = vmatpush1.msra.mxu0 0.0
        %2680 = vmatprep.subr.mxu0 0.0
        %2681 = vmatpush1.msra.mxu0 0.0
        %2682 = vmatprep.subr.mxu0 0.0
        %2683 = vmatpush1.msra.mxu0 0.0
        %2684 = vmatprep.subr.mxu0 0.0
        %2685 = vmatpush1.msra.mxu0 0.0
        %2686 = vmatprep.subr.mxu0 0.0
        %2687 = vmatpush1.msra.mxu0 0.0
        %2688 = vmatprep.subr.mxu0 0.0
        %2689 = vmatpush1.msra.mxu0 0.0
        %2690 = vmatprep.subr.mxu0 0.0
        %2691 = vmatpush1.msra.mxu0 0.0
        %2692 = vmatprep.subr.mxu0 0.0
        %2693 = vmatpush1.msra.mxu0 0.0
        %2694 = vmatprep.subr.mxu0 0.0
        %2695 = vmatpush1.msra.mxu0 0.0
        %2696 = vmatprep.subr.mxu0 0.0
        %2697 = vmatpush1.msra.mxu0 0.0
        %2698 = vmatprep.subr.mxu0 0.0
        %2699 = vmatpush1.msra.mxu0 0.0
        %2700 = vmatprep.subr.mxu0 0.0
        %2701 = vmatpush1.msra.mxu0 0.0
        %2702 = vmatprep.subr.mxu0 0.0
        %2703 = vmatpush1.msra.mxu0 0.0
        %2704 = vmatprep.subr.mxu0 0.0
        %2705 = vmatpush1.msra.mxu0 0.0
        %2706 = vmatprep.mubr.f32.mxu0 0.0
        %2707 = vmatmul.mubr.f32.gmra.mrb[0].mxu0 %v2640
        %v2708 = vpop.f32.mrb[0].mxu0
        %v2709 = vadd.f32 0.0, %v2708
        %v2710 = vpop.f32.mrb[0].mxu0
        %v2711 = vadd.f32 0.0, %v2710
        %2712 = vdwg.mxu0
        %2713 = vmatprep.subr.mxu0 0.0
        %2714 = vmatpush1.msra.mxu0 %v600
        %2715 = vmatprep.subr.mxu0 0.0
        %2716 = vmatpush1.msra.mxu0 %v603
        %2717 = vmatprep.subr.mxu0 0.0
        %2718 = vmatpush1.msra.mxu0 %v606
        %2719 = vmatprep.subr.mxu0 0.0
        %2720 = vmatpush1.msra.mxu0 %v609
        %2721 = vmatprep.subr.mxu0 0.0
        %2722 = vmatpush1.msra.mxu0 %v612
        %2723 = vmatprep.subr.mxu0 0.0
        %2724 = vmatpush1.msra.mxu0 %v615
        %2725 = vmatprep.subr.mxu0 0.0
        %2726 = vmatpush1.msra.mxu0 %v618
        %2727 = vmatprep.subr.mxu0 0.0
        %2728 = vmatpush1.msra.mxu0 %v621
        %2729 = vmatprep.subr.mxu0 0.0
        %2730 = vmatpush1.msra.mxu0 %v624
        %2731 = vmatprep.subr.mxu0 0.0
        %2732 = vmatpush1.msra.mxu0 %v627
        %2733 = vmatprep.subr.mxu0 0.0
        %2734 = vmatpush1.msra.mxu0 %v630
        %2735 = vmatprep.subr.mxu0 0.0
        %2736 = vmatpush1.msra.mxu0 %v633
        %2737 = vmatprep.subr.mxu0 0.0
        %2738 = vmatpush1.msra.mxu0 %v636
        %2739 = vmatprep.subr.mxu0 0.0
        %2740 = vmatpush1.msra.mxu0 %v639
        %2741 = vmatprep.subr.mxu0 0.0
        %2742 = vmatpush1.msra.mxu0 %v642
        %2743 = vmatprep.subr.mxu0 0.0
        %2744 = vmatpush1.msra.mxu0 %v645
        %2745 = vmatprep.subr.mxu0 0.0
        %2746 = vmatpush1.msra.mxu0 0.0
        %2747 = vmatprep.subr.mxu0 0.0
        %2748 = vmatpush1.msra.mxu0 0.0
        %2749 = vmatprep.subr.mxu0 0.0
        %2750 = vmatpush1.msra.mxu0 0.0
        %2751 = vmatprep.subr.mxu0 0.0
        %2752 = vmatpush1.msra.mxu0 0.0
        %2753 = vmatprep.subr.mxu0 0.0
        %2754 = vmatpush1.msra.mxu0 0.0
        %2755 = vmatprep.subr.mxu0 0.0
        %2756 = vmatpush1.msra.mxu0 0.0
        %2757 = vmatprep.subr.mxu0 0.0
        %2758 = vmatpush1.msra.mxu0 0.0
        %2759 = vmatprep.subr.mxu0 0.0
        %2760 = vmatpush1.msra.mxu0 0.0
        %2761 = vmatprep.subr.mxu0 0.0
        %2762 = vmatpush1.msra.mxu0 0.0
        %2763 = vmatprep.subr.mxu0 0.0
        %2764 = vmatpush1.msra.mxu0 0.0
        %2765 = vmatprep.subr.mxu0 0.0
        %2766 = vmatpush1.msra.mxu0 0.0
        %2767 = vmatprep.subr.mxu0 0.0
        %2768 = vmatpush1.msra.mxu0 0.0
        %2769 = vmatprep.subr.mxu0 0.0
        %2770 = vmatpush1.msra.mxu0 0.0
        %2771 = vmatprep.subr.mxu0 0.0
        %2772 = vmatpush1.msra.mxu0 0.0
        %2773 = vmatprep.subr.mxu0 0.0
        %2774 = vmatpush1.msra.mxu0 0.0
        %2775 = vmatprep.subr.mxu0 0.0
        %2776 = vmatpush1.msra.mxu0 0.0
        %2777 = vmatprep.mubr.f32.mxu0 0.0
        %2778 = vmatmul.mubr.f32.gmra.mrb[0].mxu0 %v2640
        %v2779 = vpop.f32.mrb[0].mxu0
        %v2780 = vadd.f32 0.0, %v2779
        %v2781 = vpop.f32.mrb[0].mxu0
        %2782 = vdwg.mxu0
        %v2784 = vrot.slane %v2709, 3
        %v2785 = vrot.slane %v2709, 4
        %v2786 = vrot.slane %v2709, 5
        %v2787 = vrot.slane %v2709, 6
        %v2788 = vrot.slane %v2709, 7
        %v2789 = vrot.slane %v2709, 1
        %v2790 = vrot.slane %v2709, 2
        %v2799 = vadd.f32 %v447, %v2784
        %v2800 = vadd.f32 %v453, %v2785
        %v2801 = vadd.f32 %v459, %v2786
        %v2802 = vadd.f32 %v465, %v2787
        %v2803 = vadd.f32 %v471, %v2788
        %v2804 = vadd.f32 %v477, %v2709
        %v2805 = vadd.f32 %v483, %v2789
        %v2806 = vadd.f32 %v489, %v2790
        %v2807 = vxor.u32 %v2799, 2147483648
        %v2808 = vxor.u32 %v2800, 2147483648
        %v2809 = vxor.u32 %v2801, 2147483648
        %v2810 = vxor.u32 %v2802, 2147483648
        %v2811 = vxor.u32 %v2803, 2147483648
        %v2812 = vxor.u32 %v2804, 2147483648
        %v2813 = vxor.u32 %v2805, 2147483648
        %v2814 = vxor.u32 %v2806, 2147483648
        %v2815 = vmul.f32 %v2807, 1.442695
        %v2816 = vpow.pop %v2815
        %v2817 = vmul.f32 %v2808, 1.442695
        %v2818 = vpow.pop %v2817
        %v2819 = vmul.f32 %v2809, 1.442695
        %v2820 = vpow.pop %v2819
        %v2821 = vmul.f32 %v2810, 1.442695
        %v2822 = vpow.pop %v2821
        %v2823 = vmul.f32 %v2811, 1.442695
        %v2824 = vpow.pop %v2823
        %v2825 = vmul.f32 %v2812, 1.442695
        %v2826 = vpow.pop %v2825
        %v2827 = vmul.f32 %v2813, 1.442695
        %v2828 = vpow.pop %v2827
        %v2829 = vmul.f32 %v2814, 1.442695
        %v2830 = vpow.pop %v2829
        %v2831 = vadd.f32 %v2816, 1.0
        %v2832 = vadd.f32 %v2818, 1.0
        %v2833 = vadd.f32 %v2820, 1.0
        %v2834 = vadd.f32 %v2822, 1.0
        %v2835 = vadd.f32 %v2824, 1.0
        %v2836 = vadd.f32 %v2826, 1.0
        %v2837 = vadd.f32 %v2828, 1.0
        %v2838 = vadd.f32 %v2830, 1.0
        %v2839 = vrcp.pop %v2831
        %v2840 = vmul.f32 1.0, %v2839
        %v2841 = vrcp.pop %v2832
        %v2842 = vmul.f32 1.0, %v2841
        %v2843 = vrcp.pop %v2833
        %v2844 = vmul.f32 1.0, %v2843
        %v2845 = vrcp.pop %v2834
        %v2846 = vmul.f32 1.0, %v2845
        %v2847 = vrcp.pop %v2835
        %v2848 = vmul.f32 1.0, %v2847
        %v2849 = vrcp.pop %v2836
        %v2850 = vmul.f32 1.0, %v2849
        %v2851 = vrcp.pop %v2837
        %v2852 = vmul.f32 1.0, %v2851
        %v2853 = vrcp.pop %v2838
        %v2854 = vmul.f32 1.0, %v2853
        %v2856 = vrot.slane %v2711, 3
        %v2857 = vrot.slane %v2711, 4
        %v2858 = vrot.slane %v2711, 5
        %v2859 = vrot.slane %v2711, 6
        %v2860 = vrot.slane %v2711, 7
        %v2861 = vrot.slane %v2711, 1
        %v2862 = vrot.slane %v2711, 2
        %v2871 = vadd.f32 %v449, %v2856
        %v2872 = vadd.f32 %v455, %v2857
        %v2873 = vadd.f32 %v461, %v2858
        %v2874 = vadd.f32 %v467, %v2859
        %v2875 = vadd.f32 %v473, %v2860
        %v2876 = vadd.f32 %v479, %v2711
        %v2877 = vadd.f32 %v485, %v2861
        %v2878 = vadd.f32 %v491, %v2862
        %v2879 = vxor.u32 %v2871, 2147483648
        %v2880 = vxor.u32 %v2872, 2147483648
        %v2881 = vxor.u32 %v2873, 2147483648
        %v2882 = vxor.u32 %v2874, 2147483648
        %v2883 = vxor.u32 %v2875, 2147483648
        %v2884 = vxor.u32 %v2876, 2147483648
        %v2885 = vxor.u32 %v2877, 2147483648
        %v2886 = vxor.u32 %v2878, 2147483648
        %v2887 = vmul.f32 %v2879, 1.442695
        %v2888 = vpow.pop %v2887
        %v2889 = vmul.f32 %v2880, 1.442695
        %v2890 = vpow.pop %v2889
        %v2891 = vmul.f32 %v2881, 1.442695
        %v2892 = vpow.pop %v2891
        %v2893 = vmul.f32 %v2882, 1.442695
        %v2894 = vpow.pop %v2893
        %v2895 = vmul.f32 %v2883, 1.442695
        %v2896 = vpow.pop %v2895
        %v2897 = vmul.f32 %v2884, 1.442695
        %v2898 = vpow.pop %v2897
        %v2899 = vmul.f32 %v2885, 1.442695
        %v2900 = vpow.pop %v2899
        %v2901 = vmul.f32 %v2886, 1.442695
        %v2902 = vpow.pop %v2901
        %v2903 = vadd.f32 %v2888, 1.0
        %v2904 = vadd.f32 %v2890, 1.0
        %v2905 = vadd.f32 %v2892, 1.0
        %v2906 = vadd.f32 %v2894, 1.0
        %v2907 = vadd.f32 %v2896, 1.0
        %v2908 = vadd.f32 %v2898, 1.0
        %v2909 = vadd.f32 %v2900, 1.0
        %v2910 = vadd.f32 %v2902, 1.0
        %v2911 = vrcp.pop %v2903
        %v2912 = vmul.f32 1.0, %v2911
        %v2913 = vrcp.pop %v2904
        %v2914 = vmul.f32 1.0, %v2913
        %v2915 = vrcp.pop %v2905
        %v2916 = vmul.f32 1.0, %v2915
        %v2917 = vrcp.pop %v2906
        %v2918 = vmul.f32 1.0, %v2917
        %v2919 = vrcp.pop %v2907
        %v2920 = vmul.f32 1.0, %v2919
        %v2921 = vrcp.pop %v2908
        %v2922 = vmul.f32 1.0, %v2921
        %v2923 = vrcp.pop %v2909
        %v2924 = vmul.f32 1.0, %v2923
        %v2925 = vrcp.pop %v2910
        %v2926 = vmul.f32 1.0, %v2925
        %v2927 = vadd.f32 %v2780, %v651
        %v2929 = vrot.slane %v2927, 3
        %v2930 = vrot.slane %v2927, 4
        %v2931 = vrot.slane %v2927, 5
        %v2932 = vrot.slane %v2927, 6
        %v2933 = vrot.slane %v2927, 7
        %v2934 = vrot.slane %v2927, 1
        %v2935 = vrot.slane %v2927, 2
        %v2944 = vmul.f32 %v2840, %v2929
        %v2945 = vmul.f32 %v2842, %v2930
        %v2946 = vmul.f32 %v2844, %v2931
        %v2947 = vmul.f32 %v2846, %v2932
        %v2948 = vmul.f32 %v2848, %v2933
        %v2949 = vmul.f32 %v2850, %v2927
        %v2950 = vmul.f32 %v2852, %v2934
        %v2951 = vmul.f32 %v2854, %v2935
        %v2952 = vadd.f32 %v560, %v2944
        %v2953 = vadd.f32 %v565, %v2945
        %v2954 = vadd.f32 %v570, %v2946
        %v2955 = vadd.f32 %v575, %v2947
        %v2956 = vadd.f32 %v580, %v2948
        %v2957 = vadd.f32 %v585, %v2949
        %v2958 = vadd.f32 %v590, %v2950
        %v2959 = vadd.f32 %v595, %v2951
        %v2960 = vtanh.pop %v2952
        %v2961 = vtanh.pop %v2953
        %v2962 = vtanh.pop %v2954
        %v2963 = vtanh.pop %v2955
        %v2964 = vtanh.pop %v2956
        %v2965 = vtanh.pop %v2957
        %v2966 = vtanh.pop %v2958
        %v2967 = vtanh.pop %v2959
        %v2968 = vsub.f32 1.0, %v2912
        %v2969 = vsub.f32 1.0, %v2914
        %v2970 = vsub.f32 1.0, %v2916
        %v2971 = vsub.f32 1.0, %v2918
        %v2972 = vsub.f32 1.0, %v2920
        %v2973 = vsub.f32 1.0, %v2922
        %v2974 = vsub.f32 1.0, %v2924
        %v2975 = vsub.f32 1.0, %v2926
        %v2976 = vmul.f32 %v2968, %v2960
        %v2977 = vmul.f32 %v2969, %v2961
        %v2978 = vmul.f32 %v2970, %v2962
        %v2979 = vmul.f32 %v2971, %v2963
        %v2980 = vmul.f32 %v2972, %v2964
        %v2981 = vmul.f32 %v2973, %v2965
        %v2982 = vmul.f32 %v2974, %v2966
        %v2983 = vmul.f32 %v2975, %v2967
        %v2984 = vrot.slane %v2611, 7
        %v2985 = vrot.slane %v2612, 7
        %v2986 = vrot.slane %v2613, 7
        %v2987 = vrot.slane %v2614, 7
        %v2988 = vrot.slane %v2615, 7
        %v2989 = vrot.slane %v2617, 7
        %v2990 = vrot.slane %v2618, 7
        %v2999 = vmul.f32 %v2912, %v2984
        %v3000 = vmul.f32 %v2914, %v2985
        %v3001 = vmul.f32 %v2916, %v2986
        %v3002 = vmul.f32 %v2918, %v2987
        %v3003 = vmul.f32 %v2920, %v2988
        %v3004 = vmul.f32 %v2922, %v2635
        %v3005 = vmul.f32 %v2924, %v2989
        %v3006 = vmul.f32 %v2926, %v2990
        %v3007 = vadd.f32 %v2976, %v2999
        %v3008 = vadd.f32 %v2977, %v3000
        %v3009 = vadd.f32 %v2978, %v3001
        %v3010 = vadd.f32 %v2979, %v3002
        %v3011 = vadd.f32 %v2980, %v3003
        %v3012 = vadd.f32 %v2981, %v3004
        %v3013 = vadd.f32 %v2982, %v3005
        %v3014 = vadd.f32 %v2983, %v3006
        %v3023 = vrot.slane %v3007, 5
        %v3024 = vrot.slane %v3008, 4
        %v3025 = vsel %vm1037, %v3024, %v3023
        %v3026 = vrot.slane %v3009, 3
        %v3027 = vsel %vm1040, %v3026, %v3025
        %v3028 = vrot.slane %v3010, 2
        %v3029 = vsel %vm1043, %v3028, %v3027
        %v3030 = vrot.slane %v3011, 1
        %v3031 = vsel %vm1046, %v3030, %v3029
        %v3032 = vsel %vm1049, %v3012, %v3031
        %v3033 = vrot.slane %v3013, 7
        %v3034 = vsel %vm1052, %v3033, %v3032
        %v3035 = vrot.slane %v3014, 6
        %v3036 = vsel %vm1055, %v3035, %v3034
        %3038 = vmatprep.subr.mxu0 %v599
        %3039 = vmatpush1.msra.mxu0 %v598
        %3040 = vmatprep.subr.mxu0 %v602
        %3041 = vmatpush1.msra.mxu0 %v601
        %3042 = vmatprep.subr.mxu0 %v605
        %3043 = vmatpush1.msra.mxu0 %v604
        %3044 = vmatprep.subr.mxu0 %v608
        %3045 = vmatpush1.msra.mxu0 %v607
        %3046 = vmatprep.subr.mxu0 %v611
        %3047 = vmatpush1.msra.mxu0 %v610
        %3048 = vmatprep.subr.mxu0 %v614
        %3049 = vmatpush1.msra.mxu0 %v613
        %3050 = vmatprep.subr.mxu0 %v617
        %3051 = vmatpush1.msra.mxu0 %v616
        %3052 = vmatprep.subr.mxu0 %v620
        %3053 = vmatpush1.msra.mxu0 %v619
        %3054 = vmatprep.subr.mxu0 %v623
        %3055 = vmatpush1.msra.mxu0 %v622
        %3056 = vmatprep.subr.mxu0 %v626
        %3057 = vmatpush1.msra.mxu0 %v625
        %3058 = vmatprep.subr.mxu0 %v629
        %3059 = vmatpush1.msra.mxu0 %v628
        %3060 = vmatprep.subr.mxu0 %v632
        %3061 = vmatpush1.msra.mxu0 %v631
        %3062 = vmatprep.subr.mxu0 %v635
        %3063 = vmatpush1.msra.mxu0 %v634
        %3064 = vmatprep.subr.mxu0 %v638
        %3065 = vmatpush1.msra.mxu0 %v637
        %3066 = vmatprep.subr.mxu0 %v641
        %3067 = vmatpush1.msra.mxu0 %v640
        %3068 = vmatprep.subr.mxu0 %v644
        %3069 = vmatpush1.msra.mxu0 %v643
        %3070 = vmatprep.subr.mxu0 0.0
        %3071 = vmatpush1.msra.mxu0 0.0
        %3072 = vmatprep.subr.mxu0 0.0
        %3073 = vmatpush1.msra.mxu0 0.0
        %3074 = vmatprep.subr.mxu0 0.0
        %3075 = vmatpush1.msra.mxu0 0.0
        %3076 = vmatprep.subr.mxu0 0.0
        %3077 = vmatpush1.msra.mxu0 0.0
        %3078 = vmatprep.subr.mxu0 0.0
        %3079 = vmatpush1.msra.mxu0 0.0
        %3080 = vmatprep.subr.mxu0 0.0
        %3081 = vmatpush1.msra.mxu0 0.0
        %3082 = vmatprep.subr.mxu0 0.0
        %3083 = vmatpush1.msra.mxu0 0.0
        %3084 = vmatprep.subr.mxu0 0.0
        %3085 = vmatpush1.msra.mxu0 0.0
        %3086 = vmatprep.subr.mxu0 0.0
        %3087 = vmatpush1.msra.mxu0 0.0
        %3088 = vmatprep.subr.mxu0 0.0
        %3089 = vmatpush1.msra.mxu0 0.0
        %3090 = vmatprep.subr.mxu0 0.0
        %3091 = vmatpush1.msra.mxu0 0.0
        %3092 = vmatprep.subr.mxu0 0.0
        %3093 = vmatpush1.msra.mxu0 0.0
        %3094 = vmatprep.subr.mxu0 0.0
        %3095 = vmatpush1.msra.mxu0 0.0
        %3096 = vmatprep.subr.mxu0 0.0
        %3097 = vmatpush1.msra.mxu0 0.0
        %3098 = vmatprep.subr.mxu0 0.0
        %3099 = vmatpush1.msra.mxu0 0.0
        %3100 = vmatprep.subr.mxu0 0.0
        %3101 = vmatpush1.msra.mxu0 0.0
        %3102 = vmatprep.mubr.f32.mxu0 0.0
        %3103 = vmatmul.mubr.f32.gmra.mrb[0].mxu0 %v3036
        %v3104 = vpop.f32.mrb[0].mxu0
        %v3105 = vadd.f32 0.0, %v3104
        %v3106 = vpop.f32.mrb[0].mxu0
        %v3107 = vadd.f32 0.0, %v3106
        %3108 = vdwg.mxu0
        %3109 = vmatprep.subr.mxu0 0.0
        %3110 = vmatpush1.msra.mxu0 %v600
        %3111 = vmatprep.subr.mxu0 0.0
        %3112 = vmatpush1.msra.mxu0 %v603
        %3113 = vmatprep.subr.mxu0 0.0
        %3114 = vmatpush1.msra.mxu0 %v606
        %3115 = vmatprep.subr.mxu0 0.0
        %3116 = vmatpush1.msra.mxu0 %v609
        %3117 = vmatprep.subr.mxu0 0.0
        %3118 = vmatpush1.msra.mxu0 %v612
        %3119 = vmatprep.subr.mxu0 0.0
        %3120 = vmatpush1.msra.mxu0 %v615
        %3121 = vmatprep.subr.mxu0 0.0
        %3122 = vmatpush1.msra.mxu0 %v618
        %3123 = vmatprep.subr.mxu0 0.0
        %3124 = vmatpush1.msra.mxu0 %v621
        %3125 = vmatprep.subr.mxu0 0.0
        %3126 = vmatpush1.msra.mxu0 %v624
        %3127 = vmatprep.subr.mxu0 0.0
        %3128 = vmatpush1.msra.mxu0 %v627
        %3129 = vmatprep.subr.mxu0 0.0
        %3130 = vmatpush1.msra.mxu0 %v630
        %3131 = vmatprep.subr.mxu0 0.0
        %3132 = vmatpush1.msra.mxu0 %v633
        %3133 = vmatprep.subr.mxu0 0.0
        %3134 = vmatpush1.msra.mxu0 %v636
        %3135 = vmatprep.subr.mxu0 0.0
        %3136 = vmatpush1.msra.mxu0 %v639
        %3137 = vmatprep.subr.mxu0 0.0
        %3138 = vmatpush1.msra.mxu0 %v642
        %3139 = vmatprep.subr.mxu0 0.0
        %3140 = vmatpush1.msra.mxu0 %v645
        %3141 = vmatprep.subr.mxu0 0.0
        %3142 = vmatpush1.msra.mxu0 0.0
        %3143 = vmatprep.subr.mxu0 0.0
        %3144 = vmatpush1.msra.mxu0 0.0
        %3145 = vmatprep.subr.mxu0 0.0
        %3146 = vmatpush1.msra.mxu0 0.0
        %3147 = vmatprep.subr.mxu0 0.0
        %3148 = vmatpush1.msra.mxu0 0.0
        %3149 = vmatprep.subr.mxu0 0.0
        %3150 = vmatpush1.msra.mxu0 0.0
        %3151 = vmatprep.subr.mxu0 0.0
        %3152 = vmatpush1.msra.mxu0 0.0
        %3153 = vmatprep.subr.mxu0 0.0
        %3154 = vmatpush1.msra.mxu0 0.0
        %3155 = vmatprep.subr.mxu0 0.0
        %3156 = vmatpush1.msra.mxu0 0.0
        %3157 = vmatprep.subr.mxu0 0.0
        %3158 = vmatpush1.msra.mxu0 0.0
        %3159 = vmatprep.subr.mxu0 0.0
        %3160 = vmatpush1.msra.mxu0 0.0
        %3161 = vmatprep.subr.mxu0 0.0
        %3162 = vmatpush1.msra.mxu0 0.0
        %3163 = vmatprep.subr.mxu0 0.0
        %3164 = vmatpush1.msra.mxu0 0.0
        %3165 = vmatprep.subr.mxu0 0.0
        %3166 = vmatpush1.msra.mxu0 0.0
        %3167 = vmatprep.subr.mxu0 0.0
        %3168 = vmatpush1.msra.mxu0 0.0
        %3169 = vmatprep.subr.mxu0 0.0
        %3170 = vmatpush1.msra.mxu0 0.0
        %3171 = vmatprep.subr.mxu0 0.0
        %3172 = vmatpush1.msra.mxu0 0.0
        %3173 = vmatprep.mubr.f32.mxu0 0.0
        %3174 = vmatmul.mubr.f32.gmra.mrb[0].mxu0 %v3036
        %v3175 = vpop.f32.mrb[0].mxu0
        %v3176 = vadd.f32 0.0, %v3175
        %v3177 = vpop.f32.mrb[0].mxu0
        %3178 = vdwg.mxu0
        %v3180 = vrot.slane %v3105, 2
        %v3181 = vrot.slane %v3105, 3
        %v3182 = vrot.slane %v3105, 4
        %v3183 = vrot.slane %v3105, 5
        %v3184 = vrot.slane %v3105, 6
        %v3185 = vrot.slane %v3105, 7
        %v3186 = vrot.slane %v3105, 1
        %v3195 = vadd.f32 %v447, %v3180
        %v3196 = vadd.f32 %v453, %v3181
        %v3197 = vadd.f32 %v459, %v3182
        %v3198 = vadd.f32 %v465, %v3183
        %v3199 = vadd.f32 %v471, %v3184
        %v3200 = vadd.f32 %v477, %v3185
        %v3201 = vadd.f32 %v483, %v3105
        %v3202 = vadd.f32 %v489, %v3186
        %v3203 = vxor.u32 %v3195, 2147483648
        %v3204 = vxor.u32 %v3196, 2147483648
        %v3205 = vxor.u32 %v3197, 2147483648
        %v3206 = vxor.u32 %v3198, 2147483648
        %v3207 = vxor.u32 %v3199, 2147483648
        %v3208 = vxor.u32 %v3200, 2147483648
        %v3209 = vxor.u32 %v3201, 2147483648
        %v3210 = vxor.u32 %v3202, 2147483648
        %v3211 = vmul.f32 %v3203, 1.442695
        %v3212 = vpow.pop %v3211
        %v3213 = vmul.f32 %v3204, 1.442695
        %v3214 = vpow.pop %v3213
        %v3215 = vmul.f32 %v3205, 1.442695
        %v3216 = vpow.pop %v3215
        %v3217 = vmul.f32 %v3206, 1.442695
        %v3218 = vpow.pop %v3217
        %v3219 = vmul.f32 %v3207, 1.442695
        %v3220 = vpow.pop %v3219
        %v3221 = vmul.f32 %v3208, 1.442695
        %v3222 = vpow.pop %v3221
        %v3223 = vmul.f32 %v3209, 1.442695
        %v3224 = vpow.pop %v3223
        %v3225 = vmul.f32 %v3210, 1.442695
        %v3226 = vpow.pop %v3225
        %v3227 = vadd.f32 %v3212, 1.0
        %v3228 = vadd.f32 %v3214, 1.0
        %v3229 = vadd.f32 %v3216, 1.0
        %v3230 = vadd.f32 %v3218, 1.0
        %v3231 = vadd.f32 %v3220, 1.0
        %v3232 = vadd.f32 %v3222, 1.0
        %v3233 = vadd.f32 %v3224, 1.0
        %v3234 = vadd.f32 %v3226, 1.0
        %v3235 = vrcp.pop %v3227
        %v3236 = vmul.f32 1.0, %v3235
        %v3237 = vrcp.pop %v3228
        %v3238 = vmul.f32 1.0, %v3237
        %v3239 = vrcp.pop %v3229
        %v3240 = vmul.f32 1.0, %v3239
        %v3241 = vrcp.pop %v3230
        %v3242 = vmul.f32 1.0, %v3241
        %v3243 = vrcp.pop %v3231
        %v3244 = vmul.f32 1.0, %v3243
        %v3245 = vrcp.pop %v3232
        %v3246 = vmul.f32 1.0, %v3245
        %v3247 = vrcp.pop %v3233
        %v3248 = vmul.f32 1.0, %v3247
        %v3249 = vrcp.pop %v3234
        %v3250 = vmul.f32 1.0, %v3249
        %v3252 = vrot.slane %v3107, 2
        %v3253 = vrot.slane %v3107, 3
        %v3254 = vrot.slane %v3107, 4
        %v3255 = vrot.slane %v3107, 5
        %v3256 = vrot.slane %v3107, 6
        %v3257 = vrot.slane %v3107, 7
        %v3258 = vrot.slane %v3107, 1
        %v3267 = vadd.f32 %v449, %v3252
        %v3268 = vadd.f32 %v455, %v3253
        %v3269 = vadd.f32 %v461, %v3254
        %v3270 = vadd.f32 %v467, %v3255
        %v3271 = vadd.f32 %v473, %v3256
        %v3272 = vadd.f32 %v479, %v3257
        %v3273 = vadd.f32 %v485, %v3107
        %v3274 = vadd.f32 %v491, %v3258
        %v3275 = vxor.u32 %v3267, 2147483648
        %v3276 = vxor.u32 %v3268, 2147483648
        %v3277 = vxor.u32 %v3269, 2147483648
        %v3278 = vxor.u32 %v3270, 2147483648
        %v3279 = vxor.u32 %v3271, 2147483648
        %v3280 = vxor.u32 %v3272, 2147483648
        %v3281 = vxor.u32 %v3273, 2147483648
        %v3282 = vxor.u32 %v3274, 2147483648
        %v3283 = vmul.f32 %v3275, 1.442695
        %v3284 = vpow.pop %v3283
        %v3285 = vmul.f32 %v3276, 1.442695
        %v3286 = vpow.pop %v3285
        %v3287 = vmul.f32 %v3277, 1.442695
        %v3288 = vpow.pop %v3287
        %v3289 = vmul.f32 %v3278, 1.442695
        %v3290 = vpow.pop %v3289
        %v3291 = vmul.f32 %v3279, 1.442695
        %v3292 = vpow.pop %v3291
        %v3293 = vmul.f32 %v3280, 1.442695
        %v3294 = vpow.pop %v3293
        %v3295 = vmul.f32 %v3281, 1.442695
        %v3296 = vpow.pop %v3295
        %v3297 = vmul.f32 %v3282, 1.442695
        %v3298 = vpow.pop %v3297
        %v3299 = vadd.f32 %v3284, 1.0
        %v3300 = vadd.f32 %v3286, 1.0
        %v3301 = vadd.f32 %v3288, 1.0
        %v3302 = vadd.f32 %v3290, 1.0
        %v3303 = vadd.f32 %v3292, 1.0
        %v3304 = vadd.f32 %v3294, 1.0
        %v3305 = vadd.f32 %v3296, 1.0
        %v3306 = vadd.f32 %v3298, 1.0
        %v3307 = vrcp.pop %v3299
        %v3308 = vmul.f32 1.0, %v3307
        %v3309 = vrcp.pop %v3300
        %v3310 = vmul.f32 1.0, %v3309
        %v3311 = vrcp.pop %v3301
        %v3312 = vmul.f32 1.0, %v3311
        %v3313 = vrcp.pop %v3302
        %v3314 = vmul.f32 1.0, %v3313
        %v3315 = vrcp.pop %v3303
        %v3316 = vmul.f32 1.0, %v3315
        %v3317 = vrcp.pop %v3304
        %v3318 = vmul.f32 1.0, %v3317
        %v3319 = vrcp.pop %v3305
        %v3320 = vmul.f32 1.0, %v3319
        %v3321 = vrcp.pop %v3306
        %v3322 = vmul.f32 1.0, %v3321
        %v3323 = vadd.f32 %v3176, %v651
        %v3325 = vrot.slane %v3323, 2
        %v3326 = vrot.slane %v3323, 3
        %v3327 = vrot.slane %v3323, 4
        %v3328 = vrot.slane %v3323, 5
        %v3329 = vrot.slane %v3323, 6
        %v3330 = vrot.slane %v3323, 7
        %v3331 = vrot.slane %v3323, 1
        %v3340 = vmul.f32 %v3236, %v3325
        %v3341 = vmul.f32 %v3238, %v3326
        %v3342 = vmul.f32 %v3240, %v3327
        %v3343 = vmul.f32 %v3242, %v3328
        %v3344 = vmul.f32 %v3244, %v3329
        %v3345 = vmul.f32 %v3246, %v3330
        %v3346 = vmul.f32 %v3248, %v3323
        %v3347 = vmul.f32 %v3250, %v3331
        %v3348 = vadd.f32 %v560, %v3340
        %v3349 = vadd.f32 %v565, %v3341
        %v3350 = vadd.f32 %v570, %v3342
        %v3351 = vadd.f32 %v575, %v3343
        %v3352 = vadd.f32 %v580, %v3344
        %v3353 = vadd.f32 %v585, %v3345
        %v3354 = vadd.f32 %v590, %v3346
        %v3355 = vadd.f32 %v595, %v3347
        %v3356 = vtanh.pop %v3348
        %v3357 = vtanh.pop %v3349
        %v3358 = vtanh.pop %v3350
        %v3359 = vtanh.pop %v3351
        %v3360 = vtanh.pop %v3352
        %v3361 = vtanh.pop %v3353
        %v3362 = vtanh.pop %v3354
        %v3363 = vtanh.pop %v3355
        %v3364 = vsub.f32 1.0, %v3308
        %v3365 = vsub.f32 1.0, %v3310
        %v3366 = vsub.f32 1.0, %v3312
        %v3367 = vsub.f32 1.0, %v3314
        %v3368 = vsub.f32 1.0, %v3316
        %v3369 = vsub.f32 1.0, %v3318
        %v3370 = vsub.f32 1.0, %v3320
        %v3371 = vsub.f32 1.0, %v3322
        %v3372 = vmul.f32 %v3364, %v3356
        %v3373 = vmul.f32 %v3365, %v3357
        %v3374 = vmul.f32 %v3366, %v3358
        %v3375 = vmul.f32 %v3367, %v3359
        %v3376 = vmul.f32 %v3368, %v3360
        %v3377 = vmul.f32 %v3369, %v3361
        %v3378 = vmul.f32 %v3370, %v3362
        %v3379 = vmul.f32 %v3371, %v3363
        %v3380 = vrot.slane %v3007, 7
        %v3381 = vrot.slane %v3008, 7
        %v3382 = vrot.slane %v3009, 7
        %v3383 = vrot.slane %v3010, 7
        %v3384 = vrot.slane %v3011, 7
        %v3385 = vrot.slane %v3012, 7
        %v3386 = vrot.slane %v3014, 7
        %v3395 = vmul.f32 %v3308, %v3380
        %v3396 = vmul.f32 %v3310, %v3381
        %v3397 = vmul.f32 %v3312, %v3382
        %v3398 = vmul.f32 %v3314, %v3383
        %v3399 = vmul.f32 %v3316, %v3384
        %v3400 = vmul.f32 %v3318, %v3385
        %v3401 = vmul.f32 %v3320, %v3033
        %v3402 = vmul.f32 %v3322, %v3386
        %v3403 = vadd.f32 %v3372, %v3395
        %v3404 = vadd.f32 %v3373, %v3396
        %v3405 = vadd.f32 %v3374, %v3397
        %v3406 = vadd.f32 %v3375, %v3398
        %v3407 = vadd.f32 %v3376, %v3399
        %v3408 = vadd.f32 %v3377, %v3400
        %v3409 = vadd.f32 %v3378, %v3401
        %v3410 = vadd.f32 %v3379, %v3402
        %v3419 = vrot.slane %v3403, 6
        %v3420 = vrot.slane %v3404, 5
        %v3421 = vsel %vm1037, %v3420, %v3419
        %v3422 = vrot.slane %v3405, 4
        %v3423 = vsel %vm1040, %v3422, %v3421
        %v3424 = vrot.slane %v3406, 3
        %v3425 = vsel %vm1043, %v3424, %v3423
        %v3426 = vrot.slane %v3407, 2
        %v3427 = vsel %vm1046, %v3426, %v3425
        %v3428 = vrot.slane %v3408, 1
        %v3429 = vsel %vm1049, %v3428, %v3427
        %v3430 = vsel %vm1052, %v3409, %v3429
        %v3431 = vrot.slane %v3410, 7
        %v3432 = vsel %vm1055, %v3431, %v3430
        %3434 = vmatprep.subr.mxu0 %v599
        %3435 = vmatpush1.msra.mxu0 %v598
        %3436 = vmatprep.subr.mxu0 %v602
        %3437 = vmatpush1.msra.mxu0 %v601
        %3438 = vmatprep.subr.mxu0 %v605
        %3439 = vmatpush1.msra.mxu0 %v604
        %3440 = vmatprep.subr.mxu0 %v608
        %3441 = vmatpush1.msra.mxu0 %v607
        %3442 = vmatprep.subr.mxu0 %v611
        %3443 = vmatpush1.msra.mxu0 %v610
        %3444 = vmatprep.subr.mxu0 %v614
        %3445 = vmatpush1.msra.mxu0 %v613
        %3446 = vmatprep.subr.mxu0 %v617
        %3447 = vmatpush1.msra.mxu0 %v616
        %3448 = vmatprep.subr.mxu0 %v620
        %3449 = vmatpush1.msra.mxu0 %v619
        %3450 = vmatprep.subr.mxu0 %v623
        %3451 = vmatpush1.msra.mxu0 %v622
        %3452 = vmatprep.subr.mxu0 %v626
        %3453 = vmatpush1.msra.mxu0 %v625
        %3454 = vmatprep.subr.mxu0 %v629
        %3455 = vmatpush1.msra.mxu0 %v628
        %3456 = vmatprep.subr.mxu0 %v632
        %3457 = vmatpush1.msra.mxu0 %v631
        %3458 = vmatprep.subr.mxu0 %v635
        %3459 = vmatpush1.msra.mxu0 %v634
        %3460 = vmatprep.subr.mxu0 %v638
        %3461 = vmatpush1.msra.mxu0 %v637
        %3462 = vmatprep.subr.mxu0 %v641
        %3463 = vmatpush1.msra.mxu0 %v640
        %3464 = vmatprep.subr.mxu0 %v644
        %3465 = vmatpush1.msra.mxu0 %v643
        %3466 = vmatprep.subr.mxu0 0.0
        %3467 = vmatpush1.msra.mxu0 0.0
        %3468 = vmatprep.subr.mxu0 0.0
        %3469 = vmatpush1.msra.mxu0 0.0
        %3470 = vmatprep.subr.mxu0 0.0
        %3471 = vmatpush1.msra.mxu0 0.0
        %3472 = vmatprep.subr.mxu0 0.0
        %3473 = vmatpush1.msra.mxu0 0.0
        %3474 = vmatprep.subr.mxu0 0.0
        %3475 = vmatpush1.msra.mxu0 0.0
        %3476 = vmatprep.subr.mxu0 0.0
        %3477 = vmatpush1.msra.mxu0 0.0
        %3478 = vmatprep.subr.mxu0 0.0
        %3479 = vmatpush1.msra.mxu0 0.0
        %3480 = vmatprep.subr.mxu0 0.0
        %3481 = vmatpush1.msra.mxu0 0.0
        %3482 = vmatprep.subr.mxu0 0.0
        %3483 = vmatpush1.msra.mxu0 0.0
        %3484 = vmatprep.subr.mxu0 0.0
        %3485 = vmatpush1.msra.mxu0 0.0
        %3486 = vmatprep.subr.mxu0 0.0
        %3487 = vmatpush1.msra.mxu0 0.0
        %3488 = vmatprep.subr.mxu0 0.0
        %3489 = vmatpush1.msra.mxu0 0.0
        %3490 = vmatprep.subr.mxu0 0.0
        %3491 = vmatpush1.msra.mxu0 0.0
        %3492 = vmatprep.subr.mxu0 0.0
        %3493 = vmatpush1.msra.mxu0 0.0
        %3494 = vmatprep.subr.mxu0 0.0
        %3495 = vmatpush1.msra.mxu0 0.0
        %3496 = vmatprep.subr.mxu0 0.0
        %3497 = vmatpush1.msra.mxu0 0.0
        %3498 = vmatprep.mubr.f32.mxu0 0.0
        %3499 = vmatmul.mubr.f32.gmra.mrb[0].mxu0 %v3432
        %v3500 = vpop.f32.mrb[0].mxu0
        %v3501 = vadd.f32 0.0, %v3500
        %v3502 = vpop.f32.mrb[0].mxu0
        %v3503 = vadd.f32 0.0, %v3502
        %3504 = vdwg.mxu0
        %3505 = vmatprep.subr.mxu0 0.0
        %3506 = vmatpush1.msra.mxu0 %v600
        %3507 = vmatprep.subr.mxu0 0.0
        %3508 = vmatpush1.msra.mxu0 %v603
        %3509 = vmatprep.subr.mxu0 0.0
        %3510 = vmatpush1.msra.mxu0 %v606
        %3511 = vmatprep.subr.mxu0 0.0
        %3512 = vmatpush1.msra.mxu0 %v609
        %3513 = vmatprep.subr.mxu0 0.0
        %3514 = vmatpush1.msra.mxu0 %v612
        %3515 = vmatprep.subr.mxu0 0.0
        %3516 = vmatpush1.msra.mxu0 %v615
        %3517 = vmatprep.subr.mxu0 0.0
        %3518 = vmatpush1.msra.mxu0 %v618
        %3519 = vmatprep.subr.mxu0 0.0
        %3520 = vmatpush1.msra.mxu0 %v621
        %3521 = vmatprep.subr.mxu0 0.0
        %3522 = vmatpush1.msra.mxu0 %v624
        %3523 = vmatprep.subr.mxu0 0.0
        %3524 = vmatpush1.msra.mxu0 %v627
        %3525 = vmatprep.subr.mxu0 0.0
        %3526 = vmatpush1.msra.mxu0 %v630
        %3527 = vmatprep.subr.mxu0 0.0
        %3528 = vmatpush1.msra.mxu0 %v633
        %3529 = vmatprep.subr.mxu0 0.0
        %3530 = vmatpush1.msra.mxu0 %v636
        %3531 = vmatprep.subr.mxu0 0.0
        %3532 = vmatpush1.msra.mxu0 %v639
        %3533 = vmatprep.subr.mxu0 0.0
        %3534 = vmatpush1.msra.mxu0 %v642
        %3535 = vmatprep.subr.mxu0 0.0
        %3536 = vmatpush1.msra.mxu0 %v645
        %3537 = vmatprep.subr.mxu0 0.0
        %3538 = vmatpush1.msra.mxu0 0.0
        %3539 = vmatprep.subr.mxu0 0.0
        %3540 = vmatpush1.msra.mxu0 0.0
        %3541 = vmatprep.subr.mxu0 0.0
        %3542 = vmatpush1.msra.mxu0 0.0
        %3543 = vmatprep.subr.mxu0 0.0
        %3544 = vmatpush1.msra.mxu0 0.0
        %3545 = vmatprep.subr.mxu0 0.0
        %3546 = vmatpush1.msra.mxu0 0.0
        %3547 = vmatprep.subr.mxu0 0.0
        %3548 = vmatpush1.msra.mxu0 0.0
        %3549 = vmatprep.subr.mxu0 0.0
        %3550 = vmatpush1.msra.mxu0 0.0
        %3551 = vmatprep.subr.mxu0 0.0
        %3552 = vmatpush1.msra.mxu0 0.0
        %3553 = vmatprep.subr.mxu0 0.0
        %3554 = vmatpush1.msra.mxu0 0.0
        %3555 = vmatprep.subr.mxu0 0.0
        %3556 = vmatpush1.msra.mxu0 0.0
        %3557 = vmatprep.subr.mxu0 0.0
        %3558 = vmatpush1.msra.mxu0 0.0
        %3559 = vmatprep.subr.mxu0 0.0
        %3560 = vmatpush1.msra.mxu0 0.0
        %3561 = vmatprep.subr.mxu0 0.0
        %3562 = vmatpush1.msra.mxu0 0.0
        %3563 = vmatprep.subr.mxu0 0.0
        %3564 = vmatpush1.msra.mxu0 0.0
        %3565 = vmatprep.subr.mxu0 0.0
        %3566 = vmatpush1.msra.mxu0 0.0
        %3567 = vmatprep.subr.mxu0 0.0
        %3568 = vmatpush1.msra.mxu0 0.0
        %3569 = vmatprep.mubr.f32.mxu0 0.0
        %3570 = vmatmul.mubr.f32.gmra.mrb[0].mxu0 %v3432
        %v3571 = vpop.f32.mrb[0].mxu0
        %v3572 = vadd.f32 0.0, %v3571
        %v3573 = vpop.f32.mrb[0].mxu0
        %3574 = vdwg.mxu0
        %v3576 = vrot.slane %v3501, 1
        %v3577 = vrot.slane %v3501, 2
        %v3578 = vrot.slane %v3501, 3
        %v3579 = vrot.slane %v3501, 4
        %v3580 = vrot.slane %v3501, 5
        %v3581 = vrot.slane %v3501, 6
        %v3582 = vrot.slane %v3501, 7
        %v3591 = vadd.f32 %v447, %v3576
        %v3592 = vadd.f32 %v453, %v3577
        %v3593 = vadd.f32 %v459, %v3578
        %v3594 = vadd.f32 %v465, %v3579
        %v3595 = vadd.f32 %v471, %v3580
        %v3596 = vadd.f32 %v477, %v3581
        %v3597 = vadd.f32 %v483, %v3582
        %v3598 = vadd.f32 %v489, %v3501
        %v3599 = vxor.u32 %v3591, 2147483648
        %v3600 = vxor.u32 %v3592, 2147483648
        %v3601 = vxor.u32 %v3593, 2147483648
        %v3602 = vxor.u32 %v3594, 2147483648
        %v3603 = vxor.u32 %v3595, 2147483648
        %v3604 = vxor.u32 %v3596, 2147483648
        %v3605 = vxor.u32 %v3597, 2147483648
        %v3606 = vxor.u32 %v3598, 2147483648
        %v3607 = vmul.f32 %v3599, 1.442695
        %v3608 = vpow.pop %v3607
        %v3609 = vmul.f32 %v3600, 1.442695
        %v3610 = vpow.pop %v3609
        %v3611 = vmul.f32 %v3601, 1.442695
        %v3612 = vpow.pop %v3611
        %v3613 = vmul.f32 %v3602, 1.442695
        %v3614 = vpow.pop %v3613
        %v3615 = vmul.f32 %v3603, 1.442695
        %v3616 = vpow.pop %v3615
        %v3617 = vmul.f32 %v3604, 1.442695
        %v3618 = vpow.pop %v3617
        %v3619 = vmul.f32 %v3605, 1.442695
        %v3620 = vpow.pop %v3619
        %v3621 = vmul.f32 %v3606, 1.442695
        %v3622 = vpow.pop %v3621
        %v3623 = vadd.f32 %v3608, 1.0
        %v3624 = vadd.f32 %v3610, 1.0
        %v3625 = vadd.f32 %v3612, 1.0
        %v3626 = vadd.f32 %v3614, 1.0
        %v3627 = vadd.f32 %v3616, 1.0
        %v3628 = vadd.f32 %v3618, 1.0
        %v3629 = vadd.f32 %v3620, 1.0
        %v3630 = vadd.f32 %v3622, 1.0
        %v3631 = vrcp.pop %v3623
        %v3632 = vmul.f32 1.0, %v3631
        %v3633 = vrcp.pop %v3624
        %v3634 = vmul.f32 1.0, %v3633
        %v3635 = vrcp.pop %v3625
        %v3636 = vmul.f32 1.0, %v3635
        %v3637 = vrcp.pop %v3626
        %v3638 = vmul.f32 1.0, %v3637
        %v3639 = vrcp.pop %v3627
        %v3640 = vmul.f32 1.0, %v3639
        %v3641 = vrcp.pop %v3628
        %v3642 = vmul.f32 1.0, %v3641
        %v3643 = vrcp.pop %v3629
        %v3644 = vmul.f32 1.0, %v3643
        %v3645 = vrcp.pop %v3630
        %v3646 = vmul.f32 1.0, %v3645
        %v3648 = vrot.slane %v3503, 1
        %v3649 = vrot.slane %v3503, 2
        %v3650 = vrot.slane %v3503, 3
        %v3651 = vrot.slane %v3503, 4
        %v3652 = vrot.slane %v3503, 5
        %v3653 = vrot.slane %v3503, 6
        %v3654 = vrot.slane %v3503, 7
        %v3663 = vadd.f32 %v449, %v3648
        %v3664 = vadd.f32 %v455, %v3649
        %v3665 = vadd.f32 %v461, %v3650
        %v3666 = vadd.f32 %v467, %v3651
        %v3667 = vadd.f32 %v473, %v3652
        %v3668 = vadd.f32 %v479, %v3653
        %v3669 = vadd.f32 %v485, %v3654
        %v3670 = vadd.f32 %v491, %v3503
        %v3671 = vxor.u32 %v3663, 2147483648
        %v3672 = vxor.u32 %v3664, 2147483648
        %v3673 = vxor.u32 %v3665, 2147483648
        %v3674 = vxor.u32 %v3666, 2147483648
        %v3675 = vxor.u32 %v3667, 2147483648
        %v3676 = vxor.u32 %v3668, 2147483648
        %v3677 = vxor.u32 %v3669, 2147483648
        %v3678 = vxor.u32 %v3670, 2147483648
        %v3679 = vmul.f32 %v3671, 1.442695
        %v3680 = vpow.pop %v3679
        %v3681 = vmul.f32 %v3672, 1.442695
        %v3682 = vpow.pop %v3681
        %v3683 = vmul.f32 %v3673, 1.442695
        %v3684 = vpow.pop %v3683
        %v3685 = vmul.f32 %v3674, 1.442695
        %v3686 = vpow.pop %v3685
        %v3687 = vmul.f32 %v3675, 1.442695
        %v3688 = vpow.pop %v3687
        %v3689 = vmul.f32 %v3676, 1.442695
        %v3690 = vpow.pop %v3689
        %v3691 = vmul.f32 %v3677, 1.442695
        %v3692 = vpow.pop %v3691
        %v3693 = vmul.f32 %v3678, 1.442695
        %v3694 = vpow.pop %v3693
        %v3695 = vadd.f32 %v3680, 1.0
        %v3696 = vadd.f32 %v3682, 1.0
        %v3697 = vadd.f32 %v3684, 1.0
        %v3698 = vadd.f32 %v3686, 1.0
        %v3699 = vadd.f32 %v3688, 1.0
        %v3700 = vadd.f32 %v3690, 1.0
        %v3701 = vadd.f32 %v3692, 1.0
        %v3702 = vadd.f32 %v3694, 1.0
        %v3703 = vrcp.pop %v3695
        %v3704 = vmul.f32 1.0, %v3703
        %v3705 = vrcp.pop %v3696
        %v3706 = vmul.f32 1.0, %v3705
        %v3707 = vrcp.pop %v3697
        %v3708 = vmul.f32 1.0, %v3707
        %v3709 = vrcp.pop %v3698
        %v3710 = vmul.f32 1.0, %v3709
        %v3711 = vrcp.pop %v3699
        %v3712 = vmul.f32 1.0, %v3711
        %v3713 = vrcp.pop %v3700
        %v3714 = vmul.f32 1.0, %v3713
        %v3715 = vrcp.pop %v3701
        %v3716 = vmul.f32 1.0, %v3715
        %v3717 = vrcp.pop %v3702
        %v3718 = vmul.f32 1.0, %v3717
        %v3719 = vadd.f32 %v3572, %v651
        %v3721 = vrot.slane %v3719, 1
        %v3722 = vrot.slane %v3719, 2
        %v3723 = vrot.slane %v3719, 3
        %v3724 = vrot.slane %v3719, 4
        %v3725 = vrot.slane %v3719, 5
        %v3726 = vrot.slane %v3719, 6
        %v3727 = vrot.slane %v3719, 7
        %v3736 = vmul.f32 %v3632, %v3721
        %v3737 = vmul.f32 %v3634, %v3722
        %v3738 = vmul.f32 %v3636, %v3723
        %v3739 = vmul.f32 %v3638, %v3724
        %v3740 = vmul.f32 %v3640, %v3725
        %v3741 = vmul.f32 %v3642, %v3726
        %v3742 = vmul.f32 %v3644, %v3727
        %v3743 = vmul.f32 %v3646, %v3719
        %v3744 = vadd.f32 %v560, %v3736
        %v3745 = vadd.f32 %v565, %v3737
        %v3746 = vadd.f32 %v570, %v3738
        %v3747 = vadd.f32 %v575, %v3739
        %v3748 = vadd.f32 %v580, %v3740
        %v3749 = vadd.f32 %v585, %v3741
        %v3750 = vadd.f32 %v590, %v3742
        %v3751 = vadd.f32 %v595, %v3743
        %v3752 = vtanh.pop %v3744
        %v3753 = vtanh.pop %v3745
        %v3754 = vtanh.pop %v3746
        %v3755 = vtanh.pop %v3747
        %v3756 = vtanh.pop %v3748
        %v3757 = vtanh.pop %v3749
        %v3758 = vtanh.pop %v3750
        %v3759 = vtanh.pop %v3751
        %v3760 = vsub.f32 1.0, %v3704
        %v3761 = vsub.f32 1.0, %v3706
        %v3762 = vsub.f32 1.0, %v3708
        %v3763 = vsub.f32 1.0, %v3710
        %v3764 = vsub.f32 1.0, %v3712
        %v3765 = vsub.f32 1.0, %v3714
        %v3766 = vsub.f32 1.0, %v3716
        %v3767 = vsub.f32 1.0, %v3718
        %v3768 = vmul.f32 %v3760, %v3752
        %v3769 = vmul.f32 %v3761, %v3753
        %v3770 = vmul.f32 %v3762, %v3754
        %v3771 = vmul.f32 %v3763, %v3755
        %v3772 = vmul.f32 %v3764, %v3756
        %v3773 = vmul.f32 %v3765, %v3757
        %v3774 = vmul.f32 %v3766, %v3758
        %v3775 = vmul.f32 %v3767, %v3759
        %v3776 = vrot.slane %v3403, 7
        %v3777 = vrot.slane %v3404, 7
        %v3778 = vrot.slane %v3405, 7
        %v3779 = vrot.slane %v3406, 7
        %v3780 = vrot.slane %v3407, 7
        %v3781 = vrot.slane %v3408, 7
        %v3782 = vrot.slane %v3409, 7
        %v3791 = vmul.f32 %v3704, %v3776
        %v3792 = vmul.f32 %v3706, %v3777
        %v3793 = vmul.f32 %v3708, %v3778
        %v3794 = vmul.f32 %v3710, %v3779
        %v3795 = vmul.f32 %v3712, %v3780
        %v3796 = vmul.f32 %v3714, %v3781
        %v3797 = vmul.f32 %v3716, %v3782
        %v3798 = vmul.f32 %v3718, %v3431
        %v3799 = vadd.f32 %v3768, %v3791
        %v3800 = vadd.f32 %v3769, %v3792
        %v3801 = vadd.f32 %v3770, %v3793
        %v3802 = vadd.f32 %v3771, %v3794
        %v3803 = vadd.f32 %v3772, %v3795
        %v3804 = vadd.f32 %v3773, %v3796
        %v3805 = vadd.f32 %v3774, %v3797
        %v3806 = vadd.f32 %v3775, %v3798
        %v3815 = vrot.slane %v3800, 7
        %v3816 = vrot.slane %v3801, 6
        %v3817 = vsel %vm1037, %v3816, %v3815
        %v3818 = vrot.slane %v3802, 5
        %v3819 = vsel %vm1040, %v3818, %v3817
        %v3820 = vrot.slane %v3803, 4
        %v3821 = vsel %vm1043, %v3820, %v3819
        %v3822 = vrot.slane %v3804, 3
        %v3823 = vsel %vm1046, %v3822, %v3821
        %v3824 = vrot.slane %v3805, 2
        %v3825 = vsel %vm1049, %v3824, %v3823
        %v3826 = vrot.slane %v3806, 1
        %v3827 = vsel %vm1052, %v3826, %v3825
        %3830 = vst [vmem:[#allocation2 - $0x7] sm:$0x80] %v3799
        %3831 = vst [vmem:[#allocation2 + $0x1] sm:$0x7f] %v3827
        %vm3832 = vcmask 1040384
        %v3833 = vsel %vm3832, %v1020, %v1423
        %v3834 = vsel %vm3832, %v1021, %v1424
        %v3835 = vsel %vm3832, %v1022, %v1425
        %v3836 = vsel %vm3832, %v1023, %v1426
        %v3837 = vsel %vm3832, %v1024, %v1427
        %v3838 = vsel %vm3832, %v1025, %v1428
        %v3839 = vsel %vm3832, %v1026, %v1429
        %v3840 = vsel %vm3832, %v1027, %v1430
        %vm3841 = vcmask 1041408
        %v3842 = vsel %vm3841, %v3833, %v1819
        %v3843 = vsel %vm3841, %v3834, %v1820
        %v3844 = vsel %vm3841, %v3835, %v1821
        %v3845 = vsel %vm3841, %v3836, %v1822
        %v3846 = vsel %vm3841, %v3837, %v1823
        %v3847 = vsel %vm3841, %v3838, %v1824
        %v3848 = vsel %vm3841, %v3839, %v1825
        %v3849 = vsel %vm3841, %v3840, %v1826
        %vm3850 = vcmask 1042432
        %v3851 = vsel %vm3850, %v3842, %v2215
        %v3852 = vsel %vm3850, %v3843, %v2216
        %v3853 = vsel %vm3850, %v3844, %v2217
        %v3854 = vsel %vm3850, %v3845, %v2218
        %v3855 = vsel %vm3850, %v3846, %v2219
        %v3856 = vsel %vm3850, %v3847, %v2220
        %v3857 = vsel %vm3850, %v3848, %v2221
        %v3858 = vsel %vm3850, %v3849, %v2222
        %vm3859 = vcmask 1043456
        %v3860 = vsel %vm3859, %v3851, %v2611
        %v3861 = vsel %vm3859, %v3852, %v2612
        %v3862 = vsel %vm3859, %v3853, %v2613
        %v3863 = vsel %vm3859, %v3854, %v2614
        %v3864 = vsel %vm3859, %v3855, %v2615
        %v3865 = vsel %vm3859, %v3856, %v2616
        %v3866 = vsel %vm3859, %v3857, %v2617
        %v3867 = vsel %vm3859, %v3858, %v2618
        %vm3868 = vcmask 1044480
        %v3869 = vsel %vm3868, %v3860, %v3007
        %v3870 = vsel %vm3868, %v3861, %v3008
        %v3871 = vsel %vm3868, %v3862, %v3009
        %v3872 = vsel %vm3868, %v3863, %v3010
        %v3873 = vsel %vm3868, %v3864, %v3011
        %v3874 = vsel %vm3868, %v3865, %v3012
        %v3875 = vsel %vm3868, %v3866, %v3013
        %v3876 = vsel %vm3868, %v3867, %v3014
        %vm3877 = vcmask 1045504
        %v3878 = vsel %vm3877, %v3869, %v3403
        %v3879 = vsel %vm3877, %v3870, %v3404
        %v3880 = vsel %vm3877, %v3871, %v3405
        %v3881 = vsel %vm3877, %v3872, %v3406
        %v3882 = vsel %vm3877, %v3873, %v3407
        %v3883 = vsel %vm3877, %v3874, %v3408
        %v3884 = vsel %vm3877, %v3875, %v3409
        %v3885 = vsel %vm3877, %v3876, %v3410
        %vm3886 = vcmask 1046528
        %v3887 = vsel %vm3886, %v3878, %v3799
        %v3888 = vsel %vm3886, %v3879, %v3800
        %v3889 = vsel %vm3886, %v3880, %v3801
        %v3890 = vsel %vm3886, %v3881, %v3802
        %v3891 = vsel %vm3886, %v3882, %v3803
        %v3892 = vsel %vm3886, %v3883, %v3804
        %v3893 = vsel %vm3886, %v3884, %v3805
        %v3894 = vsel %vm3886, %v3885, %v3806
        %3895 = vst [vmem:[%s299] sm:$0xff] %v3887
        %3896 = vst [vmem:[%s299 + $0x8] sm:$0xff] %v3888
        %3897 = vst [vmem:[%s299 + $0x10] sm:$0xff] %v3889
        %3898 = vst [vmem:[%s299 + $0x18] sm:$0xff] %v3890
        %3899 = vst [vmem:[%s299 + $0x20] sm:$0xff] %v3891
        %3900 = vst [vmem:[%s299 + $0x28] sm:$0xff] %v3892
        %3901 = vst [vmem:[%s299 + $0x30] sm:$0xff] %v3893
        %3902 = vst [vmem:[%s299 + $0x38] sm:$0xff] %v3894
        %s3903 = sand.u32 %s150, 1
        %s3904 = sand.u32 %s150, 1
        %s3905 = smul.addr %s3904, 64
        %s3906 = scalar_lea.vmem [#allocation4], %s3905
        // Predicated region
        $region83: #{batch_norm_rnn.3} parent=73 // pred_check
          %p3907 = pneg %p160
        $region84: #{batch_norm_rnn.3} parent=73 // pred_check_branch
          %3909 = sbr.rel (%p3907) target = $region86
        $region85: #{batch_norm_rnn.3} parent=73 // pred_region
          %s3910 = smul.u32 8, %s20
          %s3911 = smul.addr %s3910, 2
          %s3912 = sadd.s32 %s21, %s3911
          %s3913 = smul.addr %s3912, 8
          %s3914 = scalar_lea.vmem %s5, %s3913
          // Predicated region
          $region87: #{batch_norm_rnn.3} parent=85 // pred_check
            _
          $region88: #{batch_norm_rnn.3} parent=85 // pred_check_branch
            %3916 = sbr.rel (0) target = $region90
          $region89: #{batch_norm_rnn.3} parent=85 // pred_region
            // Predicated region
            $region91: #{batch_norm_rnn.3} parent=89 // pred_check
              _
            $region92: #{batch_norm_rnn.3} parent=89 // pred_check_branch
              %3918 = sbr.rel (0) target = $region94
            $region93: #{batch_norm_rnn.3} parent=89 // pred_region
              // Predicated region
              $region106: #{batch_norm_rnn.3} parent=93 // pred_check
                _
              $region107: #{batch_norm_rnn.3} parent=93 // pred_check_branch
                %3947 = sbr.rel (0) target = $region109
              $region108: #{batch_norm_rnn.3} parent=93 // pred_region
                loop: start=0, step=1, limit=1
                $region110: #{batch_norm_rnn.3} parent=108 // loop_pre_header
                  _
                $region111: #{batch_norm_rnn.3} parent=108 // loop_header
                  %s3949 = sphi 0, %s3953
                  %p3950 = scmp.ge.s32.totalorder %s3949, 1
                  %s3954 = sphi %s3906, %s3906
                  %s3955 = sphi %s3914, %s3914
                $region112: #{batch_norm_rnn.3} parent=108 // loop_header_branch
                  %3952 = sbr.rel (%p3950) target = $region116
                $region113: #{batch_norm_rnn.3} parent=108 // loop_body
                  %v3956 = vld [vmem:[%s3954] sm:$0xff]
                  %3957 = vst [vmem:[%s3955] sm:$0xff] %v3956
                  %v3958 = vld [vmem:[%s3954 + $0x8] sm:$0xff]
                  %3959 = vst [vmem:[%s3955 + $0x10] sm:$0xff] %v3958
                  %v3960 = vld [vmem:[%s3954 + $0x10] sm:$0xff]
                  %3961 = vst [vmem:[%s3955 + $0x20] sm:$0xff] %v3960
                  %v3962 = vld [vmem:[%s3954 + $0x18] sm:$0xff]
                  %3963 = vst [vmem:[%s3955 + $0x30] sm:$0xff] %v3962
                  %v3964 = vld [vmem:[%s3954 + $0x20] sm:$0xff]
                  %3965 = vst [vmem:[%s3955 + $0x40] sm:$0xff] %v3964
                  %v3966 = vld [vmem:[%s3954 + $0x28] sm:$0xff]
                  %3967 = vst [vmem:[%s3955 + $0x50] sm:$0xff] %v3966
                  %v3968 = vld [vmem:[%s3954 + $0x30] sm:$0xff]
                  %3969 = vst [vmem:[%s3955 + $0x60] sm:$0xff] %v3968
                  %v3970 = vld [vmem:[%s3954 + $0x38] sm:$0xff]
                  %3971 = vst [vmem:[%s3955 + $0x70] sm:$0xff] %v3970
                $region114: #{batch_norm_rnn.3} parent=108 // loop_footer
                  %s3953 = sadd.s32 1, %s3949
                $region115: #{batch_norm_rnn.3} parent=108 // loop_footer_branch
                  %3948 = sbr.rel target = $region111
                $region116: #{batch_norm_rnn.3} parent=108 // loop_exit
                  _
              $region109: #{batch_norm_rnn.3} parent=93 // pred_fallthru
                _
              // Predicated region
              $region117: #{batch_norm_rnn.3} parent=93 // pred_check
                _
              $region118: #{batch_norm_rnn.3} parent=93 // pred_check_branch
                %3973 = sbr.rel target = $region120
              $region119: #{batch_norm_rnn.3} parent=93 // pred_region
                _
              $region120: #{batch_norm_rnn.3} parent=93 // pred_fallthru
                _
            $region94: #{batch_norm_rnn.3} parent=89 // pred_fallthru
              _
            // Predicated region
            $region95: #{batch_norm_rnn.3} parent=89 // pred_check
              _
            $region96: #{batch_norm_rnn.3} parent=89 // pred_check_branch
              %3920 = sbr.rel target = $region98
            $region97: #{batch_norm_rnn.3} parent=89 // pred_region
              loop: start=0, step=1, limit=1
              $region99: #{batch_norm_rnn.3} parent=97 // loop_pre_header
                _
              $region100: #{batch_norm_rnn.3} parent=97 // loop_header
                %s3923 = sphi 0, %s3927
                %p3924 = scmp.ge.s32.totalorder %s3923, 1
                %s3928 = sphi %s3906, %s3906
                %s3929 = sphi %s3914, %s3914
              $region101: #{batch_norm_rnn.3} parent=97 // loop_header_branch
                %3926 = sbr.rel (%p3924) target = $region105
              $region102: #{batch_norm_rnn.3} parent=97 // loop_body
                %v3930 = vld [vmem:[%s3928] sm:$0xff]
                %3931 = vst [vmem:[%s3929] sm:$0xff] %v3930
                %v3932 = vld [vmem:[%s3928 + $0x8] sm:$0xff]
                %3933 = vst [vmem:[%s3929 + $0x10] sm:$0xff] %v3932
                %v3934 = vld [vmem:[%s3928 + $0x10] sm:$0xff]
                %3935 = vst [vmem:[%s3929 + $0x20] sm:$0xff] %v3934
                %v3936 = vld [vmem:[%s3928 + $0x18] sm:$0xff]
                %3937 = vst [vmem:[%s3929 + $0x30] sm:$0xff] %v3936
                %v3938 = vld [vmem:[%s3928 + $0x20] sm:$0xff]
                %3939 = vst [vmem:[%s3929 + $0x40] sm:$0xff] %v3938
                %v3940 = vld [vmem:[%s3928 + $0x28] sm:$0xff]
                %3941 = vst [vmem:[%s3929 + $0x50] sm:$0xff] %v3940
                %v3942 = vld [vmem:[%s3928 + $0x30] sm:$0xff]
                %3943 = vst [vmem:[%s3929 + $0x60] sm:$0xff] %v3942
                %v3944 = vld [vmem:[%s3928 + $0x38] sm:$0xff]
                %3945 = vst [vmem:[%s3929 + $0x70] sm:$0xff] %v3944
              $region103: #{batch_norm_rnn.3} parent=97 // loop_footer
                %s3927 = sadd.s32 1, %s3923
              $region104: #{batch_norm_rnn.3} parent=97 // loop_footer_branch
                %3922 = sbr.rel target = $region100
              $region105: #{batch_norm_rnn.3} parent=97 // loop_exit
                _
            $region98: #{batch_norm_rnn.3} parent=89 // pred_fallthru
              _
          $region90: #{batch_norm_rnn.3} parent=85 // pred_fallthru
            _
          %3974 = vnop
        $region86: #{batch_norm_rnn.3} parent=73 // pred_fallthru
          _
      $region74: #{batch_norm_rnn.3} parent=5 // pred_fallthru
        _
      %p3975 = scmp.le.s32.totalorder 2, %s11
      // Predicated region
      $region121: #{batch_norm_rnn.3} parent=5 // pred_check
        %p3976 = pneg %p3975
      $region122: #{batch_norm_rnn.3} parent=5 // pred_check_branch
        %3978 = sbr.rel (%p3976) target = $region124
      $region123: #{batch_norm_rnn.3} parent=5 // pred_region
        %s3979 = ssub.s32 %s11, 2
        // Predicated region
        $region125: #{batch_norm_rnn.3} parent=123 // pred_check
          %p3980 = pneg %p166
        $region126: #{batch_norm_rnn.3} parent=123 // pred_check_branch
          %3982 = sbr.rel (%p3980) target = $region128
        $region127: #{batch_norm_rnn.3} parent=123 // pred_region
          %s3983 = sand.u32 %s151, 1
          %s3984 = sand.u32 %s151, 1
          %s3985 = smul.addr %s3984, 64
          %s3986 = scalar_lea.vmem [#allocation4], %s3985
        $region128: #{batch_norm_rnn.3} parent=123 // pred_fallthru
          _
      $region124: #{batch_norm_rnn.3} parent=5 // pred_fallthru
        _
    $region6: #{batch_norm_rnn.3} parent=1 // loop_footer
      %s15 = sadd.s32 1, %s11
    $region7: #{batch_norm_rnn.3} parent=1 // loop_footer_branch
      %10 = sbr.rel target = $region3
    $region8: #{batch_norm_rnn.3} parent=1 // loop_exit
      _

</llo_original>
